<compile_context>
chip_gen: v5e
topology: v5e:2x2
jax: 0.10.0
libtpu: 0.0.40
codegen_flags: <defaults>
</compile_context>

<pallas_src>
import jax
import jax.numpy as jnp
from jax.experimental import pallas as pl
from jax.experimental.pallas import tpu as pltpu


def _lsa_kernel(
    bg_ref,    # (2,) SMEM  : [bw1, bw2] scalar gate biases
    h1_ref,    # (Bt, S, H) : first half of the bi-LSTM features
    h2_ref,    # (Bt, S, H) : second half
    et_ref,    # (H, C)     : sentence label embeddings, pre-transposed
    w1_ref,    # (2H, d_a)  : linear_first weight (pre-transposed)
    b1_ref,    # (1, d_a)
    w2_ref,    # (d_a, C)   : linear_second weight (pre-transposed)
    b2_ref,    # (1, C)
    wg_ref,    # (2H, 2)    : [ww1^T | ww2^T] packed gate weights
    wo_ref,    # (2H, Cpad) : output weight / sent_classes, class dim padded to 128
    bo_ref,    # (1, Cpad)
    out_ref,   # (Bt, Cpad)
):
    Bt, S, H = h1_ref.shape
    C = w2_ref.shape[1]
    BtC = Bt * C

    x1 = h1_ref[...]                    # (Bt, S, H)
    x2 = h2_ref[...]
    x1f = x1.reshape(Bt * S, H)         # fold batch into the matmul M dimension
    x2f = x2.reshape(Bt * S, H)

    # selfatt = tanh(linear_first(sentence)); W1 row-split over the 2H axis.
    saf = jnp.tanh(
        jnp.dot(x1f, w1_ref[:H, :], preferred_element_type=jnp.float32)
        + jnp.dot(x2f, w1_ref[H:, :], preferred_element_type=jnp.float32)
        + b1_ref[...]
    )                                   # (Bt*S, d_a)

    # selfatt = linear_second(selfatt)
    logitsf = jnp.dot(saf, w2_ref[...], preferred_element_type=jnp.float32) + b2_ref[...]
    logits = logitsf.reshape(Bt, S, C)  # row-grouping reshape, tile-aligned (no relayout)

    # label-attention scores m = h @ E^T, per half (E pre-transposed in wrapper)
    m1 = jnp.dot(x1f, et_ref[...], preferred_element_type=jnp.float32).reshape(Bt, S, C)
    m2 = jnp.dot(x2f, et_ref[...], preferred_element_type=jnp.float32).reshape(Bt, S, C)

    # softmax over the sequence axis (torch dim=1 on (B, S, C));
    # exact reciprocal of the (Bt,1,C) row-sum, then multiply.
    mx = jnp.max(logits, axis=1, keepdims=True)
    ex = jnp.exp(logits - mx)
    att = ex * (1.0 / jnp.sum(ex, axis=1, keepdims=True))    # (Bt, S, C)

    # Merged batched matmuls: [att | m] against each half -> [self_att ; label_att]
    a1 = jnp.concatenate([att, m1], axis=2)                  # (Bt, S, 2C)
    a2 = jnp.concatenate([att, m2], axis=2)
    r1 = jnp.einsum("bsc,bsh->bch", a1, x1, preferred_element_type=jnp.float32)
    r2 = jnp.einsum("bsc,bsh->bch", a2, x2, preferred_element_type=jnp.float32)
    r = jnp.concatenate([r1, r2], axis=2)                    # (Bt, 2C, 2H) lane-dense

    sa = r[:, :C, :].reshape(BtC, 2 * H)                     # self_att  (Bt*C, 2H)
    la = r[:, C:, :].reshape(BtC, 2 * H)                     # label_att (Bt*C, 2H)

    # One stacked gate matmul against the packed (2H, 2) gate weights.
    g = jnp.dot(jnp.concatenate([la, sa], axis=0), wg_ref[...],
                preferred_element_type=jnp.float32)          # (2*Bt*C, 2)
    g1 = jax.nn.sigmoid(g[:BtC, 0:1] + bg_ref[0])            # weight1(label_att)
    g2 = jax.nn.sigmoid(g[BtC:, 1:2] + bg_ref[1])            # weight2(self_att)
    w1n = g1 / (g1 + g2)
    w2n = 1.0 - w1n

    doc = w1n * la + w2n * sa                                # (Bt*C, 2H) lane-dense blend

    # avg_sentence_embeddings: sum over classes; 1/C is folded into wo (wrapper).
    s = jnp.sum(doc.reshape(Bt, C, 2 * H), axis=1)           # (Bt, 2H)

    # pred = sigmoid(output_layer(avg)); class dim lane-dense (Cpad = 128)
    pred = jax.nn.sigmoid(
        jnp.dot(s, wo_ref[...], preferred_element_type=jnp.float32) + bo_ref[...]
    )                                                        # (Bt, Cpad)

    out_ref[...] = pred.astype(out_ref.dtype)


def _auto_batch_tile(B):
    # Fill an MXU pass (Bt*S rows) while keeping >= 2 grid steps when possible,
    # so v7x's two TensorCores both get work via the "parallel" grid axis.
    half = (B + 1) // 2
    return max(8, min(16, ((half + 7) // 8) * 8))


def label_sentence_attention(sentence, params, *, lstm_hid_dim, sent_classes,
                             batch_tile=None):
    """sentence: (B, S, 2*lstm_hid_dim) float32 -> pred: (B, sent_classes)."""
    B, S, D2 = sentence.shape
    H = lstm_hid_dim
    assert D2 == 2 * H
    C = sent_classes
    d_a = params["w1"].shape[1]
    assert params["E"].shape == (C, H)

    Bt = _auto_batch_tile(B) if batch_tile is None else batch_tile
    B_pad = ((B + Bt - 1) // Bt) * Bt

    # Pre-split the bi-LSTM halves (avoids lane-offset slicing inside the kernel).
    h1 = sentence[:, :, :H]
    h2 = sentence[:, :, H:]
    if B_pad != B:
        pad = ((0, B_pad - B), (0, 0), (0, 0))
        h1 = jnp.pad(h1, pad)
        h2 = jnp.pad(h2, pad)

    # Lane-dense output head: pad the class dim to 128 lanes and fold the 1/C scale.
    Cpad = ((C + 127) // 128) * 128
    wo_p = jnp.zeros((D2, Cpad), jnp.float32).at[:, :C].set(
        params["wo"].astype(jnp.float32) / float(C))
    bo_p = jnp.zeros((1, Cpad), jnp.float32).at[:, :C].set(params["bo"])

    # Pre-transpose the label embeddings: plain x @ E^T matmuls inside the kernel.
    et = params["E"].T.astype(jnp.float32)                   # (H, C)

    # Pack gate weights into one (2H, 2) matrix, gate biases into one SMEM vector.
    wg = jnp.concatenate(
        [params["ww1"].reshape(D2, 1), params["ww2"].reshape(D2, 1)], axis=1
    ).astype(jnp.float32)
    bg = jnp.concatenate(
        [params["bw1"].reshape(1), params["bw2"].reshape(1)]).astype(jnp.float32)

    const2 = lambda b: (0, 0)
    grid_spec = pltpu.PrefetchScalarGridSpec(
        num_scalar_prefetch=0,
        grid=(B_pad // Bt,),
        in_specs=[
            pl.BlockSpec(memory_space=pltpu.MemorySpace.SMEM),   # bg (scalars)
            pl.BlockSpec((Bt, S, H), lambda b: (b, 0, 0)),       # h1
            pl.BlockSpec((Bt, S, H), lambda b: (b, 0, 0)),       # h2
            pl.BlockSpec((H, C), const2),                        # E^T
            pl.BlockSpec((D2, d_a), const2),                     # W1
            pl.BlockSpec((1, d_a), const2),                      # b1
            pl.BlockSpec((d_a, C), const2),                      # W2
            pl.BlockSpec((1, C), const2),                        # b2
            pl.BlockSpec((D2, 2), const2),                       # gate weights
            pl.BlockSpec((D2, Cpad), const2),                    # Wo (padded, /C)
            pl.BlockSpec((1, Cpad), const2),                     # bo (padded)
        ],
        out_specs=pl.BlockSpec((Bt, Cpad), lambda b: (b, 0)),
    )

    out = pl.pallas_call(
        _lsa_kernel,
        grid_spec=grid_spec,
        out_shape=jax.ShapeDtypeStruct((B_pad, Cpad), jnp.float32),
        compiler_params=pltpu.CompilerParams(
            dimension_semantics=("parallel",)),
    )(
        bg, h1, h2, et,
        params["w1"], params["b1"],
        params["w2"], params["b2"],
        wg, wo_p, bo_p,
    )
    return out[:B, :C]  # (B, C)


def _reference(sentence, params, *, lstm_hid_dim, sent_classes):
    """Pure-JAX reference mirroring the PyTorch forward (eval-mode dropout)."""
    H, C = lstm_hid_dim, sent_classes
    x = sentence
    sa = jnp.tanh(x @ params["w1"] + params["b1"])
    logits = sa @ params["w2"] + params["b2"]
    att = jax.nn.softmax(logits, axis=1)                      # softmax over seq
    self_att = jnp.einsum("bsc,bsh->bch", att, x)             # (B, C, 2H)
    h1, h2 = x[:, :, :H], x[:, :, H:]
    E = params["E"]
    m1 = jnp.einsum("ch,bsh->bcs", E, h1)
    m2 = jnp.einsum("ch,bsh->bcs", E, h2)
    label_att = jnp.concatenate(
        [jnp.einsum("bcs,bsh->bch", m1, h1), jnp.einsum("bcs,bsh->bch", m2, h2)],
        axis=2,
    )
    w1 = jax.nn.sigmoid(jnp.sum(label_att * params["ww1"], -1, keepdims=True) + params["bw1"])
    w2 = jax.nn.sigmoid(jnp.sum(self_att * params["ww2"], -1, keepdims=True) + params["bw2"])
    w1n = w1 / (w1 + w2)
    w2n = 1.0 - w1n
    doc = w1n * label_att + w2n * self_att
    avg = jnp.sum(doc, axis=1) / C
    return jax.nn.sigmoid(avg @ params["wo"] + params["bo"])


if __name__ == "__main__":
    # Small shapes implied by the module: sentence (B, S, 2*lstm_hid_dim).
    # B=10 deliberately not a multiple of the batch tile to exercise padding
    # and to give a 2-step "parallel" grid (both v7x TensorCores active).
    B, S = 10, 16
    lstm_hid_dim = 32
    d_a = 64
    sent_classes = 8
    D2 = 2 * lstm_hid_dim

    key = jax.random.PRNGKey(0)
    keys = jax.random.split(key, 12)

    sentence = jax.random.normal(keys[0], (B, S, D2), dtype=jnp.float32)

    # Deterministic parameter init (weights stored pre-transposed for x @ W + b).
    params = {
        "E":   0.1 * jax.random.normal(keys[1], (sent_classes, lstm_hid_dim), jnp.float32),
        "w1":  0.1 * jax.random.normal(keys[2], (D2, d_a), jnp.float32),
        "b1":  0.1 * jax.random.normal(keys[3], (1, d_a), jnp.float32),
        "w2":  0.1 * jax.random.normal(keys[4], (d_a, sent_classes), jnp.float32),
        "b2":  0.1 * jax.random.normal(keys[5], (1, sent_classes), jnp.float32),
        "ww1": 0.1 * jax.random.normal(keys[6], (1, D2), jnp.float32),
        "bw1": 0.1 * jax.random.normal(keys[7], (1, 1), jnp.float32),
        "ww2": 0.1 * jax.random.normal(keys[8], (1, D2), jnp.float32),
        "bw2": 0.1 * jax.random.normal(keys[9], (1, 1), jnp.float32),
        "wo":  0.1 * jax.random.normal(keys[10], (D2, sent_classes), jnp.float32),
        "bo":  0.1 * jax.random.normal(keys[11], (1, sent_classes), jnp.float32),
    }

    pred = label_sentence_attention(
        sentence, params, lstm_hid_dim=lstm_hid_dim, sent_classes=sent_classes,
    )
    pred = jax.block_until_ready(pred)

    ref = _reference(
        sentence, params, lstm_hid_dim=lstm_hid_dim, sent_classes=sent_classes
    )
    assert pred.shape == (B, sent_classes)
    assert jnp.allclose(pred, ref, rtol=1e-5, atol=1e-5), (pred, ref)

    print("KERNEL_OK")
</pallas_src>

<mosaic_0001>
module attributes {stable_mosaic.version = 11 : i64} {
  func.func @_lsa_kernel(%arg0: i32, %arg1: memref<2xf32, #tpu.memory_space<smem>>, %arg2: memref<8x16x32xf32, #tpu.memory_space<vmem>>, %arg3: memref<8x16x32xf32, #tpu.memory_space<vmem>>, %arg4: memref<32x8xf32, #tpu.memory_space<vmem>>, %arg5: memref<64x64xf32, #tpu.memory_space<vmem>>, %arg6: memref<1x64xf32, #tpu.memory_space<vmem>>, %arg7: memref<64x8xf32, #tpu.memory_space<vmem>>, %arg8: memref<1x8xf32, #tpu.memory_space<vmem>>, %arg9: memref<64x2xf32, #tpu.memory_space<vmem>>, %arg10: memref<64x128xf32, #tpu.memory_space<vmem>>, %arg11: memref<1x128xf32, #tpu.memory_space<vmem>>, %arg12: memref<8x128xf32, #tpu.memory_space<vmem>>) attributes {dimension_semantics = [#tpu.dimension_semantics<parallel>], iteration_bounds = array<i64: 2>, scalar_prefetch = 0 : i64, scratch_operands = 0 : i64, tpu.core_type = #tpu.core_type<tc>, window_params = [{transform_indices = @transform_0, window_bounds = array<i64: 2>}, {transform_indices = @transform_1, window_bounds = array<i64: 8, 16, 32>}, {transform_indices = @transform_2, window_bounds = array<i64: 8, 16, 32>}, {pipeline_mode = #tpu.pipeline_mode<synchronous>, transform_indices = @transform_3, window_bounds = array<i64: 32, 8>}, {pipeline_mode = #tpu.pipeline_mode<synchronous>, transform_indices = @transform_4, window_bounds = array<i64: 64, 64>}, {pipeline_mode = #tpu.pipeline_mode<synchronous>, transform_indices = @transform_5, window_bounds = array<i64: 1, 64>}, {pipeline_mode = #tpu.pipeline_mode<synchronous>, transform_indices = @transform_6, window_bounds = array<i64: 64, 8>}, {pipeline_mode = #tpu.pipeline_mode<synchronous>, transform_indices = @transform_7, window_bounds = array<i64: 1, 8>}, {pipeline_mode = #tpu.pipeline_mode<synchronous>, transform_indices = @transform_8, window_bounds = array<i64: 64, 2>}, {pipeline_mode = #tpu.pipeline_mode<synchronous>, transform_indices = @transform_9, window_bounds = array<i64: 64, 128>}, {pipeline_mode = #tpu.pipeline_mode<synchronous>, transform_indices = @transform_10, window_bounds = array<i64: 1, 128>}, {transform_indices = @transform_11, window_bounds = array<i64: 8, 128>}]} {
    %c0 = arith.constant 0 : index
    %c0_0 = arith.constant 0 : index
    %c0_1 = arith.constant 0 : index
    %0 = vector.load %arg2[%c0, %c0_0, %c0_1] : memref<8x16x32xf32, #tpu.memory_space<vmem>>, vector<8x16x32xf32>
    %c0_2 = arith.constant 0 : index
    %c0_3 = arith.constant 0 : index
    %c0_4 = arith.constant 0 : index
    %1 = vector.load %arg3[%c0_2, %c0_3, %c0_4] : memref<8x16x32xf32, #tpu.memory_space<vmem>>, vector<8x16x32xf32>
    %2 = vector.shape_cast %0 : vector<8x16x32xf32> to vector<128x32xf32>
    %3 = vector.shape_cast %1 : vector<8x16x32xf32> to vector<128x32xf32>
    %c0_5 = arith.constant 0 : index
    %c0_6 = arith.constant 0 : index
    %4 = vector.load %arg5[%c0_5, %c0_6] : memref<64x64xf32, #tpu.memory_space<vmem>>, vector<32x64xf32>
    %cst = arith.constant dense<0.000000e+00> : vector<128x64xf32>
    %5 = tpu.matmul %2, %4, %cst {dimension_numbers = #tpu.dot_dimension_numbers<[1], [0], [0], [1], [0, 0, 1, 1], [], []>} : vector<128x32xf32>, vector<32x64xf32>, vector<128x64xf32> -> vector<128x64xf32>
    %c32 = arith.constant 32 : index
    %c0_7 = arith.constant 0 : index
    %6 = vector.load %arg5[%c32, %c0_7] : memref<64x64xf32, #tpu.memory_space<vmem>>, vector<32x64xf32>
    %cst_8 = arith.constant dense<0.000000e+00> : vector<128x64xf32>
    %7 = tpu.matmul %3, %6, %cst_8 {dimension_numbers = #tpu.dot_dimension_numbers<[1], [0], [0], [1], [0, 0, 1, 1], [], []>} : vector<128x32xf32>, vector<32x64xf32>, vector<128x64xf32> -> vector<128x64xf32>
    %8 = arith.addf %5, %7 : vector<128x64xf32>
    %c0_9 = arith.constant 0 : index
    %c0_10 = arith.constant 0 : index
    %9 = vector.load %arg6[%c0_9, %c0_10] : memref<1x64xf32, #tpu.memory_space<vmem>>, vector<1x64xf32>
    %10 = vector.broadcast %9 : vector<1x64xf32> to vector<128x64xf32>
    %11 = arith.addf %8, %10 : vector<128x64xf32>
    %12 = math.tanh %11 : vector<128x64xf32>
    %c0_11 = arith.constant 0 : index
    %c0_12 = arith.constant 0 : index
    %13 = vector.load %arg7[%c0_11, %c0_12] : memref<64x8xf32, #tpu.memory_space<vmem>>, vector<64x8xf32>
    %cst_13 = arith.constant dense<0.000000e+00> : vector<128x8xf32>
    %14 = tpu.matmul %12, %13, %cst_13 {dimension_numbers = #tpu.dot_dimension_numbers<[1], [0], [0], [1], [0, 0, 1, 1], [], []>} : vector<128x64xf32>, vector<64x8xf32>, vector<128x8xf32> -> vector<128x8xf32>
    %c0_14 = arith.constant 0 : index
    %c0_15 = arith.constant 0 : index
    %15 = vector.load %arg8[%c0_14, %c0_15] : memref<1x8xf32, #tpu.memory_space<vmem>>, vector<1x8xf32>
    %16 = vector.broadcast %15 : vector<1x8xf32> to vector<128x8xf32>
    %17 = arith.addf %14, %16 : vector<128x8xf32>
    %18 = vector.shape_cast %17 : vector<128x8xf32> to vector<8x16x8xf32>
    %c0_16 = arith.constant 0 : index
    %c0_17 = arith.constant 0 : index
    %19 = vector.load %arg4[%c0_16, %c0_17] : memref<32x8xf32, #tpu.memory_space<vmem>>, vector<32x8xf32>
    %cst_18 = arith.constant dense<0.000000e+00> : vector<128x8xf32>
    %20 = tpu.matmul %2, %19, %cst_18 {dimension_numbers = #tpu.dot_dimension_numbers<[1], [0], [0], [1], [0, 0, 1, 1], [], []>} : vector<128x32xf32>, vector<32x8xf32>, vector<128x8xf32> -> vector<128x8xf32>
    %21 = vector.shape_cast %20 : vector<128x8xf32> to vector<8x16x8xf32>
    %c0_19 = arith.constant 0 : index
    %c0_20 = arith.constant 0 : index
    %22 = vector.load %arg4[%c0_19, %c0_20] : memref<32x8xf32, #tpu.memory_space<vmem>>, vector<32x8xf32>
    %cst_21 = arith.constant dense<0.000000e+00> : vector<128x8xf32>
    %23 = tpu.matmul %3, %22, %cst_21 {dimension_numbers = #tpu.dot_dimension_numbers<[1], [0], [0], [1], [0, 0, 1, 1], [], []>} : vector<128x32xf32>, vector<32x8xf32>, vector<128x8xf32> -> vector<128x8xf32>
    %24 = vector.shape_cast %23 : vector<128x8xf32> to vector<8x16x8xf32>
    %cst_22 = arith.constant dense<0xFF800000> : vector<8x8xf32>
    %25 = vector.multi_reduction <maximumf>, %18, %cst_22 [1] : vector<8x16x8xf32> to vector<8x8xf32>
    %26 = vector.shape_cast %25 : vector<8x8xf32> to vector<8x1x8xf32>
    %27 = vector.broadcast %26 : vector<8x1x8xf32> to vector<8x16x8xf32>
    %28 = arith.subf %18, %27 : vector<8x16x8xf32>
    %29 = math.exp %28 : vector<8x16x8xf32>
    %cst_23 = arith.constant dense<0.000000e+00> : vector<8x8xf32>
    %30 = vector.multi_reduction <add>, %29, %cst_23 [1] : vector<8x16x8xf32> to vector<8x8xf32>
    %31 = vector.shape_cast %30 : vector<8x8xf32> to vector<8x1x8xf32>
    %cst_24 = arith.constant 1.000000e+00 : f32
    %32 = vector.broadcast %cst_24 : f32 to vector<8x1x8xf32>
    %33 = arith.divf %32, %31 : vector<8x1x8xf32>
    %34 = vector.broadcast %33 : vector<8x1x8xf32> to vector<8x16x8xf32>
    %35 = arith.mulf %29, %34 : vector<8x16x8xf32>
    %36 = tpu.concatenate %35, %21 in 2 : vector<8x16x8xf32>, vector<8x16x8xf32> -> vector<8x16x16xf32>
    %37 = tpu.concatenate %35, %24 in 2 : vector<8x16x8xf32>, vector<8x16x8xf32> -> vector<8x16x16xf32>
    "tpu.trace_start"() <{level = 10 : i32, message = "bsc,bsh->bch"}> : () -> ()
    %cst_25 = arith.constant dense<0.000000e+00> : vector<8x16x32xf32>
    %38 = tpu.matmul %36, %0, %cst_25 {dimension_numbers = #tpu.dot_dimension_numbers<[1], [1], [2], [2], [0, 0, 0, 2, 1, 2], [0], [0]>} : vector<8x16x16xf32>, vector<8x16x32xf32>, vector<8x16x32xf32> -> vector<8x16x32xf32>
    %cst_26 = arith.constant dense<0.000000e+00> : vector<8x16x32xf32>
    %39 = tpu.matmul %37, %1, %cst_26 {dimension_numbers = #tpu.dot_dimension_numbers<[1], [1], [2], [2], [0, 0, 0, 2, 1, 2], [0], [0]>} : vector<8x16x16xf32>, vector<8x16x32xf32>, vector<8x16x32xf32> -> vector<8x16x32xf32>
    "tpu.trace_stop"() : () -> ()
    %40 = tpu.concatenate %38, %39 in 2 : vector<8x16x32xf32>, vector<8x16x32xf32> -> vector<8x16x64xf32>
    %41 = vector.extract_strided_slice %40 {offsets = [0, 0, 0], sizes = [8, 8, 64], strides = [1, 1, 1]} : vector<8x16x64xf32> to vector<8x8x64xf32>
    %42 = vector.shape_cast %41 : vector<8x8x64xf32> to vector<64x64xf32>
    %43 = vector.extract_strided_slice %40 {offsets = [0, 8, 0], sizes = [8, 8, 64], strides = [1, 1, 1]} : vector<8x16x64xf32> to vector<8x8x64xf32>
    %44 = vector.shape_cast %43 : vector<8x8x64xf32> to vector<64x64xf32>
    %45 = tpu.concatenate %44, %42 in 0 : vector<64x64xf32>, vector<64x64xf32> -> vector<128x64xf32>
    %c0_27 = arith.constant 0 : index
    %c0_28 = arith.constant 0 : index
    %46 = vector.load %arg9[%c0_27, %c0_28] : memref<64x2xf32, #tpu.memory_space<vmem>>, vector<64x2xf32>
    %cst_29 = arith.constant dense<0.000000e+00> : vector<128x2xf32>
    %47 = tpu.matmul %45, %46, %cst_29 {dimension_numbers = #tpu.dot_dimension_numbers<[1], [0], [0], [1], [0, 0, 1, 1], [], []>} : vector<128x64xf32>, vector<64x2xf32>, vector<128x2xf32> -> vector<128x2xf32>
    %48 = vector.extract_strided_slice %47 {offsets = [0, 0], sizes = [64, 1], strides = [1, 1]} : vector<128x2xf32> to vector<64x1xf32>
    %c0_30 = arith.constant 0 : index
    %49 = memref.load %arg1[%c0_30] : memref<2xf32, #tpu.memory_space<smem>>
    %50 = vector.broadcast %49 : f32 to vector<64x1xf32>
    %51 = arith.addf %48, %50 : vector<64x1xf32>
    %52 = arith.negf %51 : vector<64x1xf32>
    %53 = math.exp %52 : vector<64x1xf32>
    %cst_31 = arith.constant 1.000000e+00 : f32
    %54 = vector.broadcast %cst_31 : f32 to vector<64x1xf32>
    %55 = arith.addf %54, %53 : vector<64x1xf32>
    %56 = arith.divf %54, %55 : vector<64x1xf32>
    %57 = vector.extract_strided_slice %47 {offsets = [64, 1], sizes = [64, 1], strides = [1, 1]} : vector<128x2xf32> to vector<64x1xf32>
    %c1 = arith.constant 1 : index
    %58 = memref.load %arg1[%c1] : memref<2xf32, #tpu.memory_space<smem>>
    %59 = vector.broadcast %58 : f32 to vector<64x1xf32>
    %60 = arith.addf %57, %59 : vector<64x1xf32>
    %61 = arith.negf %60 : vector<64x1xf32>
    %62 = math.exp %61 : vector<64x1xf32>
    %cst_32 = arith.constant 1.000000e+00 : f32
    %63 = vector.broadcast %cst_32 : f32 to vector<64x1xf32>
    %64 = arith.addf %63, %62 : vector<64x1xf32>
    %65 = arith.divf %63, %64 : vector<64x1xf32>
    %66 = arith.addf %56, %65 : vector<64x1xf32>
    %67 = arith.divf %56, %66 : vector<64x1xf32>
    %cst_33 = arith.constant 1.000000e+00 : f32
    %68 = vector.broadcast %cst_33 : f32 to vector<64x1xf32>
    %69 = arith.subf %68, %67 : vector<64x1xf32>
    %70 = vector.broadcast %67 : vector<64x1xf32> to vector<64x64xf32>
    %71 = arith.mulf %70, %44 : vector<64x64xf32>
    %72 = vector.broadcast %69 : vector<64x1xf32> to vector<64x64xf32>
    %73 = arith.mulf %72, %42 : vector<64x64xf32>
    %74 = arith.addf %71, %73 : vector<64x64xf32>
    %75 = vector.shape_cast %74 : vector<64x64xf32> to vector<8x8x64xf32>
    %cst_34 = arith.constant dense<0.000000e+00> : vector<8x64xf32>
    %76 = vector.multi_reduction <add>, %75, %cst_34 [1] : vector<8x8x64xf32> to vector<8x64xf32>
    %c0_35 = arith.constant 0 : index
    %c0_36 = arith.constant 0 : index
    %77 = vector.load %arg10[%c0_35, %c0_36] : memref<64x128xf32, #tpu.memory_space<vmem>>, vector<64x128xf32>
    %cst_37 = arith.constant dense<0.000000e+00> : vector<8x128xf32>
    %78 = tpu.matmul %76, %77, %cst_37 {dimension_numbers = #tpu.dot_dimension_numbers<[1], [0], [0], [1], [0, 0, 1, 1], [], []>} : vector<8x64xf32>, vector<64x128xf32>, vector<8x128xf32> -> vector<8x128xf32>
    %c0_38 = arith.constant 0 : index
    %c0_39 = arith.constant 0 : index
    %79 = vector.load %arg11[%c0_38, %c0_39] : memref<1x128xf32, #tpu.memory_space<vmem>>, vector<1x128xf32>
    %80 = vector.broadcast %79 : vector<1x128xf32> to vector<8x128xf32>
    %81 = arith.addf %78, %80 : vector<8x128xf32>
    %82 = arith.negf %81 : vector<8x128xf32>
    %83 = math.exp %82 : vector<8x128xf32>
    %cst_40 = arith.constant 1.000000e+00 : f32
    %84 = vector.broadcast %cst_40 : f32 to vector<8x128xf32>
    %85 = arith.addf %84, %83 : vector<8x128xf32>
    %86 = arith.divf %84, %85 : vector<8x128xf32>
    %c0_41 = arith.constant 0 : index
    %c0_42 = arith.constant 0 : index
    %87 = vector.load %arg12[%c0_41, %c0_42] : memref<8x128xf32, #tpu.memory_space<vmem>>, vector<8x128xf32>
    tpu.vector_store %arg12[%c0_41, %c0_42], %86 {strides = array<i32>} : memref<8x128xf32, #tpu.memory_space<vmem>>, vector<8x128xf32>,
    return
  }
  func.func @transform_0(%arg0: i32) -> i32 {
    %c0_i32 = arith.constant 0 : i32
    %c0_i32_0 = arith.constant 0 : i32
    return %c0_i32 : i32
  }
  func.func @transform_1(%arg0: i32) -> (i32, i32, i32) {
    %c0_i32 = arith.constant 0 : i32
    %c0_i32_0 = arith.constant 0 : i32
    %c0_i32_1 = arith.constant 0 : i32
    return %arg0, %c0_i32, %c0_i32_0 : i32, i32, i32
  }
  func.func @transform_2(%arg0: i32) -> (i32, i32, i32) {
    %c0_i32 = arith.constant 0 : i32
    %c0_i32_0 = arith.constant 0 : i32
    %c0_i32_1 = arith.constant 0 : i32
    return %arg0, %c0_i32, %c0_i32_0 : i32, i32, i32
  }
  func.func @transform_3(%arg0: i32) -> (i32, i32) {
    %c0_i32 = arith.constant 0 : i32
    %c0_i32_0 = arith.constant 0 : i32
    %c0_i32_1 = arith.constant 0 : i32
    return %c0_i32, %c0_i32_0 : i32, i32
  }
  func.func @transform_4(%arg0: i32) -> (i32, i32) {
    %c0_i32 = arith.constant 0 : i32
    %c0_i32_0 = arith.constant 0 : i32
    %c0_i32_1 = arith.constant 0 : i32
    return %c0_i32, %c0_i32_0 : i32, i32
  }
  func.func @transform_5(%arg0: i32) -> (i32, i32) {
    %c0_i32 = arith.constant 0 : i32
    %c0_i32_0 = arith.constant 0 : i32
    %c0_i32_1 = arith.constant 0 : i32
    return %c0_i32, %c0_i32_0 : i32, i32
  }
  func.func @transform_6(%arg0: i32) -> (i32, i32) {
    %c0_i32 = arith.constant 0 : i32
    %c0_i32_0 = arith.constant 0 : i32
    %c0_i32_1 = arith.constant 0 : i32
    return %c0_i32, %c0_i32_0 : i32, i32
  }
  func.func @transform_7(%arg0: i32) -> (i32, i32) {
    %c0_i32 = arith.constant 0 : i32
    %c0_i32_0 = arith.constant 0 : i32
    %c0_i32_1 = arith.constant 0 : i32
    return %c0_i32, %c0_i32_0 : i32, i32
  }
  func.func @transform_8(%arg0: i32) -> (i32, i32) {
    %c0_i32 = arith.constant 0 : i32
    %c0_i32_0 = arith.constant 0 : i32
    %c0_i32_1 = arith.constant 0 : i32
    return %c0_i32, %c0_i32_0 : i32, i32
  }
  func.func @transform_9(%arg0: i32) -> (i32, i32) {
    %c0_i32 = arith.constant 0 : i32
    %c0_i32_0 = arith.constant 0 : i32
    %c0_i32_1 = arith.constant 0 : i32
    return %c0_i32, %c0_i32_0 : i32, i32
  }
  func.func @transform_10(%arg0: i32) -> (i32, i32) {
    %c0_i32 = arith.constant 0 : i32
    %c0_i32_0 = arith.constant 0 : i32
    %c0_i32_1 = arith.constant 0 : i32
    return %c0_i32, %c0_i32_0 : i32, i32
  }
  func.func @transform_11(%arg0: i32) -> (i32, i32) {
    %c0_i32 = arith.constant 0 : i32
    %c0_i32_0 = arith.constant 0 : i32
    return %arg0, %c0_i32 : i32, i32
  }
}

</mosaic_0001>

<llo_original>
// kernel: tpu_custom_call.1
$region0: #{tpu_custom_call.1}
  #allocation0 [shape = 'u32[]', space=smem, size = 0x4, offset = 0x4, fixed_abs, tag = 'smem constant byte address 0x4 - core index']
  #allocation1 [shape = 'u32[72,128]{1,0:T(1,128)}', space=vmem, size = 0x9000, scoped, tag = 'internal scratch']
  %s0 = inlined_call_operand.vmem [shape: f32[2], index: 0, kind: input, shape index: {}]
  %s1 = inlined_call_operand.hbm [shape: f32[16,16,32], index: 1, kind: input, shape index: {}]
  %s2 = inlined_call_operand.hbm [shape: f32[16,16,32], index: 2, kind: input, shape index: {}]
  %s3 = inlined_call_operand.vmem [shape: f32[32,8], index: 3, kind: input, shape index: {}]
  %s4 = inlined_call_operand.vmem [shape: f32[64,64], index: 4, kind: input, shape index: {}]
  %s5 = inlined_call_operand.vmem [shape: f32[1,64], index: 5, kind: input, shape index: {}]
  %s6 = inlined_call_operand.vmem [shape: f32[64,8], index: 6, kind: input, shape index: {}]
  %s7 = inlined_call_operand.vmem [shape: f32[1,8], index: 7, kind: input, shape index: {}]
  %s8 = inlined_call_operand.vmem [shape: f32[64,2], index: 8, kind: input, shape index: {}]
  %s9 = inlined_call_operand.vmem [shape: f32[64,128], index: 9, kind: input, shape index: {}]
  %s10 = inlined_call_operand.vmem [shape: f32[1,128], index: 10, kind: input, shape index: {}]
  %s11 = inlined_call_operand.hbm [shape: f32[16,128], index: 11, kind: output, shape index: {}]
  %s12 = sld [smem:[#allocation0]]
  $region89: #{tpu_custom_call.1} parent=0
    _
  %s14 = ssub.s32 1, %s12
  %s15 = scalar_select 0, %s14, %s12
  $region1: #{tpu_custom_call.1} parent=0
    #allocation2 [shape = 'u8[512]{0}', space=smem, size = 0x200, scoped, tag = 'input window, operand 0, single buffered']
    #allocation3 [shape = 's32[2]{0}', space=sflag, size = 0x8, scoped, tag = 'scoped memory for tpu_custom_call.1']
    #allocation4 [shape = 's32[2]{0}', space=sflag, size = 0x8, scoped, tag = 'scoped memory for tpu_custom_call.1']
    #allocation5 [shape = 's32[2]{0}', space=sflag, size = 0x8, scoped, tag = 'scoped memory for tpu_custom_call.1']
    #allocation6 [shape = 'u8[131072]{0}', space=vmem, size = 0x20000, scoped, tag = 'input window, operand 1']
    #allocation7 [shape = 'u8[131072]{0}', space=vmem, size = 0x20000, scoped, tag = 'input window, operand 2']
    #allocation8 [shape = 's32[2]{0}', space=sflag, size = 0x8, scoped, tag = 'scoped memory for tpu_custom_call.1']
    #allocation9 [shape = 'u8[8192]{0}', space=vmem, size = 0x2000, scoped, tag = 'output window, operand 0']
    %16 = vsyncpa [#allocation5], 0
    %17 = vsyncpa [#allocation3], 0
    %s18 = scalar_lea.sflag [#allocation3], 1
    %19 = vsyncpa %s18, 0
    %20 = vsyncpa [#allocation8], 0
    %s21 = scalar_lea.sflag [#allocation8], 1
    %22 = vsyncpa %s21, 0
    %23 = vsyncpa [#allocation4], 0
    %s24 = scalar_lea.sflag [#allocation4], 1
    %25 = vsyncpa %s24, 0
    loop: start=0, step=1, limit=4
    $region2: #{tpu_custom_call.1} parent=1 // loop_pre_header
      _
    $region3: #{tpu_custom_call.1} parent=1 // loop_header
      %s27 = sphi 0, %s31
      %p28 = scmp.ge.s32.totalorder %s27, 4
      %s35 = sphi 0, %s35
      %s37 = sphi 0, %s35
      %s38 = sphi 0, %s37
      %s52 = sphi 0, %s38
      %s58 = sphi 0, %s60
      %s61 = sphi 0, %s58
      %s62 = sphi 0, %s61
      %s78 = sphi 0, %s62
      %s84 = sphi 0, %s86
      %s87 = sphi 0, %s84
      %s88 = sphi 0, %s87
      %s104 = sphi 0, %s88
      %s108 = sphi 0, %s108
      %s110 = sphi 0, %s108
      %s111 = sphi 0, %s110
      %s125 = sphi 0, %s111
      %s129 = sphi 0, %s129
      %s131 = sphi 0, %s129
      %s132 = sphi 0, %s131
      %s146 = sphi 0, %s132
      %s150 = sphi 0, %s150
      %s152 = sphi 0, %s150
      %s153 = sphi 0, %s152
      %s167 = sphi 0, %s153
      %s171 = sphi 0, %s171
      %s173 = sphi 0, %s171
      %s174 = sphi 0, %s173
      %s188 = sphi 0, %s174
      %s192 = sphi 0, %s192
      %s194 = sphi 0, %s192
      %s195 = sphi 0, %s194
      %s209 = sphi 0, %s195
      %s213 = sphi 0, %s213
      %s215 = sphi 0, %s213
      %s216 = sphi 0, %s215
      %s230 = sphi 0, %s216
      %s234 = sphi 0, %s234
      %s236 = sphi 0, %s234
      %s237 = sphi 0, %s236
      %s251 = sphi 0, %s237
      %s255 = sphi 0, %s255
      %s257 = sphi 0, %s255
      %s258 = sphi 0, %s257
      %s272 = sphi 0, %s258
      %s278 = sphi 0, %s280
      %s281 = sphi 0, %s278
      %s282 = sphi 0, %s281
      %s298 = sphi 0, %s282
    $region4: #{tpu_custom_call.1} parent=1 // loop_header_branch
      %30 = sbr.rel (%p28) target = $region8
    $region5: #{tpu_custom_call.1} parent=1 // loop_body
      %s32 = ssub.s32 %s27, 1
      %s33 = ssub.s32 %s27, 2
      %s34 = sadd.s32 %s27, 1
      %s36 = sadd.s32 %s35, 1
      %p39 = scmp.eq.s32.totalorder %s27, 1
      %p40 = scmp.ne.s32.totalorder %s35, %s37
      %p41 = scmp.eq.s32.totalorder %s27, 0
      %p42 = por %p40, %p41
      %p43 = scmp.ne.s32.totalorder %s35, %s37
      %p44 = scmp.eq.s32.totalorder %s32, 1
      %p45 = por %p43, %p44
      %p46 = scmp.ne.s32.totalorder %s37, %s38
      %p47 = scmp.eq.s32.totalorder %s32, 0
      %p48 = por %p46, %p47
      %p49 = scmp.ne.s32.totalorder %s37, %s38
      %p50 = scmp.eq.s32.totalorder %s33, 1
      %p51 = por %p49, %p50
      %p53 = scmp.ne.s32.totalorder %s38, %s52
      %p54 = scmp.eq.s32.totalorder %s33, 0
      %p55 = por %p53, %p54
      %s56 = ssub.s32 %s27, %s34
      %p57 = scmp.eq.s32.totalorder %s56, 0
      %s59 = sadd.s32 %s58, 1
      %s60 = scalar_select %p57, %s58, %s59
      %p63 = pneg %p57
      %p64 = scmp.eq.s32.totalorder %s27, 1
      %p65 = por %p63, %p64
      %p66 = scmp.ne.s32.totalorder %s58, %s61
      %p67 = scmp.eq.s32.totalorder %s27, 0
      %p68 = por %p66, %p67
      %p69 = scmp.ne.s32.totalorder %s58, %s61
      %p70 = scmp.eq.s32.totalorder %s32, 1
      %p71 = por %p69, %p70
      %p72 = scmp.ne.s32.totalorder %s61, %s62
      %p73 = scmp.eq.s32.totalorder %s32, 0
      %p74 = por %p72, %p73
      %p75 = scmp.ne.s32.totalorder %s61, %s62
      %p76 = scmp.eq.s32.totalorder %s33, 1
      %p77 = por %p75, %p76
      %p79 = scmp.ne.s32.totalorder %s62, %s78
      %p80 = scmp.eq.s32.totalorder %s33, 0
      %p81 = por %p79, %p80
      %s82 = ssub.s32 %s27, %s34
      %p83 = scmp.eq.s32.totalorder %s82, 0
      %s85 = sadd.s32 %s84, 1
      %s86 = scalar_select %p83, %s84, %s85
      %p89 = pneg %p83
      %p90 = scmp.eq.s32.totalorder %s27, 1
      %p91 = por %p89, %p90
      %p92 = scmp.ne.s32.totalorder %s84, %s87
      %p93 = scmp.eq.s32.totalorder %s27, 0
      %p94 = por %p92, %p93
      %p95 = scmp.ne.s32.totalorder %s84, %s87
      %p96 = scmp.eq.s32.totalorder %s32, 1
      %p97 = por %p95, %p96
      %p98 = scmp.ne.s32.totalorder %s87, %s88
      %p99 = scmp.eq.s32.totalorder %s32, 0
      %p100 = por %p98, %p99
      %p101 = scmp.ne.s32.totalorder %s87, %s88
      %p102 = scmp.eq.s32.totalorder %s33, 1
      %p103 = por %p101, %p102
      %p105 = scmp.ne.s32.totalorder %s88, %s104
      %p106 = scmp.eq.s32.totalorder %s33, 0
      %p107 = por %p105, %p106
      %s109 = sadd.s32 %s108, 1
      %p112 = scmp.eq.s32.totalorder %s27, 1
      %p113 = scmp.ne.s32.totalorder %s108, %s110
      %p114 = scmp.eq.s32.totalorder %s27, 0
      %p115 = por %p113, %p114
      %p116 = scmp.ne.s32.totalorder %s108, %s110
      %p117 = scmp.eq.s32.totalorder %s32, 1
      %p118 = por %p116, %p117
      %p119 = scmp.ne.s32.totalorder %s110, %s111
      %p120 = scmp.eq.s32.totalorder %s32, 0
      %p121 = por %p119, %p120
      %p122 = scmp.ne.s32.totalorder %s110, %s111
      %p123 = scmp.eq.s32.totalorder %s33, 1
      %p124 = por %p122, %p123
      %p126 = scmp.ne.s32.totalorder %s111, %s125
      %p127 = scmp.eq.s32.totalorder %s33, 0
      %p128 = por %p126, %p127
      %s130 = sadd.s32 %s129, 1
      %p133 = scmp.eq.s32.totalorder %s27, 1
      %p134 = scmp.ne.s32.totalorder %s129, %s131
      %p135 = scmp.eq.s32.totalorder %s27, 0
      %p136 = por %p134, %p135
      %p137 = scmp.ne.s32.totalorder %s129, %s131
      %p138 = scmp.eq.s32.totalorder %s32, 1
      %p139 = por %p137, %p138
      %p140 = scmp.ne.s32.totalorder %s131, %s132
      %p141 = scmp.eq.s32.totalorder %s32, 0
      %p142 = por %p140, %p141
      %p143 = scmp.ne.s32.totalorder %s131, %s132
      %p144 = scmp.eq.s32.totalorder %s33, 1
      %p145 = por %p143, %p144
      %p147 = scmp.ne.s32.totalorder %s132, %s146
      %p148 = scmp.eq.s32.totalorder %s33, 0
      %p149 = por %p147, %p148
      %s151 = sadd.s32 %s150, 1
      %p154 = scmp.eq.s32.totalorder %s27, 1
      %p155 = scmp.ne.s32.totalorder %s150, %s152
      %p156 = scmp.eq.s32.totalorder %s27, 0
      %p157 = por %p155, %p156
      %p158 = scmp.ne.s32.totalorder %s150, %s152
      %p159 = scmp.eq.s32.totalorder %s32, 1
      %p160 = por %p158, %p159
      %p161 = scmp.ne.s32.totalorder %s152, %s153
      %p162 = scmp.eq.s32.totalorder %s32, 0
      %p163 = por %p161, %p162
      %p164 = scmp.ne.s32.totalorder %s152, %s153
      %p165 = scmp.eq.s32.totalorder %s33, 1
      %p166 = por %p164, %p165
      %p168 = scmp.ne.s32.totalorder %s153, %s167
      %p169 = scmp.eq.s32.totalorder %s33, 0
      %p170 = por %p168, %p169
      %s172 = sadd.s32 %s171, 1
      %p175 = scmp.eq.s32.totalorder %s27, 1
      %p176 = scmp.ne.s32.totalorder %s171, %s173
      %p177 = scmp.eq.s32.totalorder %s27, 0
      %p178 = por %p176, %p177
      %p179 = scmp.ne.s32.totalorder %s171, %s173
      %p180 = scmp.eq.s32.totalorder %s32, 1
      %p181 = por %p179, %p180
      %p182 = scmp.ne.s32.totalorder %s173, %s174
      %p183 = scmp.eq.s32.totalorder %s32, 0
      %p184 = por %p182, %p183
      %p185 = scmp.ne.s32.totalorder %s173, %s174
      %p186 = scmp.eq.s32.totalorder %s33, 1
      %p187 = por %p185, %p186
      %p189 = scmp.ne.s32.totalorder %s174, %s188
      %p190 = scmp.eq.s32.totalorder %s33, 0
      %p191 = por %p189, %p190
      %s193 = sadd.s32 %s192, 1
      %p196 = scmp.eq.s32.totalorder %s27, 1
      %p197 = scmp.ne.s32.totalorder %s192, %s194
      %p198 = scmp.eq.s32.totalorder %s27, 0
      %p199 = por %p197, %p198
      %p200 = scmp.ne.s32.totalorder %s192, %s194
      %p201 = scmp.eq.s32.totalorder %s32, 1
      %p202 = por %p200, %p201
      %p203 = scmp.ne.s32.totalorder %s194, %s195
      %p204 = scmp.eq.s32.totalorder %s32, 0
      %p205 = por %p203, %p204
      %p206 = scmp.ne.s32.totalorder %s194, %s195
      %p207 = scmp.eq.s32.totalorder %s33, 1
      %p208 = por %p206, %p207
      %p210 = scmp.ne.s32.totalorder %s195, %s209
      %p211 = scmp.eq.s32.totalorder %s33, 0
      %p212 = por %p210, %p211
      %s214 = sadd.s32 %s213, 1
      %p217 = scmp.eq.s32.totalorder %s27, 1
      %p218 = scmp.ne.s32.totalorder %s213, %s215
      %p219 = scmp.eq.s32.totalorder %s27, 0
      %p220 = por %p218, %p219
      %p221 = scmp.ne.s32.totalorder %s213, %s215
      %p222 = scmp.eq.s32.totalorder %s32, 1
      %p223 = por %p221, %p222
      %p224 = scmp.ne.s32.totalorder %s215, %s216
      %p225 = scmp.eq.s32.totalorder %s32, 0
      %p226 = por %p224, %p225
      %p227 = scmp.ne.s32.totalorder %s215, %s216
      %p228 = scmp.eq.s32.totalorder %s33, 1
      %p229 = por %p227, %p228
      %p231 = scmp.ne.s32.totalorder %s216, %s230
      %p232 = scmp.eq.s32.totalorder %s33, 0
      %p233 = por %p231, %p232
      %s235 = sadd.s32 %s234, 1
      %p238 = scmp.eq.s32.totalorder %s27, 1
      %p239 = scmp.ne.s32.totalorder %s234, %s236
      %p240 = scmp.eq.s32.totalorder %s27, 0
      %p241 = por %p239, %p240
      %p242 = scmp.ne.s32.totalorder %s234, %s236
      %p243 = scmp.eq.s32.totalorder %s32, 1
      %p244 = por %p242, %p243
      %p245 = scmp.ne.s32.totalorder %s236, %s237
      %p246 = scmp.eq.s32.totalorder %s32, 0
      %p247 = por %p245, %p246
      %p248 = scmp.ne.s32.totalorder %s236, %s237
      %p249 = scmp.eq.s32.totalorder %s33, 1
      %p250 = por %p248, %p249
      %p252 = scmp.ne.s32.totalorder %s237, %s251
      %p253 = scmp.eq.s32.totalorder %s33, 0
      %p254 = por %p252, %p253
      %s256 = sadd.s32 %s255, 1
      %p259 = scmp.eq.s32.totalorder %s27, 1
      %p260 = scmp.ne.s32.totalorder %s255, %s257
      %p261 = scmp.eq.s32.totalorder %s27, 0
      %p262 = por %p260, %p261
      %p263 = scmp.ne.s32.totalorder %s255, %s257
      %p264 = scmp.eq.s32.totalorder %s32, 1
      %p265 = por %p263, %p264
      %p266 = scmp.ne.s32.totalorder %s257, %s258
      %p267 = scmp.eq.s32.totalorder %s32, 0
      %p268 = por %p266, %p267
      %p269 = scmp.ne.s32.totalorder %s257, %s258
      %p270 = scmp.eq.s32.totalorder %s33, 1
      %p271 = por %p269, %p270
      %p273 = scmp.ne.s32.totalorder %s258, %s272
      %p274 = scmp.eq.s32.totalorder %s33, 0
      %p275 = por %p273, %p274
      %s276 = ssub.s32 %s27, %s34
      %p277 = scmp.eq.s32.totalorder %s276, 0
      %s279 = sadd.s32 %s278, 1
      %s280 = scalar_select %p277, %s278, %s279
      %p283 = pneg %p277
      %p284 = scmp.eq.s32.totalorder %s27, 1
      %p285 = por %p283, %p284
      %p286 = scmp.ne.s32.totalorder %s278, %s281
      %p287 = scmp.eq.s32.totalorder %s27, 0
      %p288 = por %p286, %p287
      %p289 = scmp.ne.s32.totalorder %s278, %s281
      %p290 = scmp.eq.s32.totalorder %s32, 1
      %p291 = por %p289, %p290
      %p292 = scmp.ne.s32.totalorder %s281, %s282
      %p293 = scmp.eq.s32.totalorder %s32, 0
      %p294 = por %p292, %p293
      %p295 = scmp.ne.s32.totalorder %s281, %s282
      %p296 = scmp.eq.s32.totalorder %s33, 1
      %p297 = por %p295, %p296
      %p299 = scmp.ne.s32.totalorder %s282, %s298
      %p300 = scmp.eq.s32.totalorder %s33, 0
      %p301 = por %p299, %p300
      %p302 = scmp.le.s32.totalorder 1, %s27
      %p303 = scmp.lt.s32.totalorder %s27, 3
      %p304 = pnand %p302, %p303
      %p305 = pneg %p304
      // Predicated region
      $region9: #{tpu_custom_call.1} parent=5 // pred_check
        _
      $region10: #{tpu_custom_call.1} parent=5 // pred_check_branch
        %307 = sbr.rel (%p304) target = $region12
      $region11: #{tpu_custom_call.1} parent=5 // pred_region
        %s308 = ssub.s32 %s27, 1
        // Predicated region
        $region13: #{tpu_custom_call.1} parent=11 // pred_check
          %p309 = pneg %p48
        $region14: #{tpu_custom_call.1} parent=11 // pred_check_branch
          %311 = sbr.rel (%p309) target = $region16
        $region15: #{tpu_custom_call.1} parent=11 // pred_region
          %313 = vsyncadd [#allocation5], 0
          %s315 = sshll.u32 %s0, 4
          %s316 = int_to_ptr.vmem [resolvable:$true] %s315
          %318 = dma.vmem_to_smem %s316, 16, [#allocation2], [#allocation5]
        $region16: #{tpu_custom_call.1} parent=11 // pred_fallthru
          _
        // Predicated region
        $region17: #{tpu_custom_call.1} parent=11 // pred_check
          %p319 = pneg %p121
        $region18: #{tpu_custom_call.1} parent=11 // pred_check_branch
          %321 = sbr.rel (%p319) target = $region20
        $region19: #{tpu_custom_call.1} parent=11 // pred_region
          _
        $region20: #{tpu_custom_call.1} parent=11 // pred_fallthru
          _
        // Predicated region
        $region21: #{tpu_custom_call.1} parent=11 // pred_check
          %p322 = pneg %p142
        $region22: #{tpu_custom_call.1} parent=11 // pred_check_branch
          %324 = sbr.rel (%p322) target = $region24
        $region23: #{tpu_custom_call.1} parent=11 // pred_region
          _
        $region24: #{tpu_custom_call.1} parent=11 // pred_fallthru
          _
        // Predicated region
        $region25: #{tpu_custom_call.1} parent=11 // pred_check
          %p325 = pneg %p163
        $region26: #{tpu_custom_call.1} parent=11 // pred_check_branch
          %327 = sbr.rel (%p325) target = $region28
        $region27: #{tpu_custom_call.1} parent=11 // pred_region
          _
        $region28: #{tpu_custom_call.1} parent=11 // pred_fallthru
          _
        // Predicated region
        $region29: #{tpu_custom_call.1} parent=11 // pred_check
          %p328 = pneg %p184
        $region30: #{tpu_custom_call.1} parent=11 // pred_check_branch
          %330 = sbr.rel (%p328) target = $region32
        $region31: #{tpu_custom_call.1} parent=11 // pred_region
          _
        $region32: #{tpu_custom_call.1} parent=11 // pred_fallthru
          _
        // Predicated region
        $region33: #{tpu_custom_call.1} parent=11 // pred_check
          %p331 = pneg %p205
        $region34: #{tpu_custom_call.1} parent=11 // pred_check_branch
          %333 = sbr.rel (%p331) target = $region36
        $region35: #{tpu_custom_call.1} parent=11 // pred_region
          _
        $region36: #{tpu_custom_call.1} parent=11 // pred_fallthru
          _
        // Predicated region
        $region37: #{tpu_custom_call.1} parent=11 // pred_check
          %p334 = pneg %p226
        $region38: #{tpu_custom_call.1} parent=11 // pred_check_branch
          %336 = sbr.rel (%p334) target = $region40
        $region39: #{tpu_custom_call.1} parent=11 // pred_region
          _
        $region40: #{tpu_custom_call.1} parent=11 // pred_fallthru
          _
        // Predicated region
        $region41: #{tpu_custom_call.1} parent=11 // pred_check
          %p337 = pneg %p247
        $region42: #{tpu_custom_call.1} parent=11 // pred_check_branch
          %339 = sbr.rel (%p337) target = $region44
        $region43: #{tpu_custom_call.1} parent=11 // pred_region
          _
        $region44: #{tpu_custom_call.1} parent=11 // pred_fallthru
          _
        // Predicated region
        $region45: #{tpu_custom_call.1} parent=11 // pred_check
          %p340 = pneg %p268
        $region46: #{tpu_custom_call.1} parent=11 // pred_check_branch
          %342 = sbr.rel (%p340) target = $region48
        $region47: #{tpu_custom_call.1} parent=11 // pred_region
          _
        $region48: #{tpu_custom_call.1} parent=11 // pred_fallthru
          _
      $region12: #{tpu_custom_call.1} parent=5 // pred_fallthru
        _
      %p343 = scmp.lt.s32.totalorder %s27, 2
      // Predicated region
      $region49: #{tpu_custom_call.1} parent=5 // pred_check
        %p344 = pneg %p343
      $region50: #{tpu_custom_call.1} parent=5 // pred_check_branch
        %346 = sbr.rel (%p344) target = $region52
      $region51: #{tpu_custom_call.1} parent=5 // pred_region
        // Predicated region
        $region53: #{tpu_custom_call.1} parent=51 // pred_check
          %p347 = pneg %p68
        $region54: #{tpu_custom_call.1} parent=51 // pred_check_branch
          %349 = sbr.rel (%p347) target = $region56
        $region55: #{tpu_custom_call.1} parent=51 // pred_region
          %s350 = sand.u32 %s58, 1
          %s351 = scalar_lea.sflag [#allocation3], %s350
          %s352 = sand.u32 %s58, 1
          %s353 = smul.addr %s352, 128
          %s354 = scalar_lea.vmem [#allocation6], %s353
          %s355 = smul.u32 8, %s27
          %357 = vsyncadd %s351, 0
          %s358 = smul.addr %s355, 2
          %s359 = smul.addr %s358, 8
          %s360 = scalar_lea.hbm %s1, %s359
          %s361 = sshll.u32 %s360, 4
          %s362 = int_to_ptr.hbm [resolvable:$true] %s361
          %s363 = sshll.u32 %s354, 4
          %s364 = int_to_ptr.vmem [resolvable:$true] %s363
          %369 = dma.hbm_to_vmem [thread:$0]  %s362, 2048, %s364, %s351, 128, 128, 8
        $region56: #{tpu_custom_call.1} parent=51 // pred_fallthru
          _
        // Predicated region
        $region57: #{tpu_custom_call.1} parent=51 // pred_check
          %p370 = pneg %p94
        $region58: #{tpu_custom_call.1} parent=51 // pred_check_branch
          %372 = sbr.rel (%p370) target = $region60
        $region59: #{tpu_custom_call.1} parent=51 // pred_region
          %s373 = sand.u32 %s84, 1
          %s374 = scalar_lea.sflag [#allocation8], %s373
          %s375 = sand.u32 %s84, 1
          %s376 = smul.addr %s375, 128
          %s377 = scalar_lea.vmem [#allocation7], %s376
          %s378 = smul.u32 8, %s27
          %380 = vsyncadd %s374, 0
          %s381 = smul.addr %s378, 2
          %s382 = smul.addr %s381, 8
          %s383 = scalar_lea.hbm %s2, %s382
          %s384 = sshll.u32 %s383, 4
          %s385 = int_to_ptr.hbm [resolvable:$true] %s384
          %s386 = sshll.u32 %s377, 4
          %s387 = int_to_ptr.vmem [resolvable:$true] %s386
          %392 = dma.hbm_to_vmem [thread:$0]  %s385, 2048, %s387, %s374, 128, 128, 8
        $region60: #{tpu_custom_call.1} parent=51 // pred_fallthru
          _
      $region52: #{tpu_custom_call.1} parent=5 // pred_fallthru
        _
      %p393 = scmp.le.s32.totalorder 1, %s27
      %p394 = scmp.lt.s32.totalorder %s27, 3
      %p395 = pnand %p393, %p394
      %p396 = pneg %p395
      // Predicated region
      $region61: #{tpu_custom_call.1} parent=5 // pred_check
        _
      $region62: #{tpu_custom_call.1} parent=5 // pred_check_branch
        %398 = sbr.rel (%p395) target = $region64
      $region63: #{tpu_custom_call.1} parent=5 // pred_region
        %s399 = ssub.s32 %s27, 1
        // Predicated region
        $region65: #{tpu_custom_call.1} parent=63 // pred_check
          %p400 = pneg %p48
        $region66: #{tpu_custom_call.1} parent=63 // pred_check_branch
          %402 = sbr.rel (%p400) target = $region68
        $region67: #{tpu_custom_call.1} parent=63 // pred_region
          %404 = dma.done [#allocation5], 16
        $region68: #{tpu_custom_call.1} parent=63 // pred_fallthru
          _
        %s405 = sand.u32 %s61, 1
        %s406 = scalar_lea.sflag [#allocation3], %s405
        %s407 = sand.u32 %s61, 1
        %s408 = smul.addr %s407, 128
        %s409 = scalar_lea.vmem [#allocation6], %s408
        // Predicated region
        $region69: #{tpu_custom_call.1} parent=63 // pred_check
          %p410 = pneg %p74
        $region70: #{tpu_custom_call.1} parent=63 // pred_check_branch
          %412 = sbr.rel (%p410) target = $region72
        $region71: #{tpu_custom_call.1} parent=63 // pred_region
          %414 = dma.done %s406, 2048
        $region72: #{tpu_custom_call.1} parent=63 // pred_fallthru
          _
        %s415 = sand.u32 %s87, 1
        %s416 = scalar_lea.sflag [#allocation8], %s415
        %s417 = sand.u32 %s87, 1
        %s418 = smul.addr %s417, 128
        %s419 = scalar_lea.vmem [#allocation7], %s418
        // Predicated region
        $region73: #{tpu_custom_call.1} parent=63 // pred_check
          %p420 = pneg %p100
        $region74: #{tpu_custom_call.1} parent=63 // pred_check_branch
          %422 = sbr.rel (%p420) target = $region76
        $region75: #{tpu_custom_call.1} parent=63 // pred_region
          %424 = dma.done %s416, 2048
        $region76: #{tpu_custom_call.1} parent=63 // pred_fallthru
          _
        %425 = sfence
        %p426 = pneg %p48
        %p427 = pneg %p45
        %s428 = sand.u32 %s61, 1
        %s429 = scalar_lea.sflag [#allocation3], %s428
        %s430 = sand.u32 %s61, 1
        %s431 = smul.addr %s430, 128
        %s432 = scalar_lea.vmem [#allocation6], %s431
        %p433 = pneg %p74
        %p434 = pneg %p71
        %s435 = sand.u32 %s87, 1
        %s436 = scalar_lea.sflag [#allocation8], %s435
        %s437 = sand.u32 %s87, 1
        %s438 = smul.addr %s437, 128
        %s439 = scalar_lea.vmem [#allocation7], %s438
        %p440 = pneg %p100
        %p441 = pneg %p97
        %p442 = pneg %p121
        %p443 = pneg %p118
        %p444 = pneg %p142
        %p445 = pneg %p139
        %p446 = pneg %p163
        %p447 = pneg %p160
        %p448 = pneg %p184
        %p449 = pneg %p181
        %p450 = pneg %p205
        %p451 = pneg %p202
        %p452 = pneg %p226
        %p453 = pneg %p223
        %p454 = pneg %p247
        %p455 = pneg %p244
        %p456 = pneg %p268
        %p457 = pneg %p265
        %p458 = pneg %p294
        %p459 = pneg %p291
        %s460 = sand.u32 %s281, 1
        %s461 = scalar_lea.sflag [#allocation4], %s460
        %s462 = sand.u32 %s281, 1
        %s463 = smul.addr %s462, 8
        %s464 = scalar_lea.vmem [#allocation9], %s463
        %s465 = smul.u32 8, %s32
        %s466 = smul.u32 8, %s32
        %v467 = vld [vmem:[%s409] sm:$0xff]
        %v468 = vld [vmem:[%s409 + $0x8] sm:$0xff]
        %v469 = vld [vmem:[%s409 + $0x10] sm:$0xff]
        %v470 = vld [vmem:[%s409 + $0x18] sm:$0xff]
        %v471 = vld [vmem:[%s409 + $0x20] sm:$0xff]
        %v472 = vld [vmem:[%s409 + $0x28] sm:$0xff]
        %v473 = vld [vmem:[%s409 + $0x30] sm:$0xff]
        %v474 = vld [vmem:[%s409 + $0x38] sm:$0xff]
        %v475 = vld [vmem:[%s409 + $0x40] sm:$0xff]
        %v476 = vld [vmem:[%s409 + $0x48] sm:$0xff]
        %v477 = vld [vmem:[%s409 + $0x50] sm:$0xff]
        %v478 = vld [vmem:[%s409 + $0x58] sm:$0xff]
        %v479 = vld [vmem:[%s409 + $0x60] sm:$0xff]
        %v480 = vld [vmem:[%s409 + $0x68] sm:$0xff]
        %v481 = vld [vmem:[%s409 + $0x70] sm:$0xff]
        %v482 = vld [vmem:[%s409 + $0x78] sm:$0xff]
        %v483 = vld [vmem:[%s419] sm:$0xff]
        %v484 = vld [vmem:[%s419 + $0x8] sm:$0xff]
        %v485 = vld [vmem:[%s419 + $0x10] sm:$0xff]
        %v486 = vld [vmem:[%s419 + $0x18] sm:$0xff]
        %v487 = vld [vmem:[%s419 + $0x20] sm:$0xff]
        %v488 = vld [vmem:[%s419 + $0x28] sm:$0xff]
        %v489 = vld [vmem:[%s419 + $0x30] sm:$0xff]
        %v490 = vld [vmem:[%s419 + $0x38] sm:$0xff]
        %v491 = vld [vmem:[%s419 + $0x40] sm:$0xff]
        %v492 = vld [vmem:[%s419 + $0x48] sm:$0xff]
        %v493 = vld [vmem:[%s419 + $0x50] sm:$0xff]
        %v494 = vld [vmem:[%s419 + $0x58] sm:$0xff]
        %v495 = vld [vmem:[%s419 + $0x60] sm:$0xff]
        %v496 = vld [vmem:[%s419 + $0x68] sm:$0xff]
        %v497 = vld [vmem:[%s419 + $0x70] sm:$0xff]
        %v498 = vld [vmem:[%s419 + $0x78] sm:$0xff]
        %v499 = vld [vmem:[%s4] sm:$0xff]
        %v500 = vld [vmem:[%s4 + $0x8] sm:$0xff]
        %v501 = vld [vmem:[%s4 + $0x10] sm:$0xff]
        %v502 = vld [vmem:[%s4 + $0x18] sm:$0xff]
        %v503 = vld [vmem:[%s4 + $0x20] sm:$0xff]
        %v504 = vld [vmem:[%s4 + $0x28] sm:$0xff]
        %v505 = vld [vmem:[%s4 + $0x30] sm:$0xff]
        %v506 = vld [vmem:[%s4 + $0x38] sm:$0xff]
        %vm507 = vcmask 261120
        %v509 = vsel %vm507, %v483, 0
        %v512 = vsel %vm507, %v484, 0
        %v515 = vsel %vm507, %v485, 0
        %v518 = vsel %vm507, %v486, 0
        %v521 = vsel %vm507, %v487, 0
        %v524 = vsel %vm507, %v488, 0
        %v527 = vsel %vm507, %v489, 0
        %v530 = vsel %vm507, %v490, 0
        %v533 = vsel %vm507, %v491, 0
        %v536 = vsel %vm507, %v492, 0
        %v539 = vsel %vm507, %v493, 0
        %v542 = vsel %vm507, %v494, 0
        %v545 = vsel %vm507, %v495, 0
        %v548 = vsel %vm507, %v496, 0
        %v551 = vsel %vm507, %v497, 0
        %v554 = vsel %vm507, %v498, 0
        %556 = vmatpush.msra.mxu0 0.0
        %557 = vmatpush.msra.mxu0 0.0
        %558 = vmatpush.msra.mxu0 0.0
        %559 = vmatpush.msra.mxu0 0.0
        %560 = vmatpush.msra.mxu0 0.0
        %561 = vmatpush.msra.mxu0 0.0
        %562 = vmatpush.msra.mxu0 0.0
        %563 = vmatpush.msra.mxu0 0.0
        %564 = vmatpush.msra.mxu0 0.0
        %565 = vmatpush.msra.mxu0 0.0
        %566 = vmatpush.msra.mxu0 0.0
        %567 = vmatpush.msra.mxu0 0.0
        %568 = vmatpush.msra.mxu0 %v506
        %569 = vmatpush.msra.mxu0 %v505
        %570 = vmatpush.msra.mxu0 %v504
        %571 = vmatpush.msra.mxu0 %v503
        %572 = vmatmul.f32.gmra.mxu0 %v509
        %v573 = vpop.f32.mrf.mxu0
        %v574 = vadd.f32 0.0, %v573
        %575 = vmatmul.f32.gmra.mxu0 %v512
        %v576 = vpop.f32.mrf.mxu0
        %v577 = vadd.f32 0.0, %v576
        %578 = vmatmul.f32.gmra.mxu0 %v515
        %v579 = vpop.f32.mrf.mxu0
        %v580 = vadd.f32 0.0, %v579
        %581 = vmatmul.f32.gmra.mxu0 %v518
        %v582 = vpop.f32.mrf.mxu0
        %v583 = vadd.f32 0.0, %v582
        %584 = vmatmul.f32.gmra.mxu0 %v521
        %v585 = vpop.f32.mrf.mxu0
        %v586 = vadd.f32 0.0, %v585
        %587 = vmatmul.f32.gmra.mxu0 %v524
        %v588 = vpop.f32.mrf.mxu0
        %v589 = vadd.f32 0.0, %v588
        %590 = vmatmul.f32.gmra.mxu0 %v527
        %v591 = vpop.f32.mrf.mxu0
        %v592 = vadd.f32 0.0, %v591
        %593 = vmatmul.f32.gmra.mxu0 %v530
        %v594 = vpop.f32.mrf.mxu0
        %v595 = vadd.f32 0.0, %v594
        %596 = vmatmul.f32.gmra.mxu0 %v533
        %v597 = vpop.f32.mrf.mxu0
        %v598 = vadd.f32 0.0, %v597
        %599 = vmatmul.f32.gmra.mxu0 %v536
        %v600 = vpop.f32.mrf.mxu0
        %v601 = vadd.f32 0.0, %v600
        %602 = vmatmul.f32.gmra.mxu0 %v539
        %v603 = vpop.f32.mrf.mxu0
        %v604 = vadd.f32 0.0, %v603
        %605 = vmatmul.f32.gmra.mxu0 %v542
        %v606 = vpop.f32.mrf.mxu0
        %v607 = vadd.f32 0.0, %v606
        %608 = vmatmul.f32.gmra.mxu0 %v545
        %v609 = vpop.f32.mrf.mxu0
        %v610 = vadd.f32 0.0, %v609
        %611 = vmatmul.f32.gmra.mxu0 %v548
        %v612 = vpop.f32.mrf.mxu0
        %v613 = vadd.f32 0.0, %v612
        %614 = vmatmul.f32.gmra.mxu0 %v551
        %v615 = vpop.f32.mrf.mxu0
        %v616 = vadd.f32 0.0, %v615
        %617 = vmatmul.f32.gmra.mxu0 %v554
        %v618 = vpop.f32.mrf.mxu0
        %v619 = vadd.f32 0.0, %v618
        %620 = vdwg.mxu0
        %v622 = vsel %vm507, %v467, 0
        %v625 = vsel %vm507, %v468, 0
        %v628 = vsel %vm507, %v469, 0
        %v631 = vsel %vm507, %v470, 0
        %v634 = vsel %vm507, %v471, 0
        %v637 = vsel %vm507, %v472, 0
        %v640 = vsel %vm507, %v473, 0
        %v643 = vsel %vm507, %v474, 0
        %v646 = vsel %vm507, %v475, 0
        %v649 = vsel %vm507, %v476, 0
        %v652 = vsel %vm507, %v477, 0
        %v655 = vsel %vm507, %v478, 0
        %v658 = vsel %vm507, %v479, 0
        %v661 = vsel %vm507, %v480, 0
        %v664 = vsel %vm507, %v481, 0
        %v667 = vsel %vm507, %v482, 0
        %669 = vmatpush.msra.mxu0 0.0
        %670 = vmatpush.msra.mxu0 0.0
        %671 = vmatpush.msra.mxu0 0.0
        %672 = vmatpush.msra.mxu0 0.0
        %673 = vmatpush.msra.mxu0 0.0
        %674 = vmatpush.msra.mxu0 0.0
        %675 = vmatpush.msra.mxu0 0.0
        %676 = vmatpush.msra.mxu0 0.0
        %677 = vmatpush.msra.mxu0 0.0
        %678 = vmatpush.msra.mxu0 0.0
        %679 = vmatpush.msra.mxu0 0.0
        %680 = vmatpush.msra.mxu0 0.0
        %681 = vmatpush.msra.mxu0 %v502
        %682 = vmatpush.msra.mxu0 %v501
        %683 = vmatpush.msra.mxu0 %v500
        %684 = vmatpush.msra.mxu0 %v499
        %685 = vmatmul.f32.gmra.mxu0 %v622
        %v686 = vpop.f32.mrf.mxu0
        %v687 = vadd.f32 %v574, %v686
        %688 = vmatmul.f32.gmra.mxu0 %v625
        %v689 = vpop.f32.mrf.mxu0
        %v690 = vadd.f32 %v577, %v689
        %691 = vmatmul.f32.gmra.mxu0 %v628
        %v692 = vpop.f32.mrf.mxu0
        %v693 = vadd.f32 %v580, %v692
        %694 = vmatmul.f32.gmra.mxu0 %v631
        %v695 = vpop.f32.mrf.mxu0
        %v696 = vadd.f32 %v583, %v695
        %697 = vmatmul.f32.gmra.mxu0 %v634
        %v698 = vpop.f32.mrf.mxu0
        %v699 = vadd.f32 %v586, %v698
        %700 = vmatmul.f32.gmra.mxu0 %v637
        %v701 = vpop.f32.mrf.mxu0
        %v702 = vadd.f32 %v589, %v701
        %703 = vmatmul.f32.gmra.mxu0 %v640
        %v704 = vpop.f32.mrf.mxu0
        %v705 = vadd.f32 %v592, %v704
        %706 = vmatmul.f32.gmra.mxu0 %v643
        %v707 = vpop.f32.mrf.mxu0
        %v708 = vadd.f32 %v595, %v707
        %709 = vmatmul.f32.gmra.mxu0 %v646
        %v710 = vpop.f32.mrf.mxu0
        %v711 = vadd.f32 %v598, %v710
        %712 = vmatmul.f32.gmra.mxu0 %v649
        %v713 = vpop.f32.mrf.mxu0
        %v714 = vadd.f32 %v601, %v713
        %715 = vmatmul.f32.gmra.mxu0 %v652
        %v716 = vpop.f32.mrf.mxu0
        %v717 = vadd.f32 %v604, %v716
        %718 = vmatmul.f32.gmra.mxu0 %v655
        %v719 = vpop.f32.mrf.mxu0
        %v720 = vadd.f32 %v607, %v719
        %721 = vmatmul.f32.gmra.mxu0 %v658
        %v722 = vpop.f32.mrf.mxu0
        %v723 = vadd.f32 %v610, %v722
        %724 = vmatmul.f32.gmra.mxu0 %v661
        %v725 = vpop.f32.mrf.mxu0
        %v726 = vadd.f32 %v613, %v725
        %727 = vmatmul.f32.gmra.mxu0 %v664
        %v728 = vpop.f32.mrf.mxu0
        %v729 = vadd.f32 %v616, %v728
        %730 = vmatmul.f32.gmra.mxu0 %v667
        %v731 = vpop.f32.mrf.mxu0
        %v732 = vadd.f32 %v619, %v731
        %733 = vdwg.mxu0
        %v734 = vld [vmem:[%s5] sm:$0x1]
        %v736 = vperm.slane %v734, 0
        %v738 = vadd.f32 %v687, %v736
        %v739 = vadd.f32 %v690, %v736
        %v740 = vadd.f32 %v693, %v736
        %v741 = vadd.f32 %v696, %v736
        %v742 = vadd.f32 %v699, %v736
        %v743 = vadd.f32 %v702, %v736
        %v744 = vadd.f32 %v705, %v736
        %v745 = vadd.f32 %v708, %v736
        %v746 = vadd.f32 %v711, %v736
        %v747 = vadd.f32 %v714, %v736
        %v748 = vadd.f32 %v717, %v736
        %v749 = vadd.f32 %v720, %v736
        %v750 = vadd.f32 %v723, %v736
        %v751 = vadd.f32 %v726, %v736
        %v752 = vadd.f32 %v729, %v736
        %v753 = vadd.f32 %v732, %v736
        %v754 = vtanh.pop %v738
        %v755 = vtanh.pop %v739
        %v756 = vtanh.pop %v740
        %v757 = vtanh.pop %v741
        %v758 = vtanh.pop %v742
        %v759 = vtanh.pop %v743
        %v760 = vtanh.pop %v744
        %v761 = vtanh.pop %v745
        %v762 = vtanh.pop %v746
        %v763 = vtanh.pop %v747
        %v764 = vtanh.pop %v748
        %v765 = vtanh.pop %v749
        %v766 = vtanh.pop %v750
        %v767 = vtanh.pop %v751
        %v768 = vtanh.pop %v752
        %v769 = vtanh.pop %v753
        %v770 = vld [vmem:[%s6] sm:$0xff]
        %v771 = vld [vmem:[%s6 + $0x8] sm:$0xff]
        %v772 = vld [vmem:[%s6 + $0x10] sm:$0xff]
        %v773 = vld [vmem:[%s6 + $0x18] sm:$0xff]
        %v774 = vld [vmem:[%s6 + $0x20] sm:$0xff]
        %v775 = vld [vmem:[%s6 + $0x28] sm:$0xff]
        %v776 = vld [vmem:[%s6 + $0x30] sm:$0xff]
        %v777 = vld [vmem:[%s6 + $0x38] sm:$0xff]
        %v778 = vld [vmem:[%s7] sm:$0x1]
        %v780 = vperm.slane %v778, 0
        %vm782 = vcmask 523264
        %v784 = vsel %vm782, %v754, 0
        %v787 = vsel %vm782, %v755, 0
        %v790 = vsel %vm782, %v756, 0
        %v793 = vsel %vm782, %v757, 0
        %v796 = vsel %vm782, %v758, 0
        %v799 = vsel %vm782, %v759, 0
        %v802 = vsel %vm782, %v760, 0
        %v805 = vsel %vm782, %v761, 0
        %v808 = vsel %vm782, %v762, 0
        %v811 = vsel %vm782, %v763, 0
        %v814 = vsel %vm782, %v764, 0
        %v817 = vsel %vm782, %v765, 0
        %v820 = vsel %vm782, %v766, 0
        %v823 = vsel %vm782, %v767, 0
        %v826 = vsel %vm782, %v768, 0
        %v829 = vsel %vm782, %v769, 0
        %831 = vmatpush.msra.mxu0 0.0
        %832 = vmatpush.msra.mxu0 0.0
        %833 = vmatpush.msra.mxu0 0.0
        %834 = vmatpush.msra.mxu0 0.0
        %835 = vmatpush.msra.mxu0 0.0
        %836 = vmatpush.msra.mxu0 0.0
        %837 = vmatpush.msra.mxu0 0.0
        %838 = vmatpush.msra.mxu0 0.0
        %839 = vmatpush.msra.mxu0 %v777
        %840 = vmatpush.msra.mxu0 %v776
        %841 = vmatpush.msra.mxu0 %v775
        %842 = vmatpush.msra.mxu0 %v774
        %843 = vmatpush.msra.mxu0 %v773
        %844 = vmatpush.msra.mxu0 %v772
        %845 = vmatpush.msra.mxu0 %v771
        %846 = vmatpush.msra.mxu0 %v770
        %847 = vmatmul.f32.gmra.mxu0 %v784
        %v848 = vpop.f32.mrf.mxu0
        %v849 = vadd.f32 %v780, %v848
        %850 = vmatmul.f32.gmra.mxu0 %v787
        %v851 = vpop.f32.mrf.mxu0
        %v852 = vadd.f32 %v780, %v851
        %853 = vmatmul.f32.gmra.mxu0 %v790
        %v854 = vpop.f32.mrf.mxu0
        %v855 = vadd.f32 %v780, %v854
        %856 = vmatmul.f32.gmra.mxu0 %v793
        %v857 = vpop.f32.mrf.mxu0
        %v858 = vadd.f32 %v780, %v857
        %859 = vmatmul.f32.gmra.mxu0 %v796
        %v860 = vpop.f32.mrf.mxu0
        %v861 = vadd.f32 %v780, %v860
        %862 = vmatmul.f32.gmra.mxu0 %v799
        %v863 = vpop.f32.mrf.mxu0
        %v864 = vadd.f32 %v780, %v863
        %865 = vmatmul.f32.gmra.mxu0 %v802
        %v866 = vpop.f32.mrf.mxu0
        %v867 = vadd.f32 %v780, %v866
        %868 = vmatmul.f32.gmra.mxu0 %v805
        %v869 = vpop.f32.mrf.mxu0
        %v870 = vadd.f32 %v780, %v869
        %871 = vmatmul.f32.gmra.mxu0 %v808
        %v872 = vpop.f32.mrf.mxu0
        %v873 = vadd.f32 %v780, %v872
        %874 = vmatmul.f32.gmra.mxu0 %v811
        %v875 = vpop.f32.mrf.mxu0
        %v876 = vadd.f32 %v780, %v875
        %877 = vmatmul.f32.gmra.mxu0 %v814
        %v878 = vpop.f32.mrf.mxu0
        %v879 = vadd.f32 %v780, %v878
        %880 = vmatmul.f32.gmra.mxu0 %v817
        %v881 = vpop.f32.mrf.mxu0
        %v882 = vadd.f32 %v780, %v881
        %883 = vmatmul.f32.gmra.mxu0 %v820
        %v884 = vpop.f32.mrf.mxu0
        %v885 = vadd.f32 %v780, %v884
        %886 = vmatmul.f32.gmra.mxu0 %v823
        %v887 = vpop.f32.mrf.mxu0
        %v888 = vadd.f32 %v780, %v887
        %889 = vmatmul.f32.gmra.mxu0 %v826
        %v890 = vpop.f32.mrf.mxu0
        %v891 = vadd.f32 %v780, %v890
        %892 = vmatmul.f32.gmra.mxu0 %v829
        %v893 = vpop.f32.mrf.mxu0
        %v894 = vadd.f32 %v780, %v893
        %895 = vdwg.mxu0
        %v896 = vld [vmem:[%s3] sm:$0xff]
        %v897 = vld [vmem:[%s3 + $0x8] sm:$0xff]
        %v898 = vld [vmem:[%s3 + $0x10] sm:$0xff]
        %v899 = vld [vmem:[%s3 + $0x18] sm:$0xff]
        %900 = vmatpush.msra.mxu0 0.0
        %901 = vmatpush.msra.mxu0 0.0
        %902 = vmatpush.msra.mxu0 0.0
        %903 = vmatpush.msra.mxu0 0.0
        %904 = vmatpush.msra.mxu0 0.0
        %905 = vmatpush.msra.mxu0 0.0
        %906 = vmatpush.msra.mxu0 0.0
        %907 = vmatpush.msra.mxu0 0.0
        %908 = vmatpush.msra.mxu0 0.0
        %909 = vmatpush.msra.mxu0 0.0
        %910 = vmatpush.msra.mxu0 0.0
        %911 = vmatpush.msra.mxu0 0.0
        %912 = vmatpush.msra.mxu0 %v899
        %913 = vmatpush.msra.mxu0 %v898
        %914 = vmatpush.msra.mxu0 %v897
        %915 = vmatpush.msra.mxu0 %v896
        %916 = vmatmul.f32.gmra.mxu0 %v622
        %v917 = vpop.f32.mrf.mxu0
        %v918 = vadd.f32 0.0, %v917
        %919 = vmatmul.f32.gmra.mxu0 %v625
        %v920 = vpop.f32.mrf.mxu0
        %v921 = vadd.f32 0.0, %v920
        %922 = vmatmul.f32.gmra.mxu0 %v628
        %v923 = vpop.f32.mrf.mxu0
        %v924 = vadd.f32 0.0, %v923
        %925 = vmatmul.f32.gmra.mxu0 %v631
        %v926 = vpop.f32.mrf.mxu0
        %v927 = vadd.f32 0.0, %v926
        %928 = vmatmul.f32.gmra.mxu0 %v634
        %v929 = vpop.f32.mrf.mxu0
        %v930 = vadd.f32 0.0, %v929
        %931 = vmatmul.f32.gmra.mxu0 %v637
        %v932 = vpop.f32.mrf.mxu0
        %v933 = vadd.f32 0.0, %v932
        %934 = vmatmul.f32.gmra.mxu0 %v640
        %v935 = vpop.f32.mrf.mxu0
        %v936 = vadd.f32 0.0, %v935
        %937 = vmatmul.f32.gmra.mxu0 %v643
        %v938 = vpop.f32.mrf.mxu0
        %v939 = vadd.f32 0.0, %v938
        %940 = vmatmul.f32.gmra.mxu0 %v646
        %v941 = vpop.f32.mrf.mxu0
        %v942 = vadd.f32 0.0, %v941
        %943 = vmatmul.f32.gmra.mxu0 %v649
        %v944 = vpop.f32.mrf.mxu0
        %v945 = vadd.f32 0.0, %v944
        %946 = vmatmul.f32.gmra.mxu0 %v652
        %v947 = vpop.f32.mrf.mxu0
        %v948 = vadd.f32 0.0, %v947
        %949 = vmatmul.f32.gmra.mxu0 %v655
        %v950 = vpop.f32.mrf.mxu0
        %v951 = vadd.f32 0.0, %v950
        %952 = vmatmul.f32.gmra.mxu0 %v658
        %v953 = vpop.f32.mrf.mxu0
        %v954 = vadd.f32 0.0, %v953
        %955 = vmatmul.f32.gmra.mxu0 %v661
        %v956 = vpop.f32.mrf.mxu0
        %v957 = vadd.f32 0.0, %v956
        %958 = vmatmul.f32.gmra.mxu0 %v664
        %v959 = vpop.f32.mrf.mxu0
        %v960 = vadd.f32 0.0, %v959
        %961 = vmatmul.f32.gmra.mxu0 %v667
        %v962 = vpop.f32.mrf.mxu0
        %v963 = vadd.f32 0.0, %v962
        %964 = vdwg.mxu0
        %965 = vmatpush.msra.mxu0 0.0
        %966 = vmatpush.msra.mxu0 0.0
        %967 = vmatpush.msra.mxu0 0.0
        %968 = vmatpush.msra.mxu0 0.0
        %969 = vmatpush.msra.mxu0 0.0
        %970 = vmatpush.msra.mxu0 0.0
        %971 = vmatpush.msra.mxu0 0.0
        %972 = vmatpush.msra.mxu0 0.0
        %973 = vmatpush.msra.mxu0 0.0
        %974 = vmatpush.msra.mxu0 0.0
        %975 = vmatpush.msra.mxu0 0.0
        %976 = vmatpush.msra.mxu0 0.0
        %977 = vmatpush.msra.mxu0 %v899
        %978 = vmatpush.msra.mxu0 %v898
        %979 = vmatpush.msra.mxu0 %v897
        %980 = vmatpush.msra.mxu0 %v896
        %981 = vmatmul.f32.gmra.mxu0 %v509
        %v982 = vpop.f32.mrf.mxu0
        %v983 = vadd.f32 0.0, %v982
        %984 = vmatmul.f32.gmra.mxu0 %v512
        %v985 = vpop.f32.mrf.mxu0
        %v986 = vadd.f32 0.0, %v985
        %987 = vmatmul.f32.gmra.mxu0 %v515
        %v988 = vpop.f32.mrf.mxu0
        %v989 = vadd.f32 0.0, %v988
        %990 = vmatmul.f32.gmra.mxu0 %v518
        %v991 = vpop.f32.mrf.mxu0
        %v992 = vadd.f32 0.0, %v991
        %993 = vmatmul.f32.gmra.mxu0 %v521
        %v994 = vpop.f32.mrf.mxu0
        %v995 = vadd.f32 0.0, %v994
        %996 = vmatmul.f32.gmra.mxu0 %v524
        %v997 = vpop.f32.mrf.mxu0
        %v998 = vadd.f32 0.0, %v997
        %999 = vmatmul.f32.gmra.mxu0 %v527
        %v1000 = vpop.f32.mrf.mxu0
        %v1001 = vadd.f32 0.0, %v1000
        %1002 = vmatmul.f32.gmra.mxu0 %v530
        %v1003 = vpop.f32.mrf.mxu0
        %v1004 = vadd.f32 0.0, %v1003
        %1005 = vmatmul.f32.gmra.mxu0 %v533
        %v1006 = vpop.f32.mrf.mxu0
        %v1007 = vadd.f32 0.0, %v1006
        %1008 = vmatmul.f32.gmra.mxu0 %v536
        %v1009 = vpop.f32.mrf.mxu0
        %v1010 = vadd.f32 0.0, %v1009
        %1011 = vmatmul.f32.gmra.mxu0 %v539
        %v1012 = vpop.f32.mrf.mxu0
        %v1013 = vadd.f32 0.0, %v1012
        %1014 = vmatmul.f32.gmra.mxu0 %v542
        %v1015 = vpop.f32.mrf.mxu0
        %v1016 = vadd.f32 0.0, %v1015
        %1017 = vmatmul.f32.gmra.mxu0 %v545
        %v1018 = vpop.f32.mrf.mxu0
        %v1019 = vadd.f32 0.0, %v1018
        %1020 = vmatmul.f32.gmra.mxu0 %v548
        %v1021 = vpop.f32.mrf.mxu0
        %v1022 = vadd.f32 0.0, %v1021
        %1023 = vmatmul.f32.gmra.mxu0 %v551
        %v1024 = vpop.f32.mrf.mxu0
        %v1025 = vadd.f32 0.0, %v1024
        %1026 = vmatmul.f32.gmra.mxu0 %v554
        %v1027 = vpop.f32.mrf.mxu0
        %v1028 = vadd.f32 0.0, %v1027
        %1029 = vdwg.mxu0
        %vm1030 = vcmask 64512
        %v1031 = vsel %vm1030, %v849, -inf
        %v1032 = vsel %vm1030, %v852, -inf
        %v1033 = vmax.f32 %v1031, %v1032
        %v1034 = vrot.slane %v1033, 4
        %v1035 = vmax.f32 %v1033, %v1034
        %v1036 = vrot.slane %v1035, 2
        %v1037 = vmax.f32 %v1035, %v1036
        %v1038 = vrot.slane %v1037, 1
        %v1039 = vmax.f32 %v1037, %v1038
        %v1040 = vsel %vm1030, %v855, -inf
        %v1041 = vsel %vm1030, %v858, -inf
        %v1042 = vmax.f32 %v1040, %v1041
        %v1043 = vrot.slane %v1042, 4
        %v1044 = vmax.f32 %v1042, %v1043
        %v1045 = vrot.slane %v1044, 2
        %v1046 = vmax.f32 %v1044, %v1045
        %v1047 = vrot.slane %v1046, 1
        %v1048 = vmax.f32 %v1046, %v1047
        %v1049 = vsel %vm1030, %v861, -inf
        %v1050 = vsel %vm1030, %v864, -inf
        %v1051 = vmax.f32 %v1049, %v1050
        %v1052 = vrot.slane %v1051, 4
        %v1053 = vmax.f32 %v1051, %v1052
        %v1054 = vrot.slane %v1053, 2
        %v1055 = vmax.f32 %v1053, %v1054
        %v1056 = vrot.slane %v1055, 1
        %v1057 = vmax.f32 %v1055, %v1056
        %v1058 = vsel %vm1030, %v867, -inf
        %v1059 = vsel %vm1030, %v870, -inf
        %v1060 = vmax.f32 %v1058, %v1059
        %v1061 = vrot.slane %v1060, 4
        %v1062 = vmax.f32 %v1060, %v1061
        %v1063 = vrot.slane %v1062, 2
        %v1064 = vmax.f32 %v1062, %v1063
        %v1065 = vrot.slane %v1064, 1
        %v1066 = vmax.f32 %v1064, %v1065
        %v1067 = vsel %vm1030, %v873, -inf
        %v1068 = vsel %vm1030, %v876, -inf
        %v1069 = vmax.f32 %v1067, %v1068
        %v1070 = vrot.slane %v1069, 4
        %v1071 = vmax.f32 %v1069, %v1070
        %v1072 = vrot.slane %v1071, 2
        %v1073 = vmax.f32 %v1071, %v1072
        %v1074 = vrot.slane %v1073, 1
        %v1075 = vmax.f32 %v1073, %v1074
        %v1076 = vsel %vm1030, %v879, -inf
        %v1077 = vsel %vm1030, %v882, -inf
        %v1078 = vmax.f32 %v1076, %v1077
        %v1079 = vrot.slane %v1078, 4
        %v1080 = vmax.f32 %v1078, %v1079
        %v1081 = vrot.slane %v1080, 2
        %v1082 = vmax.f32 %v1080, %v1081
        %v1083 = vrot.slane %v1082, 1
        %v1084 = vmax.f32 %v1082, %v1083
        %v1085 = vsel %vm1030, %v885, -inf
        %v1086 = vsel %vm1030, %v888, -inf
        %v1087 = vmax.f32 %v1085, %v1086
        %v1088 = vrot.slane %v1087, 4
        %v1089 = vmax.f32 %v1087, %v1088
        %v1090 = vrot.slane %v1089, 2
        %v1091 = vmax.f32 %v1089, %v1090
        %v1092 = vrot.slane %v1091, 1
        %v1093 = vmax.f32 %v1091, %v1092
        %v1094 = vsel %vm1030, %v891, -inf
        %v1095 = vsel %vm1030, %v894, -inf
        %v1096 = vmax.f32 %v1094, %v1095
        %v1097 = vrot.slane %v1096, 4
        %v1098 = vmax.f32 %v1096, %v1097
        %v1099 = vrot.slane %v1098, 2
        %v1100 = vmax.f32 %v1098, %v1099
        %v1101 = vrot.slane %v1100, 1
        %v1102 = vmax.f32 %v1100, %v1101
        %v1103 = vsub.f32 %v849, %v1039
        %v1104 = vsub.f32 %v852, %v1039
        %v1105 = vsub.f32 %v855, %v1048
        %v1106 = vsub.f32 %v858, %v1048
        %v1107 = vsub.f32 %v861, %v1057
        %v1108 = vsub.f32 %v864, %v1057
        %v1109 = vsub.f32 %v867, %v1066
        %v1110 = vsub.f32 %v870, %v1066
        %v1111 = vsub.f32 %v873, %v1075
        %v1112 = vsub.f32 %v876, %v1075
        %v1113 = vsub.f32 %v879, %v1084
        %v1114 = vsub.f32 %v882, %v1084
        %v1115 = vsub.f32 %v885, %v1093
        %v1116 = vsub.f32 %v888, %v1093
        %v1117 = vsub.f32 %v891, %v1102
        %v1118 = vsub.f32 %v894, %v1102
        %v1119 = vmul.f32 %v1103, 1.442695
        %v1120 = vpow.pop %v1119
        %v1121 = vmul.f32 %v1104, 1.442695
        %v1122 = vpow.pop %v1121
        %v1123 = vmul.f32 %v1105, 1.442695
        %v1124 = vpow.pop %v1123
        %v1125 = vmul.f32 %v1106, 1.442695
        %v1126 = vpow.pop %v1125
        %v1127 = vmul.f32 %v1107, 1.442695
        %v1128 = vpow.pop %v1127
        %v1129 = vmul.f32 %v1108, 1.442695
        %v1130 = vpow.pop %v1129
        %v1131 = vmul.f32 %v1109, 1.442695
        %v1132 = vpow.pop %v1131
        %v1133 = vmul.f32 %v1110, 1.442695
        %v1134 = vpow.pop %v1133
        %v1135 = vmul.f32 %v1111, 1.442695
        %v1136 = vpow.pop %v1135
        %v1137 = vmul.f32 %v1112, 1.442695
        %v1138 = vpow.pop %v1137
        %v1139 = vmul.f32 %v1113, 1.442695
        %v1140 = vpow.pop %v1139
        %v1141 = vmul.f32 %v1114, 1.442695
        %v1142 = vpow.pop %v1141
        %v1143 = vmul.f32 %v1115, 1.442695
        %v1144 = vpow.pop %v1143
        %v1145 = vmul.f32 %v1116, 1.442695
        %v1146 = vpow.pop %v1145
        %v1147 = vmul.f32 %v1117, 1.442695
        %v1148 = vpow.pop %v1147
        %v1149 = vmul.f32 %v1118, 1.442695
        %v1150 = vpow.pop %v1149
        %v1151 = vsel %vm1030, %v1120, 0.0
        %v1152 = vsel %vm1030, %v1122, 0.0
        %v1153 = vadd.f32 %v1151, %v1152
        %v1154 = vrot.slane %v1153, 4
        %v1155 = vadd.f32 %v1153, %v1154
        %v1156 = vrot.slane %v1155, 2
        %v1157 = vadd.f32 %v1155, %v1156
        %v1158 = vrot.slane %v1157, 1
        %v1159 = vadd.f32 %v1157, %v1158
        %v1160 = vsel %vm1030, %v1124, 0.0
        %v1161 = vsel %vm1030, %v1126, 0.0
        %v1162 = vadd.f32 %v1160, %v1161
        %v1163 = vrot.slane %v1162, 4
        %v1164 = vadd.f32 %v1162, %v1163
        %v1165 = vrot.slane %v1164, 2
        %v1166 = vadd.f32 %v1164, %v1165
        %v1167 = vrot.slane %v1166, 1
        %v1168 = vadd.f32 %v1166, %v1167
        %v1169 = vsel %vm1030, %v1128, 0.0
        %v1170 = vsel %vm1030, %v1130, 0.0
        %v1171 = vadd.f32 %v1169, %v1170
        %v1172 = vrot.slane %v1171, 4
        %v1173 = vadd.f32 %v1171, %v1172
        %v1174 = vrot.slane %v1173, 2
        %v1175 = vadd.f32 %v1173, %v1174
        %v1176 = vrot.slane %v1175, 1
        %v1177 = vadd.f32 %v1175, %v1176
        %v1178 = vsel %vm1030, %v1132, 0.0
        %v1179 = vsel %vm1030, %v1134, 0.0
        %v1180 = vadd.f32 %v1178, %v1179
        %v1181 = vrot.slane %v1180, 4
        %v1182 = vadd.f32 %v1180, %v1181
        %v1183 = vrot.slane %v1182, 2
        %v1184 = vadd.f32 %v1182, %v1183
        %v1185 = vrot.slane %v1184, 1
        %v1186 = vadd.f32 %v1184, %v1185
        %v1187 = vsel %vm1030, %v1136, 0.0
        %v1188 = vsel %vm1030, %v1138, 0.0
        %v1189 = vadd.f32 %v1187, %v1188
        %v1190 = vrot.slane %v1189, 4
        %v1191 = vadd.f32 %v1189, %v1190
        %v1192 = vrot.slane %v1191, 2
        %v1193 = vadd.f32 %v1191, %v1192
        %v1194 = vrot.slane %v1193, 1
        %v1195 = vadd.f32 %v1193, %v1194
        %v1196 = vsel %vm1030, %v1140, 0.0
        %v1197 = vsel %vm1030, %v1142, 0.0
        %v1198 = vadd.f32 %v1196, %v1197
        %v1199 = vrot.slane %v1198, 4
        %v1200 = vadd.f32 %v1198, %v1199
        %v1201 = vrot.slane %v1200, 2
        %v1202 = vadd.f32 %v1200, %v1201
        %v1203 = vrot.slane %v1202, 1
        %v1204 = vadd.f32 %v1202, %v1203
        %v1205 = vsel %vm1030, %v1144, 0.0
        %v1206 = vsel %vm1030, %v1146, 0.0
        %v1207 = vadd.f32 %v1205, %v1206
        %v1208 = vrot.slane %v1207, 4
        %v1209 = vadd.f32 %v1207, %v1208
        %v1210 = vrot.slane %v1209, 2
        %v1211 = vadd.f32 %v1209, %v1210
        %v1212 = vrot.slane %v1211, 1
        %v1213 = vadd.f32 %v1211, %v1212
        %v1214 = vsel %vm1030, %v1148, 0.0
        %v1215 = vsel %vm1030, %v1150, 0.0
        %v1216 = vadd.f32 %v1214, %v1215
        %v1217 = vrot.slane %v1216, 4
        %v1218 = vadd.f32 %v1216, %v1217
        %v1219 = vrot.slane %v1218, 2
        %v1220 = vadd.f32 %v1218, %v1219
        %v1221 = vrot.slane %v1220, 1
        %v1222 = vadd.f32 %v1220, %v1221
        %v1223 = vrcp.pop %v1159
        %v1224 = vmul.f32 %v1159, %v1223
        %v1225 = vsub.f32 1.0, %v1224
        %v1226 = vmul.f32 %v1223, %v1225
        %v1227 = vadd.f32 %v1223, %v1226
        %vm1228 = vweird.f32 %v1159
        %vm1229 = vweird.f32 %v1223
        %vm1230 = vmor %vm1228, %vm1229
        %v1231 = vsel %vm1230, %v1223, %v1227
        %v1232 = vand.u32 2147483647, %v1159
        %vm1233 = vcmp.eq.f32.partialorder %v1232, 8.507059e+37
        %v1234 = vand.u32 %v1159, 2147483648
        %v1235 = vor.u32 1.1754944e-38, %v1234
        %v1236 = vsel %vm1233, %v1235, %v1231
        %v1237 = vmul.f32 1.0, %v1236
        %v1238 = vrcp.pop %v1168
        %v1239 = vmul.f32 %v1168, %v1238
        %v1240 = vsub.f32 1.0, %v1239
        %v1241 = vmul.f32 %v1238, %v1240
        %v1242 = vadd.f32 %v1238, %v1241
        %vm1243 = vweird.f32 %v1168
        %vm1244 = vweird.f32 %v1238
        %vm1245 = vmor %vm1243, %vm1244
        %v1246 = vsel %vm1245, %v1238, %v1242
        %v1247 = vand.u32 2147483647, %v1168
        %vm1248 = vcmp.eq.f32.partialorder %v1247, 8.507059e+37
        %v1249 = vand.u32 %v1168, 2147483648
        %v1250 = vor.u32 1.1754944e-38, %v1249
        %v1251 = vsel %vm1248, %v1250, %v1246
        %v1252 = vmul.f32 1.0, %v1251
        %v1253 = vrcp.pop %v1177
        %v1254 = vmul.f32 %v1177, %v1253
        %v1255 = vsub.f32 1.0, %v1254
        %v1256 = vmul.f32 %v1253, %v1255
        %v1257 = vadd.f32 %v1253, %v1256
        %vm1258 = vweird.f32 %v1177
        %vm1259 = vweird.f32 %v1253
        %vm1260 = vmor %vm1258, %vm1259
        %v1261 = vsel %vm1260, %v1253, %v1257
        %v1262 = vand.u32 2147483647, %v1177
        %vm1263 = vcmp.eq.f32.partialorder %v1262, 8.507059e+37
        %v1264 = vand.u32 %v1177, 2147483648
        %v1265 = vor.u32 1.1754944e-38, %v1264
        %v1266 = vsel %vm1263, %v1265, %v1261
        %v1267 = vmul.f32 1.0, %v1266
        %v1268 = vrcp.pop %v1186
        %v1269 = vmul.f32 %v1186, %v1268
        %v1270 = vsub.f32 1.0, %v1269
        %v1271 = vmul.f32 %v1268, %v1270
        %v1272 = vadd.f32 %v1268, %v1271
        %vm1273 = vweird.f32 %v1186
        %vm1274 = vweird.f32 %v1268
        %vm1275 = vmor %vm1273, %vm1274
        %v1276 = vsel %vm1275, %v1268, %v1272
        %v1277 = vand.u32 2147483647, %v1186
        %vm1278 = vcmp.eq.f32.partialorder %v1277, 8.507059e+37
        %v1279 = vand.u32 %v1186, 2147483648
        %v1280 = vor.u32 1.1754944e-38, %v1279
        %v1281 = vsel %vm1278, %v1280, %v1276
        %v1282 = vmul.f32 1.0, %v1281
        %v1283 = vrcp.pop %v1195
        %v1284 = vmul.f32 %v1195, %v1283
        %v1285 = vsub.f32 1.0, %v1284
        %v1286 = vmul.f32 %v1283, %v1285
        %v1287 = vadd.f32 %v1283, %v1286
        %vm1288 = vweird.f32 %v1195
        %vm1289 = vweird.f32 %v1283
        %vm1290 = vmor %vm1288, %vm1289
        %v1291 = vsel %vm1290, %v1283, %v1287
        %v1292 = vand.u32 2147483647, %v1195
        %vm1293 = vcmp.eq.f32.partialorder %v1292, 8.507059e+37
        %v1294 = vand.u32 %v1195, 2147483648
        %v1295 = vor.u32 1.1754944e-38, %v1294
        %v1296 = vsel %vm1293, %v1295, %v1291
        %v1297 = vmul.f32 1.0, %v1296
        %v1298 = vrcp.pop %v1204
        %v1299 = vmul.f32 %v1204, %v1298
        %v1300 = vsub.f32 1.0, %v1299
        %v1301 = vmul.f32 %v1298, %v1300
        %v1302 = vadd.f32 %v1298, %v1301
        %vm1303 = vweird.f32 %v1204
        %vm1304 = vweird.f32 %v1298
        %vm1305 = vmor %vm1303, %vm1304
        %v1306 = vsel %vm1305, %v1298, %v1302
        %v1307 = vand.u32 2147483647, %v1204
        %vm1308 = vcmp.eq.f32.partialorder %v1307, 8.507059e+37
        %v1309 = vand.u32 %v1204, 2147483648
        %v1310 = vor.u32 1.1754944e-38, %v1309
        %v1311 = vsel %vm1308, %v1310, %v1306
        %v1312 = vmul.f32 1.0, %v1311
        %v1313 = vrcp.pop %v1213
        %v1314 = vmul.f32 %v1213, %v1313
        %v1315 = vsub.f32 1.0, %v1314
        %v1316 = vmul.f32 %v1313, %v1315
        %v1317 = vadd.f32 %v1313, %v1316
        %vm1318 = vweird.f32 %v1213
        %vm1319 = vweird.f32 %v1313
        %vm1320 = vmor %vm1318, %vm1319
        %v1321 = vsel %vm1320, %v1313, %v1317
        %v1322 = vand.u32 2147483647, %v1213
        %vm1323 = vcmp.eq.f32.partialorder %v1322, 8.507059e+37
        %v1324 = vand.u32 %v1213, 2147483648
        %v1325 = vor.u32 1.1754944e-38, %v1324
        %v1326 = vsel %vm1323, %v1325, %v1321
        %v1327 = vmul.f32 1.0, %v1326
        %v1328 = vrcp.pop %v1222
        %v1329 = vmul.f32 %v1222, %v1328
        %v1330 = vsub.f32 1.0, %v1329
        %v1331 = vmul.f32 %v1328, %v1330
        %v1332 = vadd.f32 %v1328, %v1331
        %vm1333 = vweird.f32 %v1222
        %vm1334 = vweird.f32 %v1328
        %vm1335 = vmor %vm1333, %vm1334
        %v1336 = vsel %vm1335, %v1328, %v1332
        %v1337 = vand.u32 2147483647, %v1222
        %vm1338 = vcmp.eq.f32.partialorder %v1337, 8.507059e+37
        %v1339 = vand.u32 %v1222, 2147483648
        %v1340 = vor.u32 1.1754944e-38, %v1339
        %v1341 = vsel %vm1338, %v1340, %v1336
        %v1342 = vmul.f32 1.0, %v1341
        %v1343 = vmul.f32 %v1120, %v1237
        %v1344 = vmul.f32 %v1122, %v1237
        %v1345 = vmul.f32 %v1124, %v1252
        %v1346 = vmul.f32 %v1126, %v1252
        %v1347 = vmul.f32 %v1128, %v1267
        %v1348 = vmul.f32 %v1130, %v1267
        %v1349 = vmul.f32 %v1132, %v1282
        %v1350 = vmul.f32 %v1134, %v1282
        %v1351 = vmul.f32 %v1136, %v1297
        %v1352 = vmul.f32 %v1138, %v1297
        %v1353 = vmul.f32 %v1140, %v1312
        %v1354 = vmul.f32 %v1142, %v1312
        %v1355 = vmul.f32 %v1144, %v1327
        %v1356 = vmul.f32 %v1146, %v1327
        %v1357 = vmul.f32 %v1148, %v1342
        %v1358 = vmul.f32 %v1150, %v1342
        %1375 = vrot.lane.b32.xlu0 %v918, 8
        %v1376 = vpop.permute.xlu0 %1375
        %1377 = vrot.lane.b32.xlu0 %v921, 8
        %v1378 = vpop.permute.xlu0 %1377
        %1379 = vrot.lane.b32.xlu0 %v924, 8
        %v1380 = vpop.permute.xlu0 %1379
        %1381 = vrot.lane.b32.xlu0 %v927, 8
        %v1382 = vpop.permute.xlu0 %1381
        %1383 = vrot.lane.b32.xlu0 %v930, 8
        %v1384 = vpop.permute.xlu0 %1383
        %1385 = vrot.lane.b32.xlu0 %v933, 8
        %v1386 = vpop.permute.xlu0 %1385
        %1387 = vrot.lane.b32.xlu0 %v936, 8
        %v1388 = vpop.permute.xlu0 %1387
        %1389 = vrot.lane.b32.xlu0 %v939, 8
        %v1390 = vpop.permute.xlu0 %1389
        %1391 = vrot.lane.b32.xlu0 %v942, 8
        %v1392 = vpop.permute.xlu0 %1391
        %1393 = vrot.lane.b32.xlu0 %v945, 8
        %v1394 = vpop.permute.xlu0 %1393
        %1395 = vrot.lane.b32.xlu0 %v948, 8
        %v1396 = vpop.permute.xlu0 %1395
        %1397 = vrot.lane.b32.xlu0 %v951, 8
        %v1398 = vpop.permute.xlu0 %1397
        %1399 = vrot.lane.b32.xlu0 %v954, 8
        %v1400 = vpop.permute.xlu0 %1399
        %1401 = vrot.lane.b32.xlu0 %v957, 8
        %v1402 = vpop.permute.xlu0 %1401
        %1403 = vrot.lane.b32.xlu0 %v960, 8
        %v1404 = vpop.permute.xlu0 %1403
        %1405 = vrot.lane.b32.xlu0 %v963, 8
        %v1406 = vpop.permute.xlu0 %1405
        %v1423 = vsel %vm1030, %v1343, %v1376
        %v1424 = vsel %vm1030, %v1344, %v1378
        %v1425 = vsel %vm1030, %v1345, %v1380
        %v1426 = vsel %vm1030, %v1346, %v1382
        %v1427 = vsel %vm1030, %v1347, %v1384
        %v1428 = vsel %vm1030, %v1348, %v1386
        %v1429 = vsel %vm1030, %v1349, %v1388
        %v1430 = vsel %vm1030, %v1350, %v1390
        %v1431 = vsel %vm1030, %v1351, %v1392
        %v1432 = vsel %vm1030, %v1352, %v1394
        %v1433 = vsel %vm1030, %v1353, %v1396
        %v1434 = vsel %vm1030, %v1354, %v1398
        %v1435 = vsel %vm1030, %v1355, %v1400
        %v1436 = vsel %vm1030, %v1356, %v1402
        %v1437 = vsel %vm1030, %v1357, %v1404
        %v1438 = vsel %vm1030, %v1358, %v1406
        %1455 = vrot.lane.b32.xlu0 %v983, 8
        %v1456 = vpop.permute.xlu0 %1455
        %1457 = vrot.lane.b32.xlu0 %v986, 8
        %v1458 = vpop.permute.xlu0 %1457
        %1459 = vrot.lane.b32.xlu0 %v989, 8
        %v1460 = vpop.permute.xlu0 %1459
        %1461 = vrot.lane.b32.xlu0 %v992, 8
        %v1462 = vpop.permute.xlu0 %1461
        %1463 = vrot.lane.b32.xlu0 %v995, 8
        %v1464 = vpop.permute.xlu0 %1463
        %1465 = vrot.lane.b32.xlu0 %v998, 8
        %v1466 = vpop.permute.xlu0 %1465
        %1467 = vrot.lane.b32.xlu0 %v1001, 8
        %v1468 = vpop.permute.xlu0 %1467
        %1469 = vrot.lane.b32.xlu0 %v1004, 8
        %v1470 = vpop.permute.xlu0 %1469
        %1471 = vrot.lane.b32.xlu0 %v1007, 8
        %v1472 = vpop.permute.xlu0 %1471
        %1473 = vrot.lane.b32.xlu0 %v1010, 8
        %v1474 = vpop.permute.xlu0 %1473
        %1475 = vrot.lane.b32.xlu0 %v1013, 8
        %v1476 = vpop.permute.xlu0 %1475
        %1477 = vrot.lane.b32.xlu0 %v1016, 8
        %v1478 = vpop.permute.xlu0 %1477
        %1479 = vrot.lane.b32.xlu0 %v1019, 8
        %v1480 = vpop.permute.xlu0 %1479
        %1481 = vrot.lane.b32.xlu0 %v1022, 8
        %v1482 = vpop.permute.xlu0 %1481
        %1483 = vrot.lane.b32.xlu0 %v1025, 8
        %v1484 = vpop.permute.xlu0 %1483
        %1485 = vrot.lane.b32.xlu0 %v1028, 8
        %v1486 = vpop.permute.xlu0 %1485
        %v1503 = vsel %vm1030, %v1343, %v1456
        %v1504 = vsel %vm1030, %v1344, %v1458
        %v1505 = vsel %vm1030, %v1345, %v1460
        %v1506 = vsel %vm1030, %v1346, %v1462
        %v1507 = vsel %vm1030, %v1347, %v1464
        %v1508 = vsel %vm1030, %v1348, %v1466
        %v1509 = vsel %vm1030, %v1349, %v1468
        %v1510 = vsel %vm1030, %v1350, %v1470
        %v1511 = vsel %vm1030, %v1351, %v1472
        %v1512 = vsel %vm1030, %v1352, %v1474
        %v1513 = vsel %vm1030, %v1353, %v1476
        %v1514 = vsel %vm1030, %v1354, %v1478
        %v1515 = vsel %vm1030, %v1355, %v1480
        %v1516 = vsel %vm1030, %v1356, %v1482
        %v1517 = vsel %vm1030, %v1357, %v1484
        %v1518 = vsel %vm1030, %v1358, %v1486
        %1519 = vxpose.xlu0.b32.start [1/16] %v1423, 128
        %1520 = vxpose.xlu0.b32.cont [2/16] %v1424, 128
        %1521 = vxpose.xlu0.b32.cont [3/16] 0.0, 128
        %1522 = vxpose.xlu0.b32.cont [4/16] 0.0, 128
        %1523 = vxpose.xlu0.b32.cont [5/16] 0.0, 128
        %1524 = vxpose.xlu0.b32.cont [6/16] 0.0, 128
        %1525 = vxpose.xlu0.b32.cont [7/16] 0.0, 128
        %1526 = vxpose.xlu0.b32.cont [8/16] 0.0, 128
        %1527 = vxpose.xlu0.b32.cont [9/16] 0.0, 128
        %1528 = vxpose.xlu0.b32.cont [10/16] 0.0, 128
        %1529 = vxpose.xlu0.b32.cont [11/16] 0.0, 128
        %1530 = vxpose.xlu0.b32.cont [12/16] 0.0, 128
        %1531 = vxpose.xlu0.b32.cont [13/16] 0.0, 128
        %1532 = vxpose.xlu0.b32.cont [14/16] 0.0, 128
        %1533 = vxpose.xlu0.b32.cont [15/16] 0.0, 128
        %1534 = vxpose.xlu0.b32.end [16/16] 0.0, 128
        %v1535 = vpop.trf.xlu0
        %v1536 = vpop.trf.xlu0
        %v1537 = vpop.trf.xlu0
        %v1538 = vpop.trf.xlu0
        %v1539 = vpop.trf.xlu0
        %v1540 = vpop.trf.xlu0
        %v1541 = vpop.trf.xlu0
        %v1542 = vpop.trf.xlu0
        %v1543 = vpop.trf.xlu0
        %v1544 = vpop.trf.xlu0
        %v1545 = vpop.trf.xlu0
        %v1546 = vpop.trf.xlu0
        %v1547 = vpop.trf.xlu0
        %v1548 = vpop.trf.xlu0
        %v1549 = vpop.trf.xlu0
        %v1550 = vpop.trf.xlu0
        %vm1551 = vcmask 130048
        %v1553 = vsel %vm1551, %v1535, 0
        %v1556 = vsel %vm1551, %v1536, 0
        %1558 = vmatpush.msra.mxu0 0.0
        %1559 = vmatpush.msra.mxu0 0.0
        %1560 = vmatpush.msra.mxu0 0.0
        %1561 = vmatpush.msra.mxu0 0.0
        %1562 = vmatpush.msra.mxu0 0.0
        %1563 = vmatpush.msra.mxu0 0.0
        %1564 = vmatpush.msra.mxu0 0.0
        %1565 = vmatpush.msra.mxu0 0.0
        %1566 = vmatpush.msra.mxu0 0.0
        %1567 = vmatpush.msra.mxu0 0.0
        %1568 = vmatpush.msra.mxu0 0.0
        %1569 = vmatpush.msra.mxu0 0.0
        %1570 = vmatpush.msra.mxu0 0.0
        %1571 = vmatpush.msra.mxu0 0.0
        %1572 = vmatpush.msra.mxu0 %v468
        %1573 = vmatpush.msra.mxu0 %v467
        %1574 = vmatmul.f32.gmra.mxu0 %v1553
        %v1575 = vpop.f32.mrf.mxu0
        %v1576 = vadd.f32 0.0, %v1575
        %1577 = vmatmul.f32.gmra.mxu0 %v1556
        %v1578 = vpop.f32.mrf.mxu0
        %v1579 = vadd.f32 0.0, %v1578
        %1580 = vdwg.mxu0
        %1581 = vxpose.xlu0.b32.start [1/16] %v1425, 128
        %1582 = vxpose.xlu0.b32.cont [2/16] %v1426, 128
        %1583 = vxpose.xlu0.b32.cont [3/16] 0.0, 128
        %1584 = vxpose.xlu0.b32.cont [4/16] 0.0, 128
        %1585 = vxpose.xlu0.b32.cont [5/16] 0.0, 128
        %1586 = vxpose.xlu0.b32.cont [6/16] 0.0, 128
        %1587 = vxpose.xlu0.b32.cont [7/16] 0.0, 128
        %1588 = vxpose.xlu0.b32.cont [8/16] 0.0, 128
        %1589 = vxpose.xlu0.b32.cont [9/16] 0.0, 128
        %1590 = vxpose.xlu0.b32.cont [10/16] 0.0, 128
        %1591 = vxpose.xlu0.b32.cont [11/16] 0.0, 128
        %1592 = vxpose.xlu0.b32.cont [12/16] 0.0, 128
        %1593 = vxpose.xlu0.b32.cont [13/16] 0.0, 128
        %1594 = vxpose.xlu0.b32.cont [14/16] 0.0, 128
        %1595 = vxpose.xlu0.b32.cont [15/16] 0.0, 128
        %1596 = vxpose.xlu0.b32.end [16/16] 0.0, 128
        %v1597 = vpop.trf.xlu0
        %v1598 = vpop.trf.xlu0
        %v1599 = vpop.trf.xlu0
        %v1600 = vpop.trf.xlu0
        %v1601 = vpop.trf.xlu0
        %v1602 = vpop.trf.xlu0
        %v1603 = vpop.trf.xlu0
        %v1604 = vpop.trf.xlu0
        %v1605 = vpop.trf.xlu0
        %v1606 = vpop.trf.xlu0
        %v1607 = vpop.trf.xlu0
        %v1608 = vpop.trf.xlu0
        %v1609 = vpop.trf.xlu0
        %v1610 = vpop.trf.xlu0
        %v1611 = vpop.trf.xlu0
        %v1612 = vpop.trf.xlu0
        %v1614 = vsel %vm1551, %v1597, 0
        %v1617 = vsel %vm1551, %v1598, 0
        %1619 = vmatpush.msra.mxu0 0.0
        %1620 = vmatpush.msra.mxu0 0.0
        %1621 = vmatpush.msra.mxu0 0.0
        %1622 = vmatpush.msra.mxu0 0.0
        %1623 = vmatpush.msra.mxu0 0.0
        %1624 = vmatpush.msra.mxu0 0.0
        %1625 = vmatpush.msra.mxu0 0.0
        %1626 = vmatpush.msra.mxu0 0.0
        %1627 = vmatpush.msra.mxu0 0.0
        %1628 = vmatpush.msra.mxu0 0.0
        %1629 = vmatpush.msra.mxu0 0.0
        %1630 = vmatpush.msra.mxu0 0.0
        %1631 = vmatpush.msra.mxu0 0.0
        %1632 = vmatpush.msra.mxu0 0.0
        %1633 = vmatpush.msra.mxu0 %v470
        %1634 = vmatpush.msra.mxu0 %v469
        %1635 = vmatmul.f32.gmra.mxu0 %v1614
        %v1636 = vpop.f32.mrf.mxu0
        %v1637 = vadd.f32 0.0, %v1636
        %1638 = vmatmul.f32.gmra.mxu0 %v1617
        %v1639 = vpop.f32.mrf.mxu0
        %v1640 = vadd.f32 0.0, %v1639
        %1641 = vdwg.mxu0
        %1642 = vxpose.xlu0.b32.start [1/16] %v1427, 128
        %1643 = vxpose.xlu0.b32.cont [2/16] %v1428, 128
        %1644 = vxpose.xlu0.b32.cont [3/16] 0.0, 128
        %1645 = vxpose.xlu0.b32.cont [4/16] 0.0, 128
        %1646 = vxpose.xlu0.b32.cont [5/16] 0.0, 128
        %1647 = vxpose.xlu0.b32.cont [6/16] 0.0, 128
        %1648 = vxpose.xlu0.b32.cont [7/16] 0.0, 128
        %1649 = vxpose.xlu0.b32.cont [8/16] 0.0, 128
        %1650 = vxpose.xlu0.b32.cont [9/16] 0.0, 128
        %1651 = vxpose.xlu0.b32.cont [10/16] 0.0, 128
        %1652 = vxpose.xlu0.b32.cont [11/16] 0.0, 128
        %1653 = vxpose.xlu0.b32.cont [12/16] 0.0, 128
        %1654 = vxpose.xlu0.b32.cont [13/16] 0.0, 128
        %1655 = vxpose.xlu0.b32.cont [14/16] 0.0, 128
        %1656 = vxpose.xlu0.b32.cont [15/16] 0.0, 128
        %1657 = vxpose.xlu0.b32.end [16/16] 0.0, 128
        %v1658 = vpop.trf.xlu0
        %v1659 = vpop.trf.xlu0
        %v1660 = vpop.trf.xlu0
        %v1661 = vpop.trf.xlu0
        %v1662 = vpop.trf.xlu0
        %v1663 = vpop.trf.xlu0
        %v1664 = vpop.trf.xlu0
        %v1665 = vpop.trf.xlu0
        %v1666 = vpop.trf.xlu0
        %v1667 = vpop.trf.xlu0
        %v1668 = vpop.trf.xlu0
        %v1669 = vpop.trf.xlu0
        %v1670 = vpop.trf.xlu0
        %v1671 = vpop.trf.xlu0
        %v1672 = vpop.trf.xlu0
        %v1673 = vpop.trf.xlu0
        %v1675 = vsel %vm1551, %v1658, 0
        %v1678 = vsel %vm1551, %v1659, 0
        %1680 = vmatpush.msra.mxu0 0.0
        %1681 = vmatpush.msra.mxu0 0.0
        %1682 = vmatpush.msra.mxu0 0.0
        %1683 = vmatpush.msra.mxu0 0.0
        %1684 = vmatpush.msra.mxu0 0.0
        %1685 = vmatpush.msra.mxu0 0.0
        %1686 = vmatpush.msra.mxu0 0.0
        %1687 = vmatpush.msra.mxu0 0.0
        %1688 = vmatpush.msra.mxu0 0.0
        %1689 = vmatpush.msra.mxu0 0.0
        %1690 = vmatpush.msra.mxu0 0.0
        %1691 = vmatpush.msra.mxu0 0.0
        %1692 = vmatpush.msra.mxu0 0.0
        %1693 = vmatpush.msra.mxu0 0.0
        %1694 = vmatpush.msra.mxu0 %v472
        %1695 = vmatpush.msra.mxu0 %v471
        %1696 = vmatmul.f32.gmra.mxu0 %v1675
        %v1697 = vpop.f32.mrf.mxu0
        %v1698 = vadd.f32 0.0, %v1697
        %1699 = vmatmul.f32.gmra.mxu0 %v1678
        %v1700 = vpop.f32.mrf.mxu0
        %v1701 = vadd.f32 0.0, %v1700
        %1702 = vdwg.mxu0
        %1703 = vxpose.xlu0.b32.start [1/16] %v1429, 128
        %1704 = vxpose.xlu0.b32.cont [2/16] %v1430, 128
        %1705 = vxpose.xlu0.b32.cont [3/16] 0.0, 128
        %1706 = vxpose.xlu0.b32.cont [4/16] 0.0, 128
        %1707 = vxpose.xlu0.b32.cont [5/16] 0.0, 128
        %1708 = vxpose.xlu0.b32.cont [6/16] 0.0, 128
        %1709 = vxpose.xlu0.b32.cont [7/16] 0.0, 128
        %1710 = vxpose.xlu0.b32.cont [8/16] 0.0, 128
        %1711 = vxpose.xlu0.b32.cont [9/16] 0.0, 128
        %1712 = vxpose.xlu0.b32.cont [10/16] 0.0, 128
        %1713 = vxpose.xlu0.b32.cont [11/16] 0.0, 128
        %1714 = vxpose.xlu0.b32.cont [12/16] 0.0, 128
        %1715 = vxpose.xlu0.b32.cont [13/16] 0.0, 128
        %1716 = vxpose.xlu0.b32.cont [14/16] 0.0, 128
        %1717 = vxpose.xlu0.b32.cont [15/16] 0.0, 128
        %1718 = vxpose.xlu0.b32.end [16/16] 0.0, 128
        %v1719 = vpop.trf.xlu0
        %v1720 = vpop.trf.xlu0
        %v1721 = vpop.trf.xlu0
        %v1722 = vpop.trf.xlu0
        %v1723 = vpop.trf.xlu0
        %v1724 = vpop.trf.xlu0
        %v1725 = vpop.trf.xlu0
        %v1726 = vpop.trf.xlu0
        %v1727 = vpop.trf.xlu0
        %v1728 = vpop.trf.xlu0
        %v1729 = vpop.trf.xlu0
        %v1730 = vpop.trf.xlu0
        %v1731 = vpop.trf.xlu0
        %v1732 = vpop.trf.xlu0
        %v1733 = vpop.trf.xlu0
        %v1734 = vpop.trf.xlu0
        %v1736 = vsel %vm1551, %v1719, 0
        %v1739 = vsel %vm1551, %v1720, 0
        %1741 = vmatpush.msra.mxu0 0.0
        %1742 = vmatpush.msra.mxu0 0.0
        %1743 = vmatpush.msra.mxu0 0.0
        %1744 = vmatpush.msra.mxu0 0.0
        %1745 = vmatpush.msra.mxu0 0.0
        %1746 = vmatpush.msra.mxu0 0.0
        %1747 = vmatpush.msra.mxu0 0.0
        %1748 = vmatpush.msra.mxu0 0.0
        %1749 = vmatpush.msra.mxu0 0.0
        %1750 = vmatpush.msra.mxu0 0.0
        %1751 = vmatpush.msra.mxu0 0.0
        %1752 = vmatpush.msra.mxu0 0.0
        %1753 = vmatpush.msra.mxu0 0.0
        %1754 = vmatpush.msra.mxu0 0.0
        %1755 = vmatpush.msra.mxu0 %v474
        %1756 = vmatpush.msra.mxu0 %v473
        %1757 = vmatmul.f32.gmra.mxu0 %v1736
        %v1758 = vpop.f32.mrf.mxu0
        %v1759 = vadd.f32 0.0, %v1758
        %1760 = vmatmul.f32.gmra.mxu0 %v1739
        %v1761 = vpop.f32.mrf.mxu0
        %v1762 = vadd.f32 0.0, %v1761
        %1763 = vdwg.mxu0
        %1764 = vxpose.xlu0.b32.start [1/16] %v1431, 128
        %1765 = vxpose.xlu0.b32.cont [2/16] %v1432, 128
        %1766 = vxpose.xlu0.b32.cont [3/16] 0.0, 128
        %1767 = vxpose.xlu0.b32.cont [4/16] 0.0, 128
        %1768 = vxpose.xlu0.b32.cont [5/16] 0.0, 128
        %1769 = vxpose.xlu0.b32.cont [6/16] 0.0, 128
        %1770 = vxpose.xlu0.b32.cont [7/16] 0.0, 128
        %1771 = vxpose.xlu0.b32.cont [8/16] 0.0, 128
        %1772 = vxpose.xlu0.b32.cont [9/16] 0.0, 128
        %1773 = vxpose.xlu0.b32.cont [10/16] 0.0, 128
        %1774 = vxpose.xlu0.b32.cont [11/16] 0.0, 128
        %1775 = vxpose.xlu0.b32.cont [12/16] 0.0, 128
        %1776 = vxpose.xlu0.b32.cont [13/16] 0.0, 128
        %1777 = vxpose.xlu0.b32.cont [14/16] 0.0, 128
        %1778 = vxpose.xlu0.b32.cont [15/16] 0.0, 128
        %1779 = vxpose.xlu0.b32.end [16/16] 0.0, 128
        %v1780 = vpop.trf.xlu0
        %v1781 = vpop.trf.xlu0
        %v1782 = vpop.trf.xlu0
        %v1783 = vpop.trf.xlu0
        %v1784 = vpop.trf.xlu0
        %v1785 = vpop.trf.xlu0
        %v1786 = vpop.trf.xlu0
        %v1787 = vpop.trf.xlu0
        %v1788 = vpop.trf.xlu0
        %v1789 = vpop.trf.xlu0
        %v1790 = vpop.trf.xlu0
        %v1791 = vpop.trf.xlu0
        %v1792 = vpop.trf.xlu0
        %v1793 = vpop.trf.xlu0
        %v1794 = vpop.trf.xlu0
        %v1795 = vpop.trf.xlu0
        %v1797 = vsel %vm1551, %v1780, 0
        %v1800 = vsel %vm1551, %v1781, 0
        %1802 = vmatpush.msra.mxu0 0.0
        %1803 = vmatpush.msra.mxu0 0.0
        %1804 = vmatpush.msra.mxu0 0.0
        %1805 = vmatpush.msra.mxu0 0.0
        %1806 = vmatpush.msra.mxu0 0.0
        %1807 = vmatpush.msra.mxu0 0.0
        %1808 = vmatpush.msra.mxu0 0.0
        %1809 = vmatpush.msra.mxu0 0.0
        %1810 = vmatpush.msra.mxu0 0.0
        %1811 = vmatpush.msra.mxu0 0.0
        %1812 = vmatpush.msra.mxu0 0.0
        %1813 = vmatpush.msra.mxu0 0.0
        %1814 = vmatpush.msra.mxu0 0.0
        %1815 = vmatpush.msra.mxu0 0.0
        %1816 = vmatpush.msra.mxu0 %v476
        %1817 = vmatpush.msra.mxu0 %v475
        %1818 = vmatmul.f32.gmra.mxu0 %v1797
        %v1819 = vpop.f32.mrf.mxu0
        %v1820 = vadd.f32 0.0, %v1819
        %1821 = vmatmul.f32.gmra.mxu0 %v1800
        %v1822 = vpop.f32.mrf.mxu0
        %v1823 = vadd.f32 0.0, %v1822
        %1824 = vdwg.mxu0
        %1825 = vxpose.xlu0.b32.start [1/16] %v1433, 128
        %1826 = vxpose.xlu0.b32.cont [2/16] %v1434, 128
        %1827 = vxpose.xlu0.b32.cont [3/16] 0.0, 128
        %1828 = vxpose.xlu0.b32.cont [4/16] 0.0, 128
        %1829 = vxpose.xlu0.b32.cont [5/16] 0.0, 128
        %1830 = vxpose.xlu0.b32.cont [6/16] 0.0, 128
        %1831 = vxpose.xlu0.b32.cont [7/16] 0.0, 128
        %1832 = vxpose.xlu0.b32.cont [8/16] 0.0, 128
        %1833 = vxpose.xlu0.b32.cont [9/16] 0.0, 128
        %1834 = vxpose.xlu0.b32.cont [10/16] 0.0, 128
        %1835 = vxpose.xlu0.b32.cont [11/16] 0.0, 128
        %1836 = vxpose.xlu0.b32.cont [12/16] 0.0, 128
        %1837 = vxpose.xlu0.b32.cont [13/16] 0.0, 128
        %1838 = vxpose.xlu0.b32.cont [14/16] 0.0, 128
        %1839 = vxpose.xlu0.b32.cont [15/16] 0.0, 128
        %1840 = vxpose.xlu0.b32.end [16/16] 0.0, 128
        %v1841 = vpop.trf.xlu0
        %v1842 = vpop.trf.xlu0
        %v1843 = vpop.trf.xlu0
        %v1844 = vpop.trf.xlu0
        %v1845 = vpop.trf.xlu0
        %v1846 = vpop.trf.xlu0
        %v1847 = vpop.trf.xlu0
        %v1848 = vpop.trf.xlu0
        %v1849 = vpop.trf.xlu0
        %v1850 = vpop.trf.xlu0
        %v1851 = vpop.trf.xlu0
        %v1852 = vpop.trf.xlu0
        %v1853 = vpop.trf.xlu0
        %v1854 = vpop.trf.xlu0
        %v1855 = vpop.trf.xlu0
        %v1856 = vpop.trf.xlu0
        %v1858 = vsel %vm1551, %v1841, 0
        %v1861 = vsel %vm1551, %v1842, 0
        %1863 = vmatpush.msra.mxu0 0.0
        %1864 = vmatpush.msra.mxu0 0.0
        %1865 = vmatpush.msra.mxu0 0.0
        %1866 = vmatpush.msra.mxu0 0.0
        %1867 = vmatpush.msra.mxu0 0.0
        %1868 = vmatpush.msra.mxu0 0.0
        %1869 = vmatpush.msra.mxu0 0.0
        %1870 = vmatpush.msra.mxu0 0.0
        %1871 = vmatpush.msra.mxu0 0.0
        %1872 = vmatpush.msra.mxu0 0.0
        %1873 = vmatpush.msra.mxu0 0.0
        %1874 = vmatpush.msra.mxu0 0.0
        %1875 = vmatpush.msra.mxu0 0.0
        %1876 = vmatpush.msra.mxu0 0.0
        %1877 = vmatpush.msra.mxu0 %v478
        %1878 = vmatpush.msra.mxu0 %v477
        %1879 = vmatmul.f32.gmra.mxu0 %v1858
        %v1880 = vpop.f32.mrf.mxu0
        %v1881 = vadd.f32 0.0, %v1880
        %1882 = vmatmul.f32.gmra.mxu0 %v1861
        %v1883 = vpop.f32.mrf.mxu0
        %v1884 = vadd.f32 0.0, %v1883
        %1885 = vdwg.mxu0
        %1886 = vxpose.xlu0.b32.start [1/16] %v1435, 128
        %1887 = vxpose.xlu0.b32.cont [2/16] %v1436, 128
        %1888 = vxpose.xlu0.b32.cont [3/16] 0.0, 128
        %1889 = vxpose.xlu0.b32.cont [4/16] 0.0, 128
        %1890 = vxpose.xlu0.b32.cont [5/16] 0.0, 128
        %1891 = vxpose.xlu0.b32.cont [6/16] 0.0, 128
        %1892 = vxpose.xlu0.b32.cont [7/16] 0.0, 128
        %1893 = vxpose.xlu0.b32.cont [8/16] 0.0, 128
        %1894 = vxpose.xlu0.b32.cont [9/16] 0.0, 128
        %1895 = vxpose.xlu0.b32.cont [10/16] 0.0, 128
        %1896 = vxpose.xlu0.b32.cont [11/16] 0.0, 128
        %1897 = vxpose.xlu0.b32.cont [12/16] 0.0, 128
        %1898 = vxpose.xlu0.b32.cont [13/16] 0.0, 128
        %1899 = vxpose.xlu0.b32.cont [14/16] 0.0, 128
        %1900 = vxpose.xlu0.b32.cont [15/16] 0.0, 128
        %1901 = vxpose.xlu0.b32.end [16/16] 0.0, 128
        %v1902 = vpop.trf.xlu0
        %v1903 = vpop.trf.xlu0
        %v1904 = vpop.trf.xlu0
        %v1905 = vpop.trf.xlu0
        %v1906 = vpop.trf.xlu0
        %v1907 = vpop.trf.xlu0
        %v1908 = vpop.trf.xlu0
        %v1909 = vpop.trf.xlu0
        %v1910 = vpop.trf.xlu0
        %v1911 = vpop.trf.xlu0
        %v1912 = vpop.trf.xlu0
        %v1913 = vpop.trf.xlu0
        %v1914 = vpop.trf.xlu0
        %v1915 = vpop.trf.xlu0
        %v1916 = vpop.trf.xlu0
        %v1917 = vpop.trf.xlu0
        %v1919 = vsel %vm1551, %v1902, 0
        %v1922 = vsel %vm1551, %v1903, 0
        %1924 = vmatpush.msra.mxu0 0.0
        %1925 = vmatpush.msra.mxu0 0.0
        %1926 = vmatpush.msra.mxu0 0.0
        %1927 = vmatpush.msra.mxu0 0.0
        %1928 = vmatpush.msra.mxu0 0.0
        %1929 = vmatpush.msra.mxu0 0.0
        %1930 = vmatpush.msra.mxu0 0.0
        %1931 = vmatpush.msra.mxu0 0.0
        %1932 = vmatpush.msra.mxu0 0.0
        %1933 = vmatpush.msra.mxu0 0.0
        %1934 = vmatpush.msra.mxu0 0.0
        %1935 = vmatpush.msra.mxu0 0.0
        %1936 = vmatpush.msra.mxu0 0.0
        %1937 = vmatpush.msra.mxu0 0.0
        %1938 = vmatpush.msra.mxu0 %v480
        %1939 = vmatpush.msra.mxu0 %v479
        %1940 = vmatmul.f32.gmra.mxu0 %v1919
        %v1941 = vpop.f32.mrf.mxu0
        %v1942 = vadd.f32 0.0, %v1941
        %1943 = vmatmul.f32.gmra.mxu0 %v1922
        %v1944 = vpop.f32.mrf.mxu0
        %v1945 = vadd.f32 0.0, %v1944
        %1946 = vdwg.mxu0
        %1947 = vxpose.xlu0.b32.start [1/16] %v1437, 128
        %1948 = vxpose.xlu0.b32.cont [2/16] %v1438, 128
        %1949 = vxpose.xlu0.b32.cont [3/16] 0.0, 128
        %1950 = vxpose.xlu0.b32.cont [4/16] 0.0, 128
        %1951 = vxpose.xlu0.b32.cont [5/16] 0.0, 128
        %1952 = vxpose.xlu0.b32.cont [6/16] 0.0, 128
        %1953 = vxpose.xlu0.b32.cont [7/16] 0.0, 128
        %1954 = vxpose.xlu0.b32.cont [8/16] 0.0, 128
        %1955 = vxpose.xlu0.b32.cont [9/16] 0.0, 128
        %1956 = vxpose.xlu0.b32.cont [10/16] 0.0, 128
        %1957 = vxpose.xlu0.b32.cont [11/16] 0.0, 128
        %1958 = vxpose.xlu0.b32.cont [12/16] 0.0, 128
        %1959 = vxpose.xlu0.b32.cont [13/16] 0.0, 128
        %1960 = vxpose.xlu0.b32.cont [14/16] 0.0, 128
        %1961 = vxpose.xlu0.b32.cont [15/16] 0.0, 128
        %1962 = vxpose.xlu0.b32.end [16/16] 0.0, 128
        %v1963 = vpop.trf.xlu0
        %v1964 = vpop.trf.xlu0
        %v1965 = vpop.trf.xlu0
        %v1966 = vpop.trf.xlu0
        %v1967 = vpop.trf.xlu0
        %v1968 = vpop.trf.xlu0
        %v1969 = vpop.trf.xlu0
        %v1970 = vpop.trf.xlu0
        %v1971 = vpop.trf.xlu0
        %v1972 = vpop.trf.xlu0
        %v1973 = vpop.trf.xlu0
        %v1974 = vpop.trf.xlu0
        %v1975 = vpop.trf.xlu0
        %v1976 = vpop.trf.xlu0
        %v1977 = vpop.trf.xlu0
        %v1978 = vpop.trf.xlu0
        %v1980 = vsel %vm1551, %v1963, 0
        %v1983 = vsel %vm1551, %v1964, 0
        %1985 = vmatpush.msra.mxu0 0.0
        %1986 = vmatpush.msra.mxu0 0.0
        %1987 = vmatpush.msra.mxu0 0.0
        %1988 = vmatpush.msra.mxu0 0.0
        %1989 = vmatpush.msra.mxu0 0.0
        %1990 = vmatpush.msra.mxu0 0.0
        %1991 = vmatpush.msra.mxu0 0.0
        %1992 = vmatpush.msra.mxu0 0.0
        %1993 = vmatpush.msra.mxu0 0.0
        %1994 = vmatpush.msra.mxu0 0.0
        %1995 = vmatpush.msra.mxu0 0.0
        %1996 = vmatpush.msra.mxu0 0.0
        %1997 = vmatpush.msra.mxu0 0.0
        %1998 = vmatpush.msra.mxu0 0.0
        %1999 = vmatpush.msra.mxu0 %v482
        %2000 = vmatpush.msra.mxu0 %v481
        %2001 = vmatmul.f32.gmra.mxu0 %v1980
        %v2002 = vpop.f32.mrf.mxu0
        %v2003 = vadd.f32 0.0, %v2002
        %2004 = vmatmul.f32.gmra.mxu0 %v1983
        %v2005 = vpop.f32.mrf.mxu0
        %v2006 = vadd.f32 0.0, %v2005
        %2007 = vdwg.mxu0
        %2008 = vxpose.xlu0.b32.start [1/16] %v1503, 128
        %2009 = vxpose.xlu0.b32.cont [2/16] %v1504, 128
        %2010 = vxpose.xlu0.b32.cont [3/16] 0.0, 128
        %2011 = vxpose.xlu0.b32.cont [4/16] 0.0, 128
        %2012 = vxpose.xlu0.b32.cont [5/16] 0.0, 128
        %2013 = vxpose.xlu0.b32.cont [6/16] 0.0, 128
        %2014 = vxpose.xlu0.b32.cont [7/16] 0.0, 128
        %2015 = vxpose.xlu0.b32.cont [8/16] 0.0, 128
        %2016 = vxpose.xlu0.b32.cont [9/16] 0.0, 128
        %2017 = vxpose.xlu0.b32.cont [10/16] 0.0, 128
        %2018 = vxpose.xlu0.b32.cont [11/16] 0.0, 128
        %2019 = vxpose.xlu0.b32.cont [12/16] 0.0, 128
        %2020 = vxpose.xlu0.b32.cont [13/16] 0.0, 128
        %2021 = vxpose.xlu0.b32.cont [14/16] 0.0, 128
        %2022 = vxpose.xlu0.b32.cont [15/16] 0.0, 128
        %2023 = vxpose.xlu0.b32.end [16/16] 0.0, 128
        %v2024 = vpop.trf.xlu0
        %v2025 = vpop.trf.xlu0
        %v2026 = vpop.trf.xlu0
        %v2027 = vpop.trf.xlu0
        %v2028 = vpop.trf.xlu0
        %v2029 = vpop.trf.xlu0
        %v2030 = vpop.trf.xlu0
        %v2031 = vpop.trf.xlu0
        %v2032 = vpop.trf.xlu0
        %v2033 = vpop.trf.xlu0
        %v2034 = vpop.trf.xlu0
        %v2035 = vpop.trf.xlu0
        %v2036 = vpop.trf.xlu0
        %v2037 = vpop.trf.xlu0
        %v2038 = vpop.trf.xlu0
        %v2039 = vpop.trf.xlu0
        %v2041 = vsel %vm1551, %v2024, 0
        %v2044 = vsel %vm1551, %v2025, 0
        %2046 = vmatpush.msra.mxu0 0.0
        %2047 = vmatpush.msra.mxu0 0.0
        %2048 = vmatpush.msra.mxu0 0.0
        %2049 = vmatpush.msra.mxu0 0.0
        %2050 = vmatpush.msra.mxu0 0.0
        %2051 = vmatpush.msra.mxu0 0.0
        %2052 = vmatpush.msra.mxu0 0.0
        %2053 = vmatpush.msra.mxu0 0.0
        %2054 = vmatpush.msra.mxu0 0.0
        %2055 = vmatpush.msra.mxu0 0.0
        %2056 = vmatpush.msra.mxu0 0.0
        %2057 = vmatpush.msra.mxu0 0.0
        %2058 = vmatpush.msra.mxu0 0.0
        %2059 = vmatpush.msra.mxu0 0.0
        %2060 = vmatpush.msra.mxu0 %v484
        %2061 = vmatpush.msra.mxu0 %v483
        %2062 = vmatmul.f32.gmra.mxu0 %v2041
        %v2063 = vpop.f32.mrf.mxu0
        %v2064 = vadd.f32 0.0, %v2063
        %2065 = vmatmul.f32.gmra.mxu0 %v2044
        %v2066 = vpop.f32.mrf.mxu0
        %v2067 = vadd.f32 0.0, %v2066
        %2068 = vdwg.mxu0
        %2069 = vxpose.xlu0.b32.start [1/16] %v1505, 128
        %2070 = vxpose.xlu0.b32.cont [2/16] %v1506, 128
        %2071 = vxpose.xlu0.b32.cont [3/16] 0.0, 128
        %2072 = vxpose.xlu0.b32.cont [4/16] 0.0, 128
        %2073 = vxpose.xlu0.b32.cont [5/16] 0.0, 128
        %2074 = vxpose.xlu0.b32.cont [6/16] 0.0, 128
        %2075 = vxpose.xlu0.b32.cont [7/16] 0.0, 128
        %2076 = vxpose.xlu0.b32.cont [8/16] 0.0, 128
        %2077 = vxpose.xlu0.b32.cont [9/16] 0.0, 128
        %2078 = vxpose.xlu0.b32.cont [10/16] 0.0, 128
        %2079 = vxpose.xlu0.b32.cont [11/16] 0.0, 128
        %2080 = vxpose.xlu0.b32.cont [12/16] 0.0, 128
        %2081 = vxpose.xlu0.b32.cont [13/16] 0.0, 128
        %2082 = vxpose.xlu0.b32.cont [14/16] 0.0, 128
        %2083 = vxpose.xlu0.b32.cont [15/16] 0.0, 128
        %2084 = vxpose.xlu0.b32.end [16/16] 0.0, 128
        %v2085 = vpop.trf.xlu0
        %v2086 = vpop.trf.xlu0
        %v2087 = vpop.trf.xlu0
        %v2088 = vpop.trf.xlu0
        %v2089 = vpop.trf.xlu0
        %v2090 = vpop.trf.xlu0
        %v2091 = vpop.trf.xlu0
        %v2092 = vpop.trf.xlu0
        %v2093 = vpop.trf.xlu0
        %v2094 = vpop.trf.xlu0
        %v2095 = vpop.trf.xlu0
        %v2096 = vpop.trf.xlu0
        %v2097 = vpop.trf.xlu0
        %v2098 = vpop.trf.xlu0
        %v2099 = vpop.trf.xlu0
        %v2100 = vpop.trf.xlu0
        %v2102 = vsel %vm1551, %v2085, 0
        %v2105 = vsel %vm1551, %v2086, 0
        %2107 = vmatpush.msra.mxu0 0.0
        %2108 = vmatpush.msra.mxu0 0.0
        %2109 = vmatpush.msra.mxu0 0.0
        %2110 = vmatpush.msra.mxu0 0.0
        %2111 = vmatpush.msra.mxu0 0.0
        %2112 = vmatpush.msra.mxu0 0.0
        %2113 = vmatpush.msra.mxu0 0.0
        %2114 = vmatpush.msra.mxu0 0.0
        %2115 = vmatpush.msra.mxu0 0.0
        %2116 = vmatpush.msra.mxu0 0.0
        %2117 = vmatpush.msra.mxu0 0.0
        %2118 = vmatpush.msra.mxu0 0.0
        %2119 = vmatpush.msra.mxu0 0.0
        %2120 = vmatpush.msra.mxu0 0.0
        %2121 = vmatpush.msra.mxu0 %v486
        %2122 = vmatpush.msra.mxu0 %v485
        %2123 = vmatmul.f32.gmra.mxu0 %v2102
        %v2124 = vpop.f32.mrf.mxu0
        %v2125 = vadd.f32 0.0, %v2124
        %2126 = vmatmul.f32.gmra.mxu0 %v2105
        %v2127 = vpop.f32.mrf.mxu0
        %v2128 = vadd.f32 0.0, %v2127
        %2129 = vdwg.mxu0
        %2130 = vxpose.xlu0.b32.start [1/16] %v1507, 128
        %2131 = vxpose.xlu0.b32.cont [2/16] %v1508, 128
        %2132 = vxpose.xlu0.b32.cont [3/16] 0.0, 128
        %2133 = vxpose.xlu0.b32.cont [4/16] 0.0, 128
        %2134 = vxpose.xlu0.b32.cont [5/16] 0.0, 128
        %2135 = vxpose.xlu0.b32.cont [6/16] 0.0, 128
        %2136 = vxpose.xlu0.b32.cont [7/16] 0.0, 128
        %2137 = vxpose.xlu0.b32.cont [8/16] 0.0, 128
        %2138 = vxpose.xlu0.b32.cont [9/16] 0.0, 128
        %2139 = vxpose.xlu0.b32.cont [10/16] 0.0, 128
        %2140 = vxpose.xlu0.b32.cont [11/16] 0.0, 128
        %2141 = vxpose.xlu0.b32.cont [12/16] 0.0, 128
        %2142 = vxpose.xlu0.b32.cont [13/16] 0.0, 128
        %2143 = vxpose.xlu0.b32.cont [14/16] 0.0, 128
        %2144 = vxpose.xlu0.b32.cont [15/16] 0.0, 128
        %2145 = vxpose.xlu0.b32.end [16/16] 0.0, 128
        %v2146 = vpop.trf.xlu0
        %v2147 = vpop.trf.xlu0
        %v2148 = vpop.trf.xlu0
        %v2149 = vpop.trf.xlu0
        %v2150 = vpop.trf.xlu0
        %v2151 = vpop.trf.xlu0
        %v2152 = vpop.trf.xlu0
        %v2153 = vpop.trf.xlu0
        %v2154 = vpop.trf.xlu0
        %v2155 = vpop.trf.xlu0
        %v2156 = vpop.trf.xlu0
        %v2157 = vpop.trf.xlu0
        %v2158 = vpop.trf.xlu0
        %v2159 = vpop.trf.xlu0
        %v2160 = vpop.trf.xlu0
        %v2161 = vpop.trf.xlu0
        %v2163 = vsel %vm1551, %v2146, 0
        %v2166 = vsel %vm1551, %v2147, 0
        %2168 = vmatpush.msra.mxu0 0.0
        %2169 = vmatpush.msra.mxu0 0.0
        %2170 = vmatpush.msra.mxu0 0.0
        %2171 = vmatpush.msra.mxu0 0.0
        %2172 = vmatpush.msra.mxu0 0.0
        %2173 = vmatpush.msra.mxu0 0.0
        %2174 = vmatpush.msra.mxu0 0.0
        %2175 = vmatpush.msra.mxu0 0.0
        %2176 = vmatpush.msra.mxu0 0.0
        %2177 = vmatpush.msra.mxu0 0.0
        %2178 = vmatpush.msra.mxu0 0.0
        %2179 = vmatpush.msra.mxu0 0.0
        %2180 = vmatpush.msra.mxu0 0.0
        %2181 = vmatpush.msra.mxu0 0.0
        %2182 = vmatpush.msra.mxu0 %v488
        %2183 = vmatpush.msra.mxu0 %v487
        %2184 = vmatmul.f32.gmra.mxu0 %v2163
        %v2185 = vpop.f32.mrf.mxu0
        %v2186 = vadd.f32 0.0, %v2185
        %2187 = vmatmul.f32.gmra.mxu0 %v2166
        %v2188 = vpop.f32.mrf.mxu0
        %v2189 = vadd.f32 0.0, %v2188
        %2190 = vdwg.mxu0
        %2191 = vxpose.xlu0.b32.start [1/16] %v1509, 128
        %2192 = vxpose.xlu0.b32.cont [2/16] %v1510, 128
        %2193 = vxpose.xlu0.b32.cont [3/16] 0.0, 128
        %2194 = vxpose.xlu0.b32.cont [4/16] 0.0, 128
        %2195 = vxpose.xlu0.b32.cont [5/16] 0.0, 128
        %2196 = vxpose.xlu0.b32.cont [6/16] 0.0, 128
        %2197 = vxpose.xlu0.b32.cont [7/16] 0.0, 128
        %2198 = vxpose.xlu0.b32.cont [8/16] 0.0, 128
        %2199 = vxpose.xlu0.b32.cont [9/16] 0.0, 128
        %2200 = vxpose.xlu0.b32.cont [10/16] 0.0, 128
        %2201 = vxpose.xlu0.b32.cont [11/16] 0.0, 128
        %2202 = vxpose.xlu0.b32.cont [12/16] 0.0, 128
        %2203 = vxpose.xlu0.b32.cont [13/16] 0.0, 128
        %2204 = vxpose.xlu0.b32.cont [14/16] 0.0, 128
        %2205 = vxpose.xlu0.b32.cont [15/16] 0.0, 128
        %2206 = vxpose.xlu0.b32.end [16/16] 0.0, 128
        %v2207 = vpop.trf.xlu0
        %v2208 = vpop.trf.xlu0
        %v2209 = vpop.trf.xlu0
        %v2210 = vpop.trf.xlu0
        %v2211 = vpop.trf.xlu0
        %v2212 = vpop.trf.xlu0
        %v2213 = vpop.trf.xlu0
        %v2214 = vpop.trf.xlu0
        %v2215 = vpop.trf.xlu0
        %v2216 = vpop.trf.xlu0
        %v2217 = vpop.trf.xlu0
        %v2218 = vpop.trf.xlu0
        %v2219 = vpop.trf.xlu0
        %v2220 = vpop.trf.xlu0
        %v2221 = vpop.trf.xlu0
        %v2222 = vpop.trf.xlu0
        %v2224 = vsel %vm1551, %v2207, 0
        %v2227 = vsel %vm1551, %v2208, 0
        %2229 = vmatpush.msra.mxu0 0.0
        %2230 = vmatpush.msra.mxu0 0.0
        %2231 = vmatpush.msra.mxu0 0.0
        %2232 = vmatpush.msra.mxu0 0.0
        %2233 = vmatpush.msra.mxu0 0.0
        %2234 = vmatpush.msra.mxu0 0.0
        %2235 = vmatpush.msra.mxu0 0.0
        %2236 = vmatpush.msra.mxu0 0.0
        %2237 = vmatpush.msra.mxu0 0.0
        %2238 = vmatpush.msra.mxu0 0.0
        %2239 = vmatpush.msra.mxu0 0.0
        %2240 = vmatpush.msra.mxu0 0.0
        %2241 = vmatpush.msra.mxu0 0.0
        %2242 = vmatpush.msra.mxu0 0.0
        %2243 = vmatpush.msra.mxu0 %v490
        %2244 = vmatpush.msra.mxu0 %v489
        %2245 = vmatmul.f32.gmra.mxu0 %v2224
        %v2246 = vpop.f32.mrf.mxu0
        %v2247 = vadd.f32 0.0, %v2246
        %2248 = vmatmul.f32.gmra.mxu0 %v2227
        %v2249 = vpop.f32.mrf.mxu0
        %v2250 = vadd.f32 0.0, %v2249
        %2251 = vdwg.mxu0
        %2252 = vxpose.xlu0.b32.start [1/16] %v1511, 128
        %2253 = vxpose.xlu0.b32.cont [2/16] %v1512, 128
        %2254 = vxpose.xlu0.b32.cont [3/16] 0.0, 128
        %2255 = vxpose.xlu0.b32.cont [4/16] 0.0, 128
        %2256 = vxpose.xlu0.b32.cont [5/16] 0.0, 128
        %2257 = vxpose.xlu0.b32.cont [6/16] 0.0, 128
        %2258 = vxpose.xlu0.b32.cont [7/16] 0.0, 128
        %2259 = vxpose.xlu0.b32.cont [8/16] 0.0, 128
        %2260 = vxpose.xlu0.b32.cont [9/16] 0.0, 128
        %2261 = vxpose.xlu0.b32.cont [10/16] 0.0, 128
        %2262 = vxpose.xlu0.b32.cont [11/16] 0.0, 128
        %2263 = vxpose.xlu0.b32.cont [12/16] 0.0, 128
        %2264 = vxpose.xlu0.b32.cont [13/16] 0.0, 128
        %2265 = vxpose.xlu0.b32.cont [14/16] 0.0, 128
        %2266 = vxpose.xlu0.b32.cont [15/16] 0.0, 128
        %2267 = vxpose.xlu0.b32.end [16/16] 0.0, 128
        %v2268 = vpop.trf.xlu0
        %v2269 = vpop.trf.xlu0
        %v2270 = vpop.trf.xlu0
        %v2271 = vpop.trf.xlu0
        %v2272 = vpop.trf.xlu0
        %v2273 = vpop.trf.xlu0
        %v2274 = vpop.trf.xlu0
        %v2275 = vpop.trf.xlu0
        %v2276 = vpop.trf.xlu0
        %v2277 = vpop.trf.xlu0
        %v2278 = vpop.trf.xlu0
        %v2279 = vpop.trf.xlu0
        %v2280 = vpop.trf.xlu0
        %v2281 = vpop.trf.xlu0
        %v2282 = vpop.trf.xlu0
        %v2283 = vpop.trf.xlu0
        %v2285 = vsel %vm1551, %v2268, 0
        %v2288 = vsel %vm1551, %v2269, 0
        %2290 = vmatpush.msra.mxu0 0.0
        %2291 = vmatpush.msra.mxu0 0.0
        %2292 = vmatpush.msra.mxu0 0.0
        %2293 = vmatpush.msra.mxu0 0.0
        %2294 = vmatpush.msra.mxu0 0.0
        %2295 = vmatpush.msra.mxu0 0.0
        %2296 = vmatpush.msra.mxu0 0.0
        %2297 = vmatpush.msra.mxu0 0.0
        %2298 = vmatpush.msra.mxu0 0.0
        %2299 = vmatpush.msra.mxu0 0.0
        %2300 = vmatpush.msra.mxu0 0.0
        %2301 = vmatpush.msra.mxu0 0.0
        %2302 = vmatpush.msra.mxu0 0.0
        %2303 = vmatpush.msra.mxu0 0.0
        %2304 = vmatpush.msra.mxu0 %v492
        %2305 = vmatpush.msra.mxu0 %v491
        %2306 = vmatmul.f32.gmra.mxu0 %v2285
        %v2307 = vpop.f32.mrf.mxu0
        %v2308 = vadd.f32 0.0, %v2307
        %2309 = vmatmul.f32.gmra.mxu0 %v2288
        %v2310 = vpop.f32.mrf.mxu0
        %v2311 = vadd.f32 0.0, %v2310
        %2312 = vdwg.mxu0
        %2313 = vxpose.xlu0.b32.start [1/16] %v1513, 128
        %2314 = vxpose.xlu0.b32.cont [2/16] %v1514, 128
        %2315 = vxpose.xlu0.b32.cont [3/16] 0.0, 128
        %2316 = vxpose.xlu0.b32.cont [4/16] 0.0, 128
        %2317 = vxpose.xlu0.b32.cont [5/16] 0.0, 128
        %2318 = vxpose.xlu0.b32.cont [6/16] 0.0, 128
        %2319 = vxpose.xlu0.b32.cont [7/16] 0.0, 128
        %2320 = vxpose.xlu0.b32.cont [8/16] 0.0, 128
        %2321 = vxpose.xlu0.b32.cont [9/16] 0.0, 128
        %2322 = vxpose.xlu0.b32.cont [10/16] 0.0, 128
        %2323 = vxpose.xlu0.b32.cont [11/16] 0.0, 128
        %2324 = vxpose.xlu0.b32.cont [12/16] 0.0, 128
        %2325 = vxpose.xlu0.b32.cont [13/16] 0.0, 128
        %2326 = vxpose.xlu0.b32.cont [14/16] 0.0, 128
        %2327 = vxpose.xlu0.b32.cont [15/16] 0.0, 128
        %2328 = vxpose.xlu0.b32.end [16/16] 0.0, 128
        %v2329 = vpop.trf.xlu0
        %v2330 = vpop.trf.xlu0
        %v2331 = vpop.trf.xlu0
        %v2332 = vpop.trf.xlu0
        %v2333 = vpop.trf.xlu0
        %v2334 = vpop.trf.xlu0
        %v2335 = vpop.trf.xlu0
        %v2336 = vpop.trf.xlu0
        %v2337 = vpop.trf.xlu0
        %v2338 = vpop.trf.xlu0
        %v2339 = vpop.trf.xlu0
        %v2340 = vpop.trf.xlu0
        %v2341 = vpop.trf.xlu0
        %v2342 = vpop.trf.xlu0
        %v2343 = vpop.trf.xlu0
        %v2344 = vpop.trf.xlu0
        %v2346 = vsel %vm1551, %v2329, 0
        %v2349 = vsel %vm1551, %v2330, 0
        %2351 = vmatpush.msra.mxu0 0.0
        %2352 = vmatpush.msra.mxu0 0.0
        %2353 = vmatpush.msra.mxu0 0.0
        %2354 = vmatpush.msra.mxu0 0.0
        %2355 = vmatpush.msra.mxu0 0.0
        %2356 = vmatpush.msra.mxu0 0.0
        %2357 = vmatpush.msra.mxu0 0.0
        %2358 = vmatpush.msra.mxu0 0.0
        %2359 = vmatpush.msra.mxu0 0.0
        %2360 = vmatpush.msra.mxu0 0.0
        %2361 = vmatpush.msra.mxu0 0.0
        %2362 = vmatpush.msra.mxu0 0.0
        %2363 = vmatpush.msra.mxu0 0.0
        %2364 = vmatpush.msra.mxu0 0.0
        %2365 = vmatpush.msra.mxu0 %v494
        %2366 = vmatpush.msra.mxu0 %v493
        %2367 = vmatmul.f32.gmra.mxu0 %v2346
        %v2368 = vpop.f32.mrf.mxu0
        %v2369 = vadd.f32 0.0, %v2368
        %2370 = vmatmul.f32.gmra.mxu0 %v2349
        %v2371 = vpop.f32.mrf.mxu0
        %v2372 = vadd.f32 0.0, %v2371
        %2373 = vdwg.mxu0
        %2374 = vxpose.xlu0.b32.start [1/16] %v1515, 128
        %2375 = vxpose.xlu0.b32.cont [2/16] %v1516, 128
        %2376 = vxpose.xlu0.b32.cont [3/16] 0.0, 128
        %2377 = vxpose.xlu0.b32.cont [4/16] 0.0, 128
        %2378 = vxpose.xlu0.b32.cont [5/16] 0.0, 128
        %2379 = vxpose.xlu0.b32.cont [6/16] 0.0, 128
        %2380 = vxpose.xlu0.b32.cont [7/16] 0.0, 128
        %2381 = vxpose.xlu0.b32.cont [8/16] 0.0, 128
        %2382 = vxpose.xlu0.b32.cont [9/16] 0.0, 128
        %2383 = vxpose.xlu0.b32.cont [10/16] 0.0, 128
        %2384 = vxpose.xlu0.b32.cont [11/16] 0.0, 128
        %2385 = vxpose.xlu0.b32.cont [12/16] 0.0, 128
        %2386 = vxpose.xlu0.b32.cont [13/16] 0.0, 128
        %2387 = vxpose.xlu0.b32.cont [14/16] 0.0, 128
        %2388 = vxpose.xlu0.b32.cont [15/16] 0.0, 128
        %2389 = vxpose.xlu0.b32.end [16/16] 0.0, 128
        %v2390 = vpop.trf.xlu0
        %v2391 = vpop.trf.xlu0
        %v2392 = vpop.trf.xlu0
        %v2393 = vpop.trf.xlu0
        %v2394 = vpop.trf.xlu0
        %v2395 = vpop.trf.xlu0
        %v2396 = vpop.trf.xlu0
        %v2397 = vpop.trf.xlu0
        %v2398 = vpop.trf.xlu0
        %v2399 = vpop.trf.xlu0
        %v2400 = vpop.trf.xlu0
        %v2401 = vpop.trf.xlu0
        %v2402 = vpop.trf.xlu0
        %v2403 = vpop.trf.xlu0
        %v2404 = vpop.trf.xlu0
        %v2405 = vpop.trf.xlu0
        %v2407 = vsel %vm1551, %v2390, 0
        %v2410 = vsel %vm1551, %v2391, 0
        %2412 = vmatpush.msra.mxu0 0.0
        %2413 = vmatpush.msra.mxu0 0.0
        %2414 = vmatpush.msra.mxu0 0.0
        %2415 = vmatpush.msra.mxu0 0.0
        %2416 = vmatpush.msra.mxu0 0.0
        %2417 = vmatpush.msra.mxu0 0.0
        %2418 = vmatpush.msra.mxu0 0.0
        %2419 = vmatpush.msra.mxu0 0.0
        %2420 = vmatpush.msra.mxu0 0.0
        %2421 = vmatpush.msra.mxu0 0.0
        %2422 = vmatpush.msra.mxu0 0.0
        %2423 = vmatpush.msra.mxu0 0.0
        %2424 = vmatpush.msra.mxu0 0.0
        %2425 = vmatpush.msra.mxu0 0.0
        %2426 = vmatpush.msra.mxu0 %v496
        %2427 = vmatpush.msra.mxu0 %v495
        %2428 = vmatmul.f32.gmra.mxu0 %v2407
        %v2429 = vpop.f32.mrf.mxu0
        %v2430 = vadd.f32 0.0, %v2429
        %2431 = vmatmul.f32.gmra.mxu0 %v2410
        %v2432 = vpop.f32.mrf.mxu0
        %v2433 = vadd.f32 0.0, %v2432
        %2434 = vdwg.mxu0
        %2435 = vxpose.xlu0.b32.start [1/16] %v1517, 128
        %2436 = vxpose.xlu0.b32.cont [2/16] %v1518, 128
        %2437 = vxpose.xlu0.b32.cont [3/16] 0.0, 128
        %2438 = vxpose.xlu0.b32.cont [4/16] 0.0, 128
        %2439 = vxpose.xlu0.b32.cont [5/16] 0.0, 128
        %2440 = vxpose.xlu0.b32.cont [6/16] 0.0, 128
        %2441 = vxpose.xlu0.b32.cont [7/16] 0.0, 128
        %2442 = vxpose.xlu0.b32.cont [8/16] 0.0, 128
        %2443 = vxpose.xlu0.b32.cont [9/16] 0.0, 128
        %2444 = vxpose.xlu0.b32.cont [10/16] 0.0, 128
        %2445 = vxpose.xlu0.b32.cont [11/16] 0.0, 128
        %2446 = vxpose.xlu0.b32.cont [12/16] 0.0, 128
        %2447 = vxpose.xlu0.b32.cont [13/16] 0.0, 128
        %2448 = vxpose.xlu0.b32.cont [14/16] 0.0, 128
        %2449 = vxpose.xlu0.b32.cont [15/16] 0.0, 128
        %2450 = vxpose.xlu0.b32.end [16/16] 0.0, 128
        %v2451 = vpop.trf.xlu0
        %v2452 = vpop.trf.xlu0
        %v2453 = vpop.trf.xlu0
        %v2454 = vpop.trf.xlu0
        %v2455 = vpop.trf.xlu0
        %v2456 = vpop.trf.xlu0
        %v2457 = vpop.trf.xlu0
        %v2458 = vpop.trf.xlu0
        %v2459 = vpop.trf.xlu0
        %v2460 = vpop.trf.xlu0
        %v2461 = vpop.trf.xlu0
        %v2462 = vpop.trf.xlu0
        %v2463 = vpop.trf.xlu0
        %v2464 = vpop.trf.xlu0
        %v2465 = vpop.trf.xlu0
        %v2466 = vpop.trf.xlu0
        %v2468 = vsel %vm1551, %v2451, 0
        %v2471 = vsel %vm1551, %v2452, 0
        %2473 = vmatpush.msra.mxu0 0.0
        %2474 = vmatpush.msra.mxu0 0.0
        %2475 = vmatpush.msra.mxu0 0.0
        %2476 = vmatpush.msra.mxu0 0.0
        %2477 = vmatpush.msra.mxu0 0.0
        %2478 = vmatpush.msra.mxu0 0.0
        %2479 = vmatpush.msra.mxu0 0.0
        %2480 = vmatpush.msra.mxu0 0.0
        %2481 = vmatpush.msra.mxu0 0.0
        %2482 = vmatpush.msra.mxu0 0.0
        %2483 = vmatpush.msra.mxu0 0.0
        %2484 = vmatpush.msra.mxu0 0.0
        %2485 = vmatpush.msra.mxu0 0.0
        %2486 = vmatpush.msra.mxu0 0.0
        %2487 = vmatpush.msra.mxu0 %v498
        %2488 = vmatpush.msra.mxu0 %v497
        %2489 = vmatmul.f32.gmra.mxu0 %v2468
        %v2490 = vpop.f32.mrf.mxu0
        %v2491 = vadd.f32 0.0, %v2490
        %2492 = vmatmul.f32.gmra.mxu0 %v2471
        %v2493 = vpop.f32.mrf.mxu0
        %v2494 = vadd.f32 0.0, %v2493
        %2495 = vdwg.mxu0
        %2512 = vrot.lane.b32.xlu0 %v2064, 32
        %v2513 = vpop.permute.xlu0 %2512
        %2514 = vrot.lane.b32.xlu0 %v2067, 32
        %v2515 = vpop.permute.xlu0 %2514
        %2516 = vrot.lane.b32.xlu0 %v2125, 32
        %v2517 = vpop.permute.xlu0 %2516
        %2518 = vrot.lane.b32.xlu0 %v2128, 32
        %v2519 = vpop.permute.xlu0 %2518
        %2520 = vrot.lane.b32.xlu0 %v2186, 32
        %v2521 = vpop.permute.xlu0 %2520
        %2522 = vrot.lane.b32.xlu0 %v2189, 32
        %v2523 = vpop.permute.xlu0 %2522
        %2524 = vrot.lane.b32.xlu0 %v2247, 32
        %v2525 = vpop.permute.xlu0 %2524
        %2526 = vrot.lane.b32.xlu0 %v2250, 32
        %v2527 = vpop.permute.xlu0 %2526
        %2528 = vrot.lane.b32.xlu0 %v2308, 32
        %v2529 = vpop.permute.xlu0 %2528
        %2530 = vrot.lane.b32.xlu0 %v2311, 32
        %v2531 = vpop.permute.xlu0 %2530
        %2532 = vrot.lane.b32.xlu0 %v2369, 32
        %v2533 = vpop.permute.xlu0 %2532
        %2534 = vrot.lane.b32.xlu0 %v2372, 32
        %v2535 = vpop.permute.xlu0 %2534
        %2536 = vrot.lane.b32.xlu0 %v2430, 32
        %v2537 = vpop.permute.xlu0 %2536
        %2538 = vrot.lane.b32.xlu0 %v2433, 32
        %v2539 = vpop.permute.xlu0 %2538
        %2540 = vrot.lane.b32.xlu0 %v2491, 32
        %v2541 = vpop.permute.xlu0 %2540
        %2542 = vrot.lane.b32.xlu0 %v2494, 32
        %v2543 = vpop.permute.xlu0 %2542
        %v2560 = vsel %vm507, %v1576, %v2513
        %v2561 = vsel %vm507, %v1579, %v2515
        %v2562 = vsel %vm507, %v1637, %v2517
        %v2563 = vsel %vm507, %v1640, %v2519
        %v2564 = vsel %vm507, %v1698, %v2521
        %v2565 = vsel %vm507, %v1701, %v2523
        %v2566 = vsel %vm507, %v1759, %v2525
        %v2567 = vsel %vm507, %v1762, %v2527
        %v2568 = vsel %vm507, %v1820, %v2529
        %v2569 = vsel %vm507, %v1823, %v2531
        %v2570 = vsel %vm507, %v1881, %v2533
        %v2571 = vsel %vm507, %v1884, %v2535
        %v2572 = vsel %vm507, %v1942, %v2537
        %v2573 = vsel %vm507, %v1945, %v2539
        %v2574 = vsel %vm507, %v2003, %v2541
        %v2575 = vsel %vm507, %v2006, %v2543
        %v2576 = vld [vmem:[%s8] sm:$0xff]
        %v2577 = vld [vmem:[%s8 + $0x8] sm:$0xff]
        %v2578 = vld [vmem:[%s8 + $0x10] sm:$0xff]
        %v2579 = vld [vmem:[%s8 + $0x18] sm:$0xff]
        %v2580 = vld [vmem:[%s8 + $0x20] sm:$0xff]
        %v2581 = vld [vmem:[%s8 + $0x28] sm:$0xff]
        %v2582 = vld [vmem:[%s8 + $0x30] sm:$0xff]
        %v2583 = vld [vmem:[%s8 + $0x38] sm:$0xff]
        %v2585 = vsel %vm782, %v2561, 0
        %v2588 = vsel %vm782, %v2563, 0
        %v2591 = vsel %vm782, %v2565, 0
        %v2594 = vsel %vm782, %v2567, 0
        %v2597 = vsel %vm782, %v2569, 0
        %v2600 = vsel %vm782, %v2571, 0
        %v2603 = vsel %vm782, %v2573, 0
        %v2606 = vsel %vm782, %v2575, 0
        %v2609 = vsel %vm782, %v2560, 0
        %v2612 = vsel %vm782, %v2562, 0
        %v2615 = vsel %vm782, %v2564, 0
        %v2618 = vsel %vm782, %v2566, 0
        %v2621 = vsel %vm782, %v2568, 0
        %v2624 = vsel %vm782, %v2570, 0
        %v2627 = vsel %vm782, %v2572, 0
        %v2630 = vsel %vm782, %v2574, 0
        %2632 = vmatpush.msra.mxu0 0.0
        %2633 = vmatpush.msra.mxu0 0.0
        %2634 = vmatpush.msra.mxu0 0.0
        %2635 = vmatpush.msra.mxu0 0.0
        %2636 = vmatpush.msra.mxu0 0.0
        %2637 = vmatpush.msra.mxu0 0.0
        %2638 = vmatpush.msra.mxu0 0.0
        %2639 = vmatpush.msra.mxu0 0.0
        %2640 = vmatpush.msra.mxu0 %v2583
        %2641 = vmatpush.msra.mxu0 %v2582
        %2642 = vmatpush.msra.mxu0 %v2581
        %2643 = vmatpush.msra.mxu0 %v2580
        %2644 = vmatpush.msra.mxu0 %v2579
        %2645 = vmatpush.msra.mxu0 %v2578
        %2646 = vmatpush.msra.mxu0 %v2577
        %2647 = vmatpush.msra.mxu0 %v2576
        %2648 = vmatmul.f32.gmra.mxu0 %v2585
        %v2649 = vpop.f32.mrf.mxu0
        %v2650 = vadd.f32 0.0, %v2649
        %2651 = vmatmul.f32.gmra.mxu0 %v2588
        %v2652 = vpop.f32.mrf.mxu0
        %v2653 = vadd.f32 0.0, %v2652
        %2654 = vmatmul.f32.gmra.mxu0 %v2591
        %v2655 = vpop.f32.mrf.mxu0
        %v2656 = vadd.f32 0.0, %v2655
        %2657 = vmatmul.f32.gmra.mxu0 %v2594
        %v2658 = vpop.f32.mrf.mxu0
        %v2659 = vadd.f32 0.0, %v2658
        %2660 = vmatmul.f32.gmra.mxu0 %v2597
        %v2661 = vpop.f32.mrf.mxu0
        %v2662 = vadd.f32 0.0, %v2661
        %2663 = vmatmul.f32.gmra.mxu0 %v2600
        %v2664 = vpop.f32.mrf.mxu0
        %v2665 = vadd.f32 0.0, %v2664
        %2666 = vmatmul.f32.gmra.mxu0 %v2603
        %v2667 = vpop.f32.mrf.mxu0
        %v2668 = vadd.f32 0.0, %v2667
        %2669 = vmatmul.f32.gmra.mxu0 %v2606
        %v2670 = vpop.f32.mrf.mxu0
        %v2671 = vadd.f32 0.0, %v2670
        %2672 = vmatmul.f32.gmra.mxu0 %v2609
        %v2673 = vpop.f32.mrf.mxu0
        %v2674 = vadd.f32 0.0, %v2673
        %2675 = vmatmul.f32.gmra.mxu0 %v2612
        %v2676 = vpop.f32.mrf.mxu0
        %v2677 = vadd.f32 0.0, %v2676
        %2678 = vmatmul.f32.gmra.mxu0 %v2615
        %v2679 = vpop.f32.mrf.mxu0
        %v2680 = vadd.f32 0.0, %v2679
        %2681 = vmatmul.f32.gmra.mxu0 %v2618
        %v2682 = vpop.f32.mrf.mxu0
        %v2683 = vadd.f32 0.0, %v2682
        %2684 = vmatmul.f32.gmra.mxu0 %v2621
        %v2685 = vpop.f32.mrf.mxu0
        %v2686 = vadd.f32 0.0, %v2685
        %2687 = vmatmul.f32.gmra.mxu0 %v2624
        %v2688 = vpop.f32.mrf.mxu0
        %v2689 = vadd.f32 0.0, %v2688
        %2690 = vmatmul.f32.gmra.mxu0 %v2627
        %v2691 = vpop.f32.mrf.mxu0
        %v2692 = vadd.f32 0.0, %v2691
        %2693 = vmatmul.f32.gmra.mxu0 %v2630
        %v2694 = vpop.f32.mrf.mxu0
        %v2695 = vadd.f32 0.0, %v2694
        %2696 = vdwg.mxu0
        %s2697 = sld [smem:[#allocation2]]
        %v2698 = vstv %s2697
        %v2699 = vadd.f32 %v2650, %v2698
        %v2700 = vadd.f32 %v2653, %v2698
        %v2701 = vadd.f32 %v2656, %v2698
        %v2702 = vadd.f32 %v2659, %v2698
        %v2703 = vadd.f32 %v2662, %v2698
        %v2704 = vadd.f32 %v2665, %v2698
        %v2705 = vadd.f32 %v2668, %v2698
        %v2706 = vadd.f32 %v2671, %v2698
        %v2707 = vxor.u32 %v2699, 2147483648
        %v2708 = vxor.u32 %v2700, 2147483648
        %v2709 = vxor.u32 %v2701, 2147483648
        %v2710 = vxor.u32 %v2702, 2147483648
        %v2711 = vxor.u32 %v2703, 2147483648
        %v2712 = vxor.u32 %v2704, 2147483648
        %v2713 = vxor.u32 %v2705, 2147483648
        %v2714 = vxor.u32 %v2706, 2147483648
        %v2715 = vmul.f32 %v2707, 1.442695
        %v2716 = vpow.pop %v2715
        %v2717 = vmul.f32 %v2708, 1.442695
        %v2718 = vpow.pop %v2717
        %v2719 = vmul.f32 %v2709, 1.442695
        %v2720 = vpow.pop %v2719
        %v2721 = vmul.f32 %v2710, 1.442695
        %v2722 = vpow.pop %v2721
        %v2723 = vmul.f32 %v2711, 1.442695
        %v2724 = vpow.pop %v2723
        %v2725 = vmul.f32 %v2712, 1.442695
        %v2726 = vpow.pop %v2725
        %v2727 = vmul.f32 %v2713, 1.442695
        %v2728 = vpow.pop %v2727
        %v2729 = vmul.f32 %v2714, 1.442695
        %v2730 = vpow.pop %v2729
        %v2731 = vadd.f32 %v2716, 1.0
        %v2732 = vadd.f32 %v2718, 1.0
        %v2733 = vadd.f32 %v2720, 1.0
        %v2734 = vadd.f32 %v2722, 1.0
        %v2735 = vadd.f32 %v2724, 1.0
        %v2736 = vadd.f32 %v2726, 1.0
        %v2737 = vadd.f32 %v2728, 1.0
        %v2738 = vadd.f32 %v2730, 1.0
        %v2739 = vrcp.pop %v2731
        %v2740 = vmul.f32 %v2731, %v2739
        %v2741 = vsub.f32 1.0, %v2740
        %v2742 = vmul.f32 %v2739, %v2741
        %v2743 = vadd.f32 %v2739, %v2742
        %vm2744 = vweird.f32 %v2731
        %vm2745 = vweird.f32 %v2739
        %vm2746 = vmor %vm2744, %vm2745
        %v2747 = vsel %vm2746, %v2739, %v2743
        %v2748 = vand.u32 2147483647, %v2731
        %vm2749 = vcmp.eq.f32.partialorder %v2748, 8.507059e+37
        %v2750 = vand.u32 %v2731, 2147483648
        %v2751 = vor.u32 1.1754944e-38, %v2750
        %v2752 = vsel %vm2749, %v2751, %v2747
        %v2753 = vmul.f32 1.0, %v2752
        %v2754 = vrcp.pop %v2732
        %v2755 = vmul.f32 %v2732, %v2754
        %v2756 = vsub.f32 1.0, %v2755
        %v2757 = vmul.f32 %v2754, %v2756
        %v2758 = vadd.f32 %v2754, %v2757
        %vm2759 = vweird.f32 %v2732
        %vm2760 = vweird.f32 %v2754
        %vm2761 = vmor %vm2759, %vm2760
        %v2762 = vsel %vm2761, %v2754, %v2758
        %v2763 = vand.u32 2147483647, %v2732
        %vm2764 = vcmp.eq.f32.partialorder %v2763, 8.507059e+37
        %v2765 = vand.u32 %v2732, 2147483648
        %v2766 = vor.u32 1.1754944e-38, %v2765
        %v2767 = vsel %vm2764, %v2766, %v2762
        %v2768 = vmul.f32 1.0, %v2767
        %v2769 = vrcp.pop %v2733
        %v2770 = vmul.f32 %v2733, %v2769
        %v2771 = vsub.f32 1.0, %v2770
        %v2772 = vmul.f32 %v2769, %v2771
        %v2773 = vadd.f32 %v2769, %v2772
        %vm2774 = vweird.f32 %v2733
        %vm2775 = vweird.f32 %v2769
        %vm2776 = vmor %vm2774, %vm2775
        %v2777 = vsel %vm2776, %v2769, %v2773
        %v2778 = vand.u32 2147483647, %v2733
        %vm2779 = vcmp.eq.f32.partialorder %v2778, 8.507059e+37
        %v2780 = vand.u32 %v2733, 2147483648
        %v2781 = vor.u32 1.1754944e-38, %v2780
        %v2782 = vsel %vm2779, %v2781, %v2777
        %v2783 = vmul.f32 1.0, %v2782
        %v2784 = vrcp.pop %v2734
        %v2785 = vmul.f32 %v2734, %v2784
        %v2786 = vsub.f32 1.0, %v2785
        %v2787 = vmul.f32 %v2784, %v2786
        %v2788 = vadd.f32 %v2784, %v2787
        %vm2789 = vweird.f32 %v2734
        %vm2790 = vweird.f32 %v2784
        %vm2791 = vmor %vm2789, %vm2790
        %v2792 = vsel %vm2791, %v2784, %v2788
        %v2793 = vand.u32 2147483647, %v2734
        %vm2794 = vcmp.eq.f32.partialorder %v2793, 8.507059e+37
        %v2795 = vand.u32 %v2734, 2147483648
        %v2796 = vor.u32 1.1754944e-38, %v2795
        %v2797 = vsel %vm2794, %v2796, %v2792
        %v2798 = vmul.f32 1.0, %v2797
        %v2799 = vrcp.pop %v2735
        %v2800 = vmul.f32 %v2735, %v2799
        %v2801 = vsub.f32 1.0, %v2800
        %v2802 = vmul.f32 %v2799, %v2801
        %v2803 = vadd.f32 %v2799, %v2802
        %vm2804 = vweird.f32 %v2735
        %vm2805 = vweird.f32 %v2799
        %vm2806 = vmor %vm2804, %vm2805
        %v2807 = vsel %vm2806, %v2799, %v2803
        %v2808 = vand.u32 2147483647, %v2735
        %vm2809 = vcmp.eq.f32.partialorder %v2808, 8.507059e+37
        %v2810 = vand.u32 %v2735, 2147483648
        %v2811 = vor.u32 1.1754944e-38, %v2810
        %v2812 = vsel %vm2809, %v2811, %v2807
        %v2813 = vmul.f32 1.0, %v2812
        %v2814 = vrcp.pop %v2736
        %v2815 = vmul.f32 %v2736, %v2814
        %v2816 = vsub.f32 1.0, %v2815
        %v2817 = vmul.f32 %v2814, %v2816
        %v2818 = vadd.f32 %v2814, %v2817
        %vm2819 = vweird.f32 %v2736
        %vm2820 = vweird.f32 %v2814
        %vm2821 = vmor %vm2819, %vm2820
        %v2822 = vsel %vm2821, %v2814, %v2818
        %v2823 = vand.u32 2147483647, %v2736
        %vm2824 = vcmp.eq.f32.partialorder %v2823, 8.507059e+37
        %v2825 = vand.u32 %v2736, 2147483648
        %v2826 = vor.u32 1.1754944e-38, %v2825
        %v2827 = vsel %vm2824, %v2826, %v2822
        %v2828 = vmul.f32 1.0, %v2827
        %v2829 = vrcp.pop %v2737
        %v2830 = vmul.f32 %v2737, %v2829
        %v2831 = vsub.f32 1.0, %v2830
        %v2832 = vmul.f32 %v2829, %v2831
        %v2833 = vadd.f32 %v2829, %v2832
        %vm2834 = vweird.f32 %v2737
        %vm2835 = vweird.f32 %v2829
        %vm2836 = vmor %vm2834, %vm2835
        %v2837 = vsel %vm2836, %v2829, %v2833
        %v2838 = vand.u32 2147483647, %v2737
        %vm2839 = vcmp.eq.f32.partialorder %v2838, 8.507059e+37
        %v2840 = vand.u32 %v2737, 2147483648
        %v2841 = vor.u32 1.1754944e-38, %v2840
        %v2842 = vsel %vm2839, %v2841, %v2837
        %v2843 = vmul.f32 1.0, %v2842
        %v2844 = vrcp.pop %v2738
        %v2845 = vmul.f32 %v2738, %v2844
        %v2846 = vsub.f32 1.0, %v2845
        %v2847 = vmul.f32 %v2844, %v2846
        %v2848 = vadd.f32 %v2844, %v2847
        %vm2849 = vweird.f32 %v2738
        %vm2850 = vweird.f32 %v2844
        %vm2851 = vmor %vm2849, %vm2850
        %v2852 = vsel %vm2851, %v2844, %v2848
        %v2853 = vand.u32 2147483647, %v2738
        %vm2854 = vcmp.eq.f32.partialorder %v2853, 8.507059e+37
        %v2855 = vand.u32 %v2738, 2147483648
        %v2856 = vor.u32 1.1754944e-38, %v2855
        %v2857 = vsel %vm2854, %v2856, %v2852
        %v2858 = vmul.f32 1.0, %v2857
        %s2859 = sld [smem:[#allocation2 + $0x1]]
        %v2860 = vstv %s2859
        %v2861 = vadd.f32 %v2674, %v2860
        %v2862 = vadd.f32 %v2677, %v2860
        %v2863 = vadd.f32 %v2680, %v2860
        %v2864 = vadd.f32 %v2683, %v2860
        %v2865 = vadd.f32 %v2686, %v2860
        %v2866 = vadd.f32 %v2689, %v2860
        %v2867 = vadd.f32 %v2692, %v2860
        %v2868 = vadd.f32 %v2695, %v2860
        %v2869 = vxor.u32 %v2861, 2147483648
        %v2870 = vxor.u32 %v2862, 2147483648
        %v2871 = vxor.u32 %v2863, 2147483648
        %v2872 = vxor.u32 %v2864, 2147483648
        %v2873 = vxor.u32 %v2865, 2147483648
        %v2874 = vxor.u32 %v2866, 2147483648
        %v2875 = vxor.u32 %v2867, 2147483648
        %v2876 = vxor.u32 %v2868, 2147483648
        %v2877 = vmul.f32 %v2869, 1.442695
        %v2878 = vpow.pop %v2877
        %v2879 = vmul.f32 %v2870, 1.442695
        %v2880 = vpow.pop %v2879
        %v2881 = vmul.f32 %v2871, 1.442695
        %v2882 = vpow.pop %v2881
        %v2883 = vmul.f32 %v2872, 1.442695
        %v2884 = vpow.pop %v2883
        %v2885 = vmul.f32 %v2873, 1.442695
        %v2886 = vpow.pop %v2885
        %v2887 = vmul.f32 %v2874, 1.442695
        %v2888 = vpow.pop %v2887
        %v2889 = vmul.f32 %v2875, 1.442695
        %v2890 = vpow.pop %v2889
        %v2891 = vmul.f32 %v2876, 1.442695
        %v2892 = vpow.pop %v2891
        %v2893 = vadd.f32 %v2878, 1.0
        %v2894 = vadd.f32 %v2880, 1.0
        %v2895 = vadd.f32 %v2882, 1.0
        %v2896 = vadd.f32 %v2884, 1.0
        %v2897 = vadd.f32 %v2886, 1.0
        %v2898 = vadd.f32 %v2888, 1.0
        %v2899 = vadd.f32 %v2890, 1.0
        %v2900 = vadd.f32 %v2892, 1.0
        %v2901 = vrcp.pop %v2893
        %v2902 = vmul.f32 %v2893, %v2901
        %v2903 = vsub.f32 1.0, %v2902
        %v2904 = vmul.f32 %v2901, %v2903
        %v2905 = vadd.f32 %v2901, %v2904
        %vm2906 = vweird.f32 %v2893
        %vm2907 = vweird.f32 %v2901
        %vm2908 = vmor %vm2906, %vm2907
        %v2909 = vsel %vm2908, %v2901, %v2905
        %v2910 = vand.u32 2147483647, %v2893
        %vm2911 = vcmp.eq.f32.partialorder %v2910, 8.507059e+37
        %v2912 = vand.u32 %v2893, 2147483648
        %v2913 = vor.u32 1.1754944e-38, %v2912
        %v2914 = vsel %vm2911, %v2913, %v2909
        %v2915 = vmul.f32 1.0, %v2914
        %v2916 = vrcp.pop %v2894
        %v2917 = vmul.f32 %v2894, %v2916
        %v2918 = vsub.f32 1.0, %v2917
        %v2919 = vmul.f32 %v2916, %v2918
        %v2920 = vadd.f32 %v2916, %v2919
        %vm2921 = vweird.f32 %v2894
        %vm2922 = vweird.f32 %v2916
        %vm2923 = vmor %vm2921, %vm2922
        %v2924 = vsel %vm2923, %v2916, %v2920
        %v2925 = vand.u32 2147483647, %v2894
        %vm2926 = vcmp.eq.f32.partialorder %v2925, 8.507059e+37
        %v2927 = vand.u32 %v2894, 2147483648
        %v2928 = vor.u32 1.1754944e-38, %v2927
        %v2929 = vsel %vm2926, %v2928, %v2924
        %v2930 = vmul.f32 1.0, %v2929
        %v2931 = vrcp.pop %v2895
        %v2932 = vmul.f32 %v2895, %v2931
        %v2933 = vsub.f32 1.0, %v2932
        %v2934 = vmul.f32 %v2931, %v2933
        %v2935 = vadd.f32 %v2931, %v2934
        %vm2936 = vweird.f32 %v2895
        %vm2937 = vweird.f32 %v2931
        %vm2938 = vmor %vm2936, %vm2937
        %v2939 = vsel %vm2938, %v2931, %v2935
        %v2940 = vand.u32 2147483647, %v2895
        %vm2941 = vcmp.eq.f32.partialorder %v2940, 8.507059e+37
        %v2942 = vand.u32 %v2895, 2147483648
        %v2943 = vor.u32 1.1754944e-38, %v2942
        %v2944 = vsel %vm2941, %v2943, %v2939
        %v2945 = vmul.f32 1.0, %v2944
        %v2946 = vrcp.pop %v2896
        %v2947 = vmul.f32 %v2896, %v2946
        %v2948 = vsub.f32 1.0, %v2947
        %v2949 = vmul.f32 %v2946, %v2948
        %v2950 = vadd.f32 %v2946, %v2949
        %vm2951 = vweird.f32 %v2896
        %vm2952 = vweird.f32 %v2946
        %vm2953 = vmor %vm2951, %vm2952
        %v2954 = vsel %vm2953, %v2946, %v2950
        %v2955 = vand.u32 2147483647, %v2896
        %vm2956 = vcmp.eq.f32.partialorder %v2955, 8.507059e+37
        %v2957 = vand.u32 %v2896, 2147483648
        %v2958 = vor.u32 1.1754944e-38, %v2957
        %v2959 = vsel %vm2956, %v2958, %v2954
        %v2960 = vmul.f32 1.0, %v2959
        %v2961 = vrcp.pop %v2897
        %v2962 = vmul.f32 %v2897, %v2961
        %v2963 = vsub.f32 1.0, %v2962
        %v2964 = vmul.f32 %v2961, %v2963
        %v2965 = vadd.f32 %v2961, %v2964
        %vm2966 = vweird.f32 %v2897
        %vm2967 = vweird.f32 %v2961
        %vm2968 = vmor %vm2966, %vm2967
        %v2969 = vsel %vm2968, %v2961, %v2965
        %v2970 = vand.u32 2147483647, %v2897
        %vm2971 = vcmp.eq.f32.partialorder %v2970, 8.507059e+37
        %v2972 = vand.u32 %v2897, 2147483648
        %v2973 = vor.u32 1.1754944e-38, %v2972
        %v2974 = vsel %vm2971, %v2973, %v2969
        %v2975 = vmul.f32 1.0, %v2974
        %v2976 = vrcp.pop %v2898
        %v2977 = vmul.f32 %v2898, %v2976
        %v2978 = vsub.f32 1.0, %v2977
        %v2979 = vmul.f32 %v2976, %v2978
        %v2980 = vadd.f32 %v2976, %v2979
        %vm2981 = vweird.f32 %v2898
        %vm2982 = vweird.f32 %v2976
        %vm2983 = vmor %vm2981, %vm2982
        %v2984 = vsel %vm2983, %v2976, %v2980
        %v2985 = vand.u32 2147483647, %v2898
        %vm2986 = vcmp.eq.f32.partialorder %v2985, 8.507059e+37
        %v2987 = vand.u32 %v2898, 2147483648
        %v2988 = vor.u32 1.1754944e-38, %v2987
        %v2989 = vsel %vm2986, %v2988, %v2984
        %v2990 = vmul.f32 1.0, %v2989
        %v2991 = vrcp.pop %v2899
        %v2992 = vmul.f32 %v2899, %v2991
        %v2993 = vsub.f32 1.0, %v2992
        %v2994 = vmul.f32 %v2991, %v2993
        %v2995 = vadd.f32 %v2991, %v2994
        %vm2996 = vweird.f32 %v2899
        %vm2997 = vweird.f32 %v2991
        %vm2998 = vmor %vm2996, %vm2997
        %v2999 = vsel %vm2998, %v2991, %v2995
        %v3000 = vand.u32 2147483647, %v2899
        %vm3001 = vcmp.eq.f32.partialorder %v3000, 8.507059e+37
        %v3002 = vand.u32 %v2899, 2147483648
        %v3003 = vor.u32 1.1754944e-38, %v3002
        %v3004 = vsel %vm3001, %v3003, %v2999
        %v3005 = vmul.f32 1.0, %v3004
        %v3006 = vrcp.pop %v2900
        %v3007 = vmul.f32 %v2900, %v3006
        %v3008 = vsub.f32 1.0, %v3007
        %v3009 = vmul.f32 %v3006, %v3008
        %v3010 = vadd.f32 %v3006, %v3009
        %vm3011 = vweird.f32 %v2900
        %vm3012 = vweird.f32 %v3006
        %vm3013 = vmor %vm3011, %vm3012
        %v3014 = vsel %vm3013, %v3006, %v3010
        %v3015 = vand.u32 2147483647, %v2900
        %vm3016 = vcmp.eq.f32.partialorder %v3015, 8.507059e+37
        %v3017 = vand.u32 %v2900, 2147483648
        %v3018 = vor.u32 1.1754944e-38, %v3017
        %v3019 = vsel %vm3016, %v3018, %v3014
        %v3020 = vmul.f32 1.0, %v3019
        %3029 = vrot.lane.b32.xlu0 %v2915, 127
        %v3030 = vpop.permute.xlu0 %3029
        %3031 = vrot.lane.b32.xlu0 %v2930, 127
        %v3032 = vpop.permute.xlu0 %3031
        %3033 = vrot.lane.b32.xlu0 %v2945, 127
        %v3034 = vpop.permute.xlu0 %3033
        %3035 = vrot.lane.b32.xlu0 %v2960, 127
        %v3036 = vpop.permute.xlu0 %3035
        %3037 = vrot.lane.b32.xlu0 %v2975, 127
        %v3038 = vpop.permute.xlu0 %3037
        %3039 = vrot.lane.b32.xlu0 %v2990, 127
        %v3040 = vpop.permute.xlu0 %3039
        %3041 = vrot.lane.b32.xlu0 %v3005, 127
        %v3042 = vpop.permute.xlu0 %3041
        %3043 = vrot.lane.b32.xlu0 %v3020, 127
        %v3044 = vpop.permute.xlu0 %3043
        %v3053 = vadd.f32 %v2753, %v3030
        %v3054 = vadd.f32 %v2768, %v3032
        %v3055 = vadd.f32 %v2783, %v3034
        %v3056 = vadd.f32 %v2798, %v3036
        %v3057 = vadd.f32 %v2813, %v3038
        %v3058 = vadd.f32 %v2828, %v3040
        %v3059 = vadd.f32 %v2843, %v3042
        %v3060 = vadd.f32 %v2858, %v3044
        %v3061 = vrcp.pop %v3053
        %v3062 = vmul.f32 %v3053, %v3061
        %v3063 = vsub.f32 1.0, %v3062
        %v3064 = vmul.f32 %v3061, %v3063
        %v3065 = vadd.f32 %v3061, %v3064
        %vm3066 = vweird.f32 %v3053
        %vm3067 = vweird.f32 %v3061
        %vm3068 = vmor %vm3066, %vm3067
        %v3069 = vsel %vm3068, %v3061, %v3065
        %v3070 = vand.u32 2147483647, %v3053
        %vm3071 = vcmp.eq.f32.partialorder %v3070, 8.507059e+37
        %v3072 = vand.u32 %v3053, 2147483648
        %v3073 = vor.u32 1.1754944e-38, %v3072
        %v3074 = vsel %vm3071, %v3073, %v3069
        %v3075 = vmul.f32 %v2753, %v3074
        %v3076 = vrcp.pop %v3054
        %v3077 = vmul.f32 %v3054, %v3076
        %v3078 = vsub.f32 1.0, %v3077
        %v3079 = vmul.f32 %v3076, %v3078
        %v3080 = vadd.f32 %v3076, %v3079
        %vm3081 = vweird.f32 %v3054
        %vm3082 = vweird.f32 %v3076
        %vm3083 = vmor %vm3081, %vm3082
        %v3084 = vsel %vm3083, %v3076, %v3080
        %v3085 = vand.u32 2147483647, %v3054
        %vm3086 = vcmp.eq.f32.partialorder %v3085, 8.507059e+37
        %v3087 = vand.u32 %v3054, 2147483648
        %v3088 = vor.u32 1.1754944e-38, %v3087
        %v3089 = vsel %vm3086, %v3088, %v3084
        %v3090 = vmul.f32 %v2768, %v3089
        %v3091 = vrcp.pop %v3055
        %v3092 = vmul.f32 %v3055, %v3091
        %v3093 = vsub.f32 1.0, %v3092
        %v3094 = vmul.f32 %v3091, %v3093
        %v3095 = vadd.f32 %v3091, %v3094
        %vm3096 = vweird.f32 %v3055
        %vm3097 = vweird.f32 %v3091
        %vm3098 = vmor %vm3096, %vm3097
        %v3099 = vsel %vm3098, %v3091, %v3095
        %v3100 = vand.u32 2147483647, %v3055
        %vm3101 = vcmp.eq.f32.partialorder %v3100, 8.507059e+37
        %v3102 = vand.u32 %v3055, 2147483648
        %v3103 = vor.u32 1.1754944e-38, %v3102
        %v3104 = vsel %vm3101, %v3103, %v3099
        %v3105 = vmul.f32 %v2783, %v3104
        %v3106 = vrcp.pop %v3056
        %v3107 = vmul.f32 %v3056, %v3106
        %v3108 = vsub.f32 1.0, %v3107
        %v3109 = vmul.f32 %v3106, %v3108
        %v3110 = vadd.f32 %v3106, %v3109
        %vm3111 = vweird.f32 %v3056
        %vm3112 = vweird.f32 %v3106
        %vm3113 = vmor %vm3111, %vm3112
        %v3114 = vsel %vm3113, %v3106, %v3110
        %v3115 = vand.u32 2147483647, %v3056
        %vm3116 = vcmp.eq.f32.partialorder %v3115, 8.507059e+37
        %v3117 = vand.u32 %v3056, 2147483648
        %v3118 = vor.u32 1.1754944e-38, %v3117
        %v3119 = vsel %vm3116, %v3118, %v3114
        %v3120 = vmul.f32 %v2798, %v3119
        %v3121 = vrcp.pop %v3057
        %v3122 = vmul.f32 %v3057, %v3121
        %v3123 = vsub.f32 1.0, %v3122
        %v3124 = vmul.f32 %v3121, %v3123
        %v3125 = vadd.f32 %v3121, %v3124
        %vm3126 = vweird.f32 %v3057
        %vm3127 = vweird.f32 %v3121
        %vm3128 = vmor %vm3126, %vm3127
        %v3129 = vsel %vm3128, %v3121, %v3125
        %v3130 = vand.u32 2147483647, %v3057
        %vm3131 = vcmp.eq.f32.partialorder %v3130, 8.507059e+37
        %v3132 = vand.u32 %v3057, 2147483648
        %v3133 = vor.u32 1.1754944e-38, %v3132
        %v3134 = vsel %vm3131, %v3133, %v3129
        %v3135 = vmul.f32 %v2813, %v3134
        %v3136 = vrcp.pop %v3058
        %v3137 = vmul.f32 %v3058, %v3136
        %v3138 = vsub.f32 1.0, %v3137
        %v3139 = vmul.f32 %v3136, %v3138
        %v3140 = vadd.f32 %v3136, %v3139
        %vm3141 = vweird.f32 %v3058
        %vm3142 = vweird.f32 %v3136
        %vm3143 = vmor %vm3141, %vm3142
        %v3144 = vsel %vm3143, %v3136, %v3140
        %v3145 = vand.u32 2147483647, %v3058
        %vm3146 = vcmp.eq.f32.partialorder %v3145, 8.507059e+37
        %v3147 = vand.u32 %v3058, 2147483648
        %v3148 = vor.u32 1.1754944e-38, %v3147
        %v3149 = vsel %vm3146, %v3148, %v3144
        %v3150 = vmul.f32 %v2828, %v3149
        %v3151 = vrcp.pop %v3059
        %v3152 = vmul.f32 %v3059, %v3151
        %v3153 = vsub.f32 1.0, %v3152
        %v3154 = vmul.f32 %v3151, %v3153
        %v3155 = vadd.f32 %v3151, %v3154
        %vm3156 = vweird.f32 %v3059
        %vm3157 = vweird.f32 %v3151
        %vm3158 = vmor %vm3156, %vm3157
        %v3159 = vsel %vm3158, %v3151, %v3155
        %v3160 = vand.u32 2147483647, %v3059
        %vm3161 = vcmp.eq.f32.partialorder %v3160, 8.507059e+37
        %v3162 = vand.u32 %v3059, 2147483648
        %v3163 = vor.u32 1.1754944e-38, %v3162
        %v3164 = vsel %vm3161, %v3163, %v3159
        %v3165 = vmul.f32 %v2843, %v3164
        %v3166 = vrcp.pop %v3060
        %v3167 = vmul.f32 %v3060, %v3166
        %v3168 = vsub.f32 1.0, %v3167
        %v3169 = vmul.f32 %v3166, %v3168
        %v3170 = vadd.f32 %v3166, %v3169
        %vm3171 = vweird.f32 %v3060
        %vm3172 = vweird.f32 %v3166
        %vm3173 = vmor %vm3171, %vm3172
        %v3174 = vsel %vm3173, %v3166, %v3170
        %v3175 = vand.u32 2147483647, %v3060
        %vm3176 = vcmp.eq.f32.partialorder %v3175, 8.507059e+37
        %v3177 = vand.u32 %v3060, 2147483648
        %v3178 = vor.u32 1.1754944e-38, %v3177
        %v3179 = vsel %vm3176, %v3178, %v3174
        %v3180 = vmul.f32 %v2858, %v3179
        %v3181 = vsub.f32 1.0, %v3075
        %v3182 = vsub.f32 1.0, %v3090
        %v3183 = vsub.f32 1.0, %v3105
        %v3184 = vsub.f32 1.0, %v3120
        %v3185 = vsub.f32 1.0, %v3135
        %v3186 = vsub.f32 1.0, %v3150
        %v3187 = vsub.f32 1.0, %v3165
        %v3188 = vsub.f32 1.0, %v3180
        %3190 = vset.pattern.permute.xlu0 0
        %3191 = vperm.xlu0 %3190, %v3075
        %v3192 = vpop.permute.xlu0 %3191
        %3195 = vset.pattern.permute.xlu0 0
        %3196 = vperm.xlu0 %3195, %v3090
        %v3197 = vpop.permute.xlu0 %3196
        %3200 = vset.pattern.permute.xlu0 0
        %3201 = vperm.xlu0 %3200, %v3105
        %v3202 = vpop.permute.xlu0 %3201
        %3205 = vset.pattern.permute.xlu0 0
        %3206 = vperm.xlu0 %3205, %v3120
        %v3207 = vpop.permute.xlu0 %3206
        %3210 = vset.pattern.permute.xlu0 0
        %3211 = vperm.xlu0 %3210, %v3135
        %v3212 = vpop.permute.xlu0 %3211
        %3215 = vset.pattern.permute.xlu0 0
        %3216 = vperm.xlu0 %3215, %v3150
        %v3217 = vpop.permute.xlu0 %3216
        %3220 = vset.pattern.permute.xlu0 0
        %3221 = vperm.xlu0 %3220, %v3165
        %v3222 = vpop.permute.xlu0 %3221
        %3225 = vset.pattern.permute.xlu0 0
        %3226 = vperm.xlu0 %3225, %v3180
        %v3227 = vpop.permute.xlu0 %3226
        %v3229 = vmul.f32 %v3192, %v2561
        %v3230 = vmul.f32 %v3197, %v2563
        %v3231 = vmul.f32 %v3202, %v2565
        %v3232 = vmul.f32 %v3207, %v2567
        %v3233 = vmul.f32 %v3212, %v2569
        %v3234 = vmul.f32 %v3217, %v2571
        %v3235 = vmul.f32 %v3222, %v2573
        %v3236 = vmul.f32 %v3227, %v2575
        %3238 = vset.pattern.permute.xlu0 0
        %3239 = vperm.xlu0 %3238, %v3181
        %v3240 = vpop.permute.xlu0 %3239
        %3243 = vset.pattern.permute.xlu0 0
        %3244 = vperm.xlu0 %3243, %v3182
        %v3245 = vpop.permute.xlu0 %3244
        %3248 = vset.pattern.permute.xlu0 0
        %3249 = vperm.xlu0 %3248, %v3183
        %v3250 = vpop.permute.xlu0 %3249
        %3253 = vset.pattern.permute.xlu0 0
        %3254 = vperm.xlu0 %3253, %v3184
        %v3255 = vpop.permute.xlu0 %3254
        %3258 = vset.pattern.permute.xlu0 0
        %3259 = vperm.xlu0 %3258, %v3185
        %v3260 = vpop.permute.xlu0 %3259
        %3263 = vset.pattern.permute.xlu0 0
        %3264 = vperm.xlu0 %3263, %v3186
        %v3265 = vpop.permute.xlu0 %3264
        %3268 = vset.pattern.permute.xlu0 0
        %3269 = vperm.xlu0 %3268, %v3187
        %v3270 = vpop.permute.xlu0 %3269
        %3273 = vset.pattern.permute.xlu0 0
        %3274 = vperm.xlu0 %3273, %v3188
        %v3275 = vpop.permute.xlu0 %3274
        %v3277 = vmul.f32 %v3240, %v2560
        %v3278 = vmul.f32 %v3245, %v2562
        %v3279 = vmul.f32 %v3250, %v2564
        %v3280 = vmul.f32 %v3255, %v2566
        %v3281 = vmul.f32 %v3260, %v2568
        %v3282 = vmul.f32 %v3265, %v2570
        %v3283 = vmul.f32 %v3270, %v2572
        %v3284 = vmul.f32 %v3275, %v2574
        %v3285 = vadd.f32 %v3229, %v3277
        %v3286 = vadd.f32 %v3230, %v3278
        %v3287 = vadd.f32 %v3231, %v3279
        %v3288 = vadd.f32 %v3232, %v3280
        %v3289 = vadd.f32 %v3233, %v3281
        %v3290 = vadd.f32 %v3234, %v3282
        %v3291 = vadd.f32 %v3235, %v3283
        %v3292 = vadd.f32 %v3236, %v3284
        %v3293 = vsel %vm782, %v3285, 0.0
        %v3294 = vrot.slane %v3293, 4
        %v3295 = vadd.f32 %v3293, %v3294
        %v3296 = vrot.slane %v3295, 2
        %v3297 = vadd.f32 %v3295, %v3296
        %v3298 = vrot.slane %v3297, 1
        %v3299 = vadd.f32 %v3297, %v3298
        %v3300 = vsel %vm782, %v3286, 0.0
        %v3301 = vrot.slane %v3300, 4
        %v3302 = vadd.f32 %v3300, %v3301
        %v3303 = vrot.slane %v3302, 2
        %v3304 = vadd.f32 %v3302, %v3303
        %v3305 = vrot.slane %v3304, 1
        %v3306 = vadd.f32 %v3304, %v3305
        %v3307 = vsel %vm782, %v3287, 0.0
        %v3308 = vrot.slane %v3307, 4
        %v3309 = vadd.f32 %v3307, %v3308
        %v3310 = vrot.slane %v3309, 2
        %v3311 = vadd.f32 %v3309, %v3310
        %v3312 = vrot.slane %v3311, 1
        %v3313 = vadd.f32 %v3311, %v3312
        %v3314 = vsel %vm782, %v3288, 0.0
        %v3315 = vrot.slane %v3314, 4
        %v3316 = vadd.f32 %v3314, %v3315
        %v3317 = vrot.slane %v3316, 2
        %v3318 = vadd.f32 %v3316, %v3317
        %v3319 = vrot.slane %v3318, 1
        %v3320 = vadd.f32 %v3318, %v3319
        %v3321 = vsel %vm782, %v3289, 0.0
        %v3322 = vrot.slane %v3321, 4
        %v3323 = vadd.f32 %v3321, %v3322
        %v3324 = vrot.slane %v3323, 2
        %v3325 = vadd.f32 %v3323, %v3324
        %v3326 = vrot.slane %v3325, 1
        %v3327 = vadd.f32 %v3325, %v3326
        %v3328 = vsel %vm782, %v3290, 0.0
        %v3329 = vrot.slane %v3328, 4
        %v3330 = vadd.f32 %v3328, %v3329
        %v3331 = vrot.slane %v3330, 2
        %v3332 = vadd.f32 %v3330, %v3331
        %v3333 = vrot.slane %v3332, 1
        %v3334 = vadd.f32 %v3332, %v3333
        %v3335 = vsel %vm782, %v3291, 0.0
        %v3336 = vrot.slane %v3335, 4
        %v3337 = vadd.f32 %v3335, %v3336
        %v3338 = vrot.slane %v3337, 2
        %v3339 = vadd.f32 %v3337, %v3338
        %v3340 = vrot.slane %v3339, 1
        %v3341 = vadd.f32 %v3339, %v3340
        %v3342 = vsel %vm782, %v3292, 0.0
        %v3343 = vrot.slane %v3342, 4
        %v3344 = vadd.f32 %v3342, %v3343
        %v3345 = vrot.slane %v3344, 2
        %v3346 = vadd.f32 %v3344, %v3345
        %v3347 = vrot.slane %v3346, 1
        %v3348 = vadd.f32 %v3346, %v3347
        %v3349 = vld [vmem:[%s9] sm:$0xff]
        %v3350 = vld [vmem:[%s9 + $0x8] sm:$0xff]
        %v3351 = vld [vmem:[%s9 + $0x10] sm:$0xff]
        %v3352 = vld [vmem:[%s9 + $0x18] sm:$0xff]
        %v3353 = vld [vmem:[%s9 + $0x20] sm:$0xff]
        %v3354 = vld [vmem:[%s9 + $0x28] sm:$0xff]
        %v3355 = vld [vmem:[%s9 + $0x30] sm:$0xff]
        %v3356 = vld [vmem:[%s9 + $0x38] sm:$0xff]
        %v3357 = vld [vmem:[%s10] sm:$0x1]
        %v3359 = vperm.slane %v3357, 0
        %vm3369 = vcmask 1041409
        %v3370 = vsel %vm3369, %v3306, %v3299
        %vm3371 = vcmask 1042434
        %v3372 = vsel %vm3371, %v3313, %v3370
        %vm3373 = vcmask 1043459
        %v3374 = vsel %vm3373, %v3320, %v3372
        %vm3375 = vcmask 1044484
        %v3376 = vsel %vm3375, %v3327, %v3374
        %vm3377 = vcmask 1045509
        %v3378 = vsel %vm3377, %v3334, %v3376
        %vm3379 = vcmask 1046534
        %v3380 = vsel %vm3379, %v3341, %v3378
        %vm3381 = vcmask 1047559
        %v3382 = vsel %vm3381, %v3348, %v3380
        %v3383 = vsel %vm782, %v3382, 0
        %3385 = vmatpush.msra.mxu0 0.0
        %3386 = vmatpush.msra.mxu0 0.0
        %3387 = vmatpush.msra.mxu0 0.0
        %3388 = vmatpush.msra.mxu0 0.0
        %3389 = vmatpush.msra.mxu0 0.0
        %3390 = vmatpush.msra.mxu0 0.0
        %3391 = vmatpush.msra.mxu0 0.0
        %3392 = vmatpush.msra.mxu0 0.0
        %3393 = vmatpush.msra.mxu0 %v3356
        %3394 = vmatpush.msra.mxu0 %v3355
        %3395 = vmatpush.msra.mxu0 %v3354
        %3396 = vmatpush.msra.mxu0 %v3353
        %3397 = vmatpush.msra.mxu0 %v3352
        %3398 = vmatpush.msra.mxu0 %v3351
        %3399 = vmatpush.msra.mxu0 %v3350
        %3400 = vmatpush.msra.mxu0 %v3349
        %3401 = vmatmul.f32.gmra.mxu0 %v3383
        %v3402 = vpop.f32.mrf.mxu0
        %v3403 = vadd.f32 %v3359, %v3402
        %3404 = vdwg.mxu0
        %v3405 = vxor.u32 %v3403, 2147483648
        %v3406 = vmul.f32 %v3405, 1.442695
        %v3407 = vpow.pop %v3406
        %v3408 = vadd.f32 %v3407, 1.0
        %v3409 = vrcp.pop %v3408
        %v3410 = vmul.f32 %v3408, %v3409
        %v3411 = vsub.f32 1.0, %v3410
        %v3412 = vmul.f32 %v3409, %v3411
        %v3413 = vadd.f32 %v3409, %v3412
        %vm3414 = vweird.f32 %v3408
        %vm3415 = vweird.f32 %v3409
        %vm3416 = vmor %vm3414, %vm3415
        %v3417 = vsel %vm3416, %v3409, %v3413
        %v3418 = vand.u32 2147483647, %v3408
        %vm3419 = vcmp.eq.f32.partialorder %v3418, 8.507059e+37
        %v3420 = vand.u32 %v3408, 2147483648
        %v3421 = vor.u32 1.1754944e-38, %v3420
        %v3422 = vsel %vm3419, %v3421, %v3417
        %v3423 = vmul.f32 1.0, %v3422
        %3424 = vst [vmem:[%s464] sm:$0xff] %v3423
        %s3425 = sand.u32 %s281, 1
        %s3426 = scalar_lea.sflag [#allocation4], %s3425
        %s3427 = sand.u32 %s281, 1
        %s3428 = smul.addr %s3427, 8
        %s3429 = scalar_lea.vmem [#allocation9], %s3428
        // Predicated region
        $region77: #{tpu_custom_call.1} parent=63 // pred_check
          %p3430 = pneg %p291
        $region78: #{tpu_custom_call.1} parent=63 // pred_check_branch
          %3432 = sbr.rel (%p3430) target = $region80
        $region79: #{tpu_custom_call.1} parent=63 // pred_region
          %3434 = vsyncadd %s3426, 0
          %s3435 = smul.addr %s32, 8
          %s3436 = scalar_lea.hbm %s11, %s3435
          %s3438 = sshll.u32 %s3429, 4
          %s3439 = int_to_ptr.vmem [resolvable:$true] %s3438
          %s3440 = sshll.u32 %s3436, 4
          %s3441 = int_to_ptr.hbm [resolvable:$true] %s3440
          %3443 = dma.vmem_to_hbm [thread:$0]  %s3439, 128, %s3441, %s3426
        $region80: #{tpu_custom_call.1} parent=63 // pred_fallthru
          _
      $region64: #{tpu_custom_call.1} parent=5 // pred_fallthru
        _
      %p3444 = scmp.le.s32.totalorder 2, %s27
      // Predicated region
      $region81: #{tpu_custom_call.1} parent=5 // pred_check
        %p3445 = pneg %p3444
      $region82: #{tpu_custom_call.1} parent=5 // pred_check_branch
        %3447 = sbr.rel (%p3445) target = $region84
      $region83: #{tpu_custom_call.1} parent=5 // pred_region
        %s3448 = ssub.s32 %s27, 2
        // Predicated region
        $region85: #{tpu_custom_call.1} parent=83 // pred_check
          %p3449 = pneg %p297
        $region86: #{tpu_custom_call.1} parent=83 // pred_check_branch
          %3451 = sbr.rel (%p3449) target = $region88
        $region87: #{tpu_custom_call.1} parent=83 // pred_region
          %s3452 = sand.u32 %s282, 1
          %s3453 = scalar_lea.sflag [#allocation4], %s3452
          %s3454 = sand.u32 %s282, 1
          %s3455 = smul.addr %s3454, 8
          %s3456 = scalar_lea.vmem [#allocation9], %s3455
          %3458 = dma.done %s3453, 128
        $region88: #{tpu_custom_call.1} parent=83 // pred_fallthru
          _
      $region84: #{tpu_custom_call.1} parent=5 // pred_fallthru
        _
    $region6: #{tpu_custom_call.1} parent=1 // loop_footer
      %s31 = sadd.s32 1, %s27
    $region7: #{tpu_custom_call.1} parent=1 // loop_footer_branch
      %26 = sbr.rel target = $region3
    $region8: #{tpu_custom_call.1} parent=1 // loop_exit
      _
    %3459 = vsyncpa [#allocation3], 1
    %s3460 = scalar_lea.sflag [#allocation3], 1
    %3461 = vsyncpa %s3460, 1
    %3462 = vsyncpa [#allocation8], 1
    %s3463 = scalar_lea.sflag [#allocation8], 1
    %3464 = vsyncpa %s3463, 1
    %3465 = vsyncpa [#allocation4], 1
    %s3466 = scalar_lea.sflag [#allocation4], 1
    %3467 = vsyncpa %s3466, 1
    %3468 = vsyncpa [#allocation5], 1
    %s3469 = scalar_lea.sflag [#allocation5], 1
    %3470 = vsyncpa %s3469, 1

</llo_original>
